<compile_context>
chip_gen: v7x
topology: tpu7x:2x2x1
jax: 0.10.0
libtpu: 0.0.40
codegen_flags: <defaults>
</compile_context>

<pallas_src>
import functools
from typing import NamedTuple

import jax
import jax.numpy as jnp
from jax import lax
from jax.experimental import pallas as pl
from jax.experimental.pallas import tpu as pltpu

LANE = 128


def _round_up(x, m):
    return (x + m - 1) // m * m


# ----------------------------------------------------------------------------
# Generation-aware sizing (v5e/v6e: 128 MiB VMEM + 128-deep MXU on v5e,
# v6e/v7x: 256-deep MXU, v7x: 64 MiB VMEM).
# ----------------------------------------------------------------------------
@functools.lru_cache(maxsize=None)
def _tpu_vmem_bytes():
    try:
        v = int(pltpu.get_tpu_info().vmem_capacity_bytes)
        if v > 0:
            return v
    except Exception:
        pass
    try:
        kind = jax.devices()[0].device_kind.lower()
        if "7" in kind:
            return 64 << 20
    except Exception:
        pass
    return 128 << 20


@functools.lru_cache(maxsize=None)
def _mxu_depth():
    try:
        kind = jax.devices()[0].device_kind.lower()
    except Exception:
        return 256
    return 128 if any(t in kind for t in ("v2", "v3", "v4", "v5")) else 256


def _default_row_tile_bytes():
    # f32 budget for one (TR*Wo_pad, Cout_pad) output tile / accumulator.
    return (4 << 20) if _tpu_vmem_bytes() <= (64 << 20) else (8 << 20)


def _vmem_limit_bytes():
    return int(min(_tpu_vmem_bytes() - (8 << 20), 100 << 20))


def _compiler_params():
    return pltpu.CompilerParams(
        dimension_semantics=("parallel", "parallel"),
        vmem_limit_bytes=_vmem_limit_bytes())


class ConvGeom(NamedTuple):
    Ho: int       # real output height
    Wo: int       # real output width
    Wo_pad: int   # Wo rounded up to a multiple of 8 (layout-free window reshapes)
    TR: int       # output rows per grid step
    nRow: int     # number of row tiles
    P_pad: int    # padded flattened spatial size = nRow * TR * Wo_pad


def _choose_row_tile(Ho, Wo_pad, cpad, row_tile_bytes):
    """Rows/tile so the f32 (TR*Wo_pad, cpad) accumulator fits the per-gen budget."""
    max_rows = max(1, row_tile_bytes // (Wo_pad * cpad * 4))
    return min(Ho, max_rows)


# ----------------------------------------------------------------------------
# Plain-XLA helpers (tiny / layout-only work kept out of Pallas on purpose)
# ----------------------------------------------------------------------------
def _ws_weight_taps(w_oihw, cin_pad, cout_pad, compute_dtype, fuse_pairs):
    """PyTorch-style weight standardization, emitted in the per-tap
    (K*K, Cin_pad, Cout_pad) layout, or -- when fuse_pairs -- in the tap-pair-fused
    (ceil(K*K/2), 2*Cin_pad, Cout_pad) layout for 256-deep MXU matmuls."""
    cout, cin, kh, kw = w_oihw.shape
    wf = w_oihw.astype(jnp.float32).reshape(cout, -1)
    mean = jnp.mean(wf, axis=1, keepdims=True)
    wc = wf - mean
    m2 = jnp.mean(wc, axis=1, keepdims=True)                                   # torch.std re-centers
    var = jnp.sum((wc - m2) ** 2, axis=1, keepdims=True) / (wf.shape[1] - 1)   # unbiased
    w_ws = (wc / (jnp.sqrt(var) + 1e-5)).reshape(cout, cin, kh, kw)
    w_t = jnp.transpose(w_ws, (2, 3, 1, 0)).reshape(kh * kw, cin, cout)        # (tap, Cin, Cout)
    w_t = jnp.pad(w_t, ((0, 0), (0, cin_pad - cin), (0, cout_pad - cout)))
    if fuse_pairs:
        kk = kh * kw
        if kk % 2:
            w_t = jnp.concatenate(
                [w_t, jnp.zeros((1, cin_pad, cout_pad), w_t.dtype)], axis=0)
        w_t = w_t.reshape((kk + 1) // 2, 2 * cin_pad, cout_pad)
    return w_t.astype(compute_dtype)


def _phase_decompose(x_img, ksize, stride, padding, Ho_pad, Wo_pad):
    """(N,H,W,C) -> (N, Tph*Hph, Wph, C): stride-phase planes of the padded image so that
    every conv tap window is a unit-stride slice.  Total bytes ~= the padded image."""
    N, H, W, C = x_img.shape
    hph = Ho_pad + (ksize - 1) // stride
    wph = Wo_pad + (ksize - 1) // stride
    hp, wp = stride * hph, stride * wph
    xp = jnp.pad(x_img, ((0, 0),
                         (padding, max(0, hp - H - padding)),
                         (padding, max(0, wp - W - padding)),
                         (0, 0)))[:, :hp, :wp, :]
    if ksize == 1:                        # only phase (0, 0) is ever read
        return xp[:, ::stride, ::stride, :]
    if stride == 1:                       # single phase plane: a pad is all that is needed
        return xp
    xr = xp.reshape(N, hph, stride, wph, stride, C)
    xr = jnp.transpose(xr, (0, 2, 4, 1, 3, 5))        # (N, s, s, Hph, Wph, C)
    return xr.reshape(N, stride * stride * hph, wph, C)


def gn_affine_from_stats(stats, gamma, beta, count, cout_pad, eps=1e-5):
    """GroupNorm(1): per-sample scale/bias from streamed sum/sumsq (padded rows/cols/lanes
    were masked to exact zeros inside the kernel, so summing everything is safe)."""
    s = jnp.sum(stats[:, :, 0, :], axis=(1, 2))
    ss = jnp.sum(stats[:, :, 1, :], axis=(1, 2))
    mean = s / count
    var = jnp.maximum(ss / count - mean * mean, 0.0)
    rstd = lax.rsqrt(var + eps)
    c = gamma.shape[0]
    g = jnp.pad(gamma.astype(jnp.float32), (0, cout_pad - c))
    b = jnp.pad(beta.astype(jnp.float32), (0, cout_pad - c))
    scale = g[None, :] * rstd[:, None]                 # (N, Cpad)
    bias = b[None, :] - mean[:, None] * scale
    return scale[:, None, :], bias[:, None, :]         # (N, 1, Cpad) each


# ----------------------------------------------------------------------------
# Pass 1: WS-conv as shifted matmuls (value-chained f32 accumulation, single bf16 store)
#         + masked GN partial statistics
# ----------------------------------------------------------------------------
def _conv_stats_kernel(xph_ref, w_ref, y_ref, st_ref, *, ksize, stride, hph, tr,
                       wo_pad, ho, wo, fuse_pairs, need_mask):
    r = pl.program_id(1)
    row0 = r * tr
    cin_pad = xph_ref.shape[-1]
    nsp = tr * wo_pad
    kk = ksize * ksize

    def window(t):
        dy, dx = divmod(t, ksize)
        ph = (dy % stride) * stride + (dx % stride)        # stride-phase plane
        base = ph * hph + dy // stride                     # static row offset inside it
        win = xph_ref[0, pl.ds(row0 + base, tr), pl.ds(dx // stride, wo_pad), :]
        return win.reshape(nsp, cin_pad)                   # layout-free: wo_pad % 8 == 0

    # Value-chained f32 accumulation across taps (no per-tap output-ref RMW).
    acc = None
    if fuse_pairs:
        for p in range(w_ref.shape[0]):                    # K=256-deep fused tap pairs
            t0, t1 = 2 * p, 2 * p + 1
            if t1 >= kk:
                t1 = t0                                     # weight half is zero-padded
            lhs = jnp.concatenate([window(t0), window(t1)], axis=-1)
            c = jnp.dot(lhs, w_ref[p], preferred_element_type=jnp.float32)
            acc = c if acc is None else acc + c
    else:
        for t in range(kk):                                 # K=128-deep single taps (v5e)
            c = jnp.dot(window(t), w_ref[t], preferred_element_type=jnp.float32)
            acc = c if acc is None else acc + c

    # GroupNorm(1) partial stats from the f32 accumulator (before the downcast).  Padded
    # output rows/cols see real pixels in their receptive field, so they are masked out
    # of the statistics (they are sliced away from the final output anyway).
    cout_pad = acc.shape[-1]
    if need_mask:
        rows = lax.broadcasted_iota(jnp.int32, (tr, wo_pad, 1), 0) + row0
        cols = lax.broadcasted_iota(jnp.int32, (tr, wo_pad, 1), 1)
        valid = (rows < ho) & (cols < wo)
        ys = jnp.where(valid, acc.reshape(tr, wo_pad, cout_pad), 0.0)
        ys = ys.reshape(nsp, cout_pad)
    else:
        ys = acc
    st_ref[0, 0, 0:1, :] = jnp.sum(ys, axis=0, keepdims=True)
    st_ref[0, 0, 1:2, :] = jnp.sum(ys * ys, axis=0, keepdims=True)

    y_ref[0] = acc.astype(y_ref.dtype)                      # single (bf16) tile store


def conv_ws_gn_pass1(x_img, w_oihw, *, ksize, stride, padding, cout_pad,
                     row_tile=None, row_tile_bytes=None, compute_dtype=jnp.bfloat16):
    """Returns un-normalized conv output y (N, P_pad, cout_pad) in compute_dtype and
    per-(sample, row-tile) [sum, sumsq] f32 stats for the two-pass GroupNorm."""
    N, H, W, cin_pad = x_img.shape
    Ho = (H + 2 * padding - ksize) // stride + 1
    Wo = (W + 2 * padding - ksize) // stride + 1
    Wo_pad = _round_up(Wo, 8)
    if row_tile_bytes is None:
        row_tile_bytes = _default_row_tile_bytes()
    tr = row_tile if row_tile is not None else _choose_row_tile(Ho, Wo_pad, cout_pad,
                                                                row_tile_bytes)
    n_row = -(-Ho // tr)
    Ho_pad = n_row * tr
    P_pad = Ho_pad * Wo_pad
    hph = Ho_pad + (ksize - 1) // stride
    wph = Wo_pad + (ksize - 1) // stride
    tph = 1 if ksize == 1 else stride * stride
    fuse = (ksize > 1) and (cin_pad == LANE) and (_mxu_depth() >= 256)

    w_taps = _ws_weight_taps(w_oihw, cin_pad, cout_pad, compute_dtype, fuse)
    xph = _phase_decompose(x_img, ksize, stride, padding, Ho_pad, Wo_pad).astype(compute_dtype)

    kernel = functools.partial(
        _conv_stats_kernel, ksize=ksize, stride=stride, hph=hph, tr=tr,
        wo_pad=Wo_pad, ho=Ho, wo=Wo, fuse_pairs=fuse,
        need_mask=(Ho_pad > Ho) or (Wo_pad > Wo))
    y, stats = pl.pallas_call(
        kernel,
        out_shape=(jax.ShapeDtypeStruct((N, P_pad, cout_pad), compute_dtype),
                   jax.ShapeDtypeStruct((N, n_row, 2, cout_pad), jnp.float32)),
        grid=(N, n_row),
        in_specs=[
            # Full per-sample phase block; r-invariant index map so the DMA only re-issues
            # when the sample changes.
            # TODO(synk): on v7x, pin this + the weights to a single buffer
            # (pipeline_mode=pl.Buffered(1)) or halo-tile the input once shapes get large.
            pl.BlockSpec((1, tph * hph, wph, cin_pad), lambda n, r: (n, 0, 0, 0)),
            pl.BlockSpec(w_taps.shape, lambda n, r: (0, 0, 0)),
        ],
        out_specs=(
            pl.BlockSpec((1, tr * Wo_pad, cout_pad), lambda n, r: (n, r, 0)),
            pl.BlockSpec((1, 1, 2, cout_pad), lambda n, r: (n, r, 0, 0)),
        ),
        compiler_params=_compiler_params(),
    )(xph, w_taps)
    return y, stats, ConvGeom(Ho, Wo, Wo_pad, tr, n_row, P_pad)


# ----------------------------------------------------------------------------
# Pass 2: GN normalize + affine (+ fused residual branch) (+ ReLU)
# ----------------------------------------------------------------------------
def _finalize_kernel(y_ref, g_ref, b_ref, o_ref, *, relu):
    out = y_ref[0].astype(jnp.float32) * g_ref[0] + b_ref[0]
    if relu:
        out = jnp.maximum(out, 0.0)
    o_ref[0] = out.astype(o_ref.dtype)


def _finalize_res_kernel(y_ref, sc_ref, g_ref, b_ref, gs_ref, bs_ref, o_ref, *, relu):
    out = y_ref[0].astype(jnp.float32) * g_ref[0] + b_ref[0]
    out = out + (sc_ref[0].astype(jnp.float32) * gs_ref[0] + bs_ref[0])
    if relu:
        out = jnp.maximum(out, 0.0)
    o_ref[0] = out.astype(o_ref.dtype)


def gn_finalize(y, scale, bias, geom, *, relu, out_dtype,
                sc=None, sc_scale=None, sc_bias=None):
    N, P_pad, cpad = y.shape
    blk = geom.TR * geom.Wo_pad
    tile = pl.BlockSpec((1, blk, cpad), lambda n, r: (n, r, 0))
    vec = pl.BlockSpec((1, 1, cpad), lambda n, r: (n, 0, 0))
    if sc is None:
        kernel = functools.partial(_finalize_kernel, relu=relu)
        in_specs = [tile, vec, vec]
        args = (y, scale, bias)
    else:
        kernel = functools.partial(_finalize_res_kernel, relu=relu)
        in_specs = [tile, tile, vec, vec, vec, vec]
        args = (y, sc, scale, bias, sc_scale, sc_bias)
    return pl.pallas_call(
        kernel,
        out_shape=jax.ShapeDtypeStruct((N, P_pad, cpad), out_dtype),
        grid=(N, geom.nRow),
        in_specs=in_specs,
        out_specs=pl.BlockSpec((1, blk, cpad), lambda n, r: (n, r, 0)),
        compiler_params=_compiler_params(),
    )(*args)


# ----------------------------------------------------------------------------
# BasicBlockWS forward
# ----------------------------------------------------------------------------
def basic_block_ws_forward(x_nchw, params, stride, train=True,
                           row_tile_bytes=None, compute_dtype=jnp.bfloat16):
    eps = 1e-5
    x = jnp.transpose(x_nchw, (0, 2, 3, 1)).astype(jnp.float32)   # NCHW -> NHWC
    N, H, W, cin = x.shape
    planes = params["conv2_w"].shape[0]
    cin_pad = _round_up(cin, LANE)
    cpad = _round_up(planes, LANE)
    x_cp = jnp.pad(x, ((0, 0), (0, 0), (0, 0), (0, cin_pad - cin)))

    # conv1 (3x3, stride, pad 1) -> GN1 -> ReLU
    y1, st1, g1 = conv_ws_gn_pass1(x_cp, params["conv1_w"], ksize=3, stride=stride,
                                   padding=1, cout_pad=cpad,
                                   row_tile_bytes=row_tile_bytes,
                                   compute_dtype=compute_dtype)
    s1, b1 = gn_affine_from_stats(st1, params["gn1_g"], params["gn1_b"],
                                  g1.Ho * g1.Wo * planes, cpad, eps)
    out1 = gn_finalize(y1, s1, b1, g1, relu=True, out_dtype=compute_dtype)
    out1_img = out1.reshape(N, g1.nRow * g1.TR, g1.Wo_pad, cpad)[:, :g1.Ho, :g1.Wo, :]
    # TODO(synk): GN1+ReLU could be fused into conv2's pass-1 loads (per-sample scale/bias
    # on the lhs windows) to drop this intermediate round trip entirely.

    # conv2 (3x3, stride 1, pad 1); its GN is fused into the residual pass below
    y2, st2, g2 = conv_ws_gn_pass1(out1_img, params["conv2_w"], ksize=3, stride=1,
                                   padding=1, cout_pad=cpad,
                                   row_tile_bytes=row_tile_bytes,
                                   compute_dtype=compute_dtype)
    s2, b2 = gn_affine_from_stats(st2, params["gn2_g"], params["gn2_b"],
                                  g2.Ho * g2.Wo * planes, cpad, eps)

    # shortcut branch, laid out exactly like y2 so it fuses into the same pass-2 tiles
    if stride != 1 or cin != planes:
        ysc, stsc, gsc = conv_ws_gn_pass1(x_cp, params["sc_w"], ksize=1, stride=stride,
                                          padding=0, cout_pad=cpad, row_tile=g2.TR,
                                          row_tile_bytes=row_tile_bytes,
                                          compute_dtype=compute_dtype)
        assert gsc.P_pad == g2.P_pad and gsc.TR == g2.TR and gsc.Wo_pad == g2.Wo_pad
        scs, bcs = gn_affine_from_stats(stsc, params["sc_g"], params["sc_b"],
                                        gsc.Ho * gsc.Wo * planes, cpad, eps)
        sc = ysc
    else:
        sc = jnp.pad(x_cp, ((0, 0), (0, g2.nRow * g2.TR - H),
                            (0, g2.Wo_pad - W), (0, 0)))
        sc = sc.reshape(N, g2.P_pad, cin_pad)
        scs = jnp.ones((N, 1, cpad), jnp.float32)
        bcs = jnp.zeros((N, 1, cpad), jnp.float32)

    # pass 2: GN2 + GN_shortcut + residual add (+ final ReLU only in train, per the spec)
    out2 = gn_finalize(y2, s2, b2, g2, relu=bool(train), out_dtype=jnp.float32,
                       sc=sc, sc_scale=scs, sc_bias=bcs)
    out_img = out2.reshape(N, g2.nRow * g2.TR, g2.Wo_pad, cpad)[:, :g2.Ho, :g2.Wo, :planes]
    out_nchw = jnp.transpose(out_img, (0, 3, 1, 2))
    if train:
        return out_nchw
    return (None, out_nchw)


# ----------------------------------------------------------------------------
# Pure-XLA reference emulating the same numerics (compute_dtype conv inputs AND
# compute_dtype storage of the pre-GN conv output; f32 accumulation / statistics).
# With compute_dtype=f32 this is the straight PyTorch-equivalent forward.
# ----------------------------------------------------------------------------
def _ref_forward(x_nchw, params, stride, train=True, compute_dtype=jnp.bfloat16):
    x = jnp.transpose(x_nchw, (0, 2, 3, 1)).astype(jnp.float32)

    def ws(w):
        cout = w.shape[0]
        wf = w.astype(jnp.float32).reshape(cout, -1)
        mean = wf.mean(axis=1, keepdims=True)
        wc = wf - mean
        m2 = wc.mean(axis=1, keepdims=True)
        var = jnp.sum((wc - m2) ** 2, axis=1, keepdims=True) / (wf.shape[1] - 1)
        return (wc / (jnp.sqrt(var) + 1e-5)).reshape(w.shape)

    def conv(xh, w, s, p):
        w_hwio = jnp.transpose(ws(w), (2, 3, 1, 0)).astype(compute_dtype)
        return lax.conv_general_dilated(
            xh.astype(compute_dtype), w_hwio, (s, s), [(p, p), (p, p)],
            dimension_numbers=("NHWC", "HWIO", "NHWC"),
            preferred_element_type=jnp.float32)

    def gn(y, g, b, eps=1e-5):
        n = y.shape[0]
        yf = y.reshape(n, -1)
        mean = yf.mean(axis=1)
        var = ((yf - mean[:, None]) ** 2).mean(axis=1)
        # the Pallas pipeline stores the conv output in compute_dtype and applies the GN
        # affine to that (stats come from the f32 accumulator before the cast)
        yq = y.astype(compute_dtype).astype(jnp.float32)
        yn = (yq - mean[:, None, None, None]) * lax.rsqrt(var + eps)[:, None, None, None]
        return yn * g.reshape(1, 1, 1, -1) + b.reshape(1, 1, 1, -1)

    o = jax.nn.relu(gn(conv(x, params["conv1_w"], stride, 1),
                       params["gn1_g"], params["gn1_b"]))
    o = gn(conv(o, params["conv2_w"], 1, 1), params["gn2_g"], params["gn2_b"])
    if stride != 1 or x.shape[-1] != params["conv2_w"].shape[0]:
        shortcut = gn(conv(x, params["sc_w"], stride, 0), params["sc_g"], params["sc_b"])
    else:
        shortcut = x
    o = o + shortcut
    if train:
        o = jax.nn.relu(o)
    return jnp.transpose(o, (0, 3, 1, 2))


def _make_params(key, in_planes, planes, with_shortcut):
    ks = jax.random.split(key, 9)
    params = {
        "conv1_w": 0.2 * jax.random.normal(ks[0], (planes, in_planes, 3, 3), jnp.float32),
        "gn1_g": 1.0 + 0.1 * jax.random.normal(ks[1], (planes,), jnp.float32),
        "gn1_b": 0.1 * jax.random.normal(ks[2], (planes,), jnp.float32),
        "conv2_w": 0.2 * jax.random.normal(ks[3], (planes, planes, 3, 3), jnp.float32),
        "gn2_g": 1.0 + 0.1 * jax.random.normal(ks[4], (planes,), jnp.float32),
        "gn2_b": 0.1 * jax.random.normal(ks[5], (planes,), jnp.float32),
    }
    if with_shortcut:
        params["sc_w"] = 0.2 * jax.random.normal(ks[6], (planes, in_planes, 1, 1),
                                                 jnp.float32)
        params["sc_g"] = 1.0 + 0.1 * jax.random.normal(ks[7], (planes,), jnp.float32)
        params["sc_b"] = 0.1 * jax.random.normal(ks[8], (planes,), jnp.float32)
    return params


if __name__ == "__main__":
    key = jax.random.PRNGKey(0)
    kp1, kx1, kp2, kx2 = jax.random.split(key, 4)

    fwd = jax.jit(basic_block_ws_forward,
                  static_argnames=("stride", "train", "row_tile_bytes", "compute_dtype"))

    # bf16-stored intermediates: the reference rounds at the same points, but fp32
    # accumulation-order differences can flip an occasional bf16 ulp that then propagates
    # through conv2 / GN2, so the gate carries margin over the typical ~1e-3 deviation.
    TOL = 2e-2

    # config 1: projection shortcut (stride 2, 4 -> 8 planes), N=2, 16x16
    in_planes, planes, stride = 4, 8, 2
    params1 = _make_params(kp1, in_planes, planes, with_shortcut=True)
    x1 = jax.random.normal(kx1, (2, in_planes, 16, 16), jnp.float32)

    out1 = jax.block_until_ready(fwd(x1, params1, stride=stride, train=True))
    ref1 = jax.block_until_ready(_ref_forward(x1, params1, stride, train=True))
    assert out1.shape == (2, planes, 8, 8), out1.shape
    err = float(jnp.max(jnp.abs(out1 - ref1)))
    assert err < TOL, f"config1 max err {err}"

    # config 1, forced small row tiles: exercises multi-tile GN stat accumulation
    out1t = jax.block_until_ready(
        fwd(x1, params1, stride=stride, train=True, row_tile_bytes=16384))
    err = float(jnp.max(jnp.abs(out1t - ref1)))
    assert err < TOL, f"config1 tiled max err {err}"

    # config 1, eval mode: no final ReLU, returns (None, out)
    none_out, out1e = fwd(x1, params1, stride=stride, train=False)
    out1e = jax.block_until_ready(out1e)
    ref1e = _ref_forward(x1, params1, stride, train=False)
    assert none_out is None
    err = float(jnp.max(jnp.abs(out1e - ref1e)))
    assert err < TOL, f"config1 eval max err {err}"

    # config 2: identity shortcut, 14x14 spatial (Wo not a multiple of 8) with a row tile
    # that does NOT divide Ho -> exercises the masked GN statistics on padded rows/cols.
    params2 = _make_params(kp2, 8, 8, with_shortcut=False)
    x2 = jax.random.normal(kx2, (2, 8, 14, 14), jnp.float32)
    out2 = jax.block_until_ready(fwd(x2, params2, stride=1, train=True,
                                     row_tile_bytes=24576))
    ref2 = jax.block_until_ready(_ref_forward(x2, params2, 1, train=True))
    assert out2.shape == (2, 8, 14, 14), out2.shape
    err = float(jnp.max(jnp.abs(out2 - ref2)))
    assert err < TOL, f"config2 max err {err}"

    print("KERNEL_OK")
</pallas_src>

<mosaic_0001>
module attributes {stable_mosaic.version = 11 : i64} {
  func.func @_conv_stats_kernel(%arg0: i32, %arg1: i32, %arg2: memref<1x36x9x128xbf16, #tpu.memory_space<vmem>>, %arg3: memref<5x256x128xbf16, #tpu.memory_space<vmem>>, %arg4: memref<1x64x128xbf16, #tpu.memory_space<vmem>>, %arg5: memref<1x1x2x128xf32, #tpu.memory_space<vmem>>) attributes {dimension_semantics = [#tpu.dimension_semantics<parallel>, #tpu.dimension_semantics<parallel>], iteration_bounds = array<i64: 2, 1>, scalar_prefetch = 0 : i64, scratch_operands = 0 : i64, tpu.core_type = #tpu.core_type<tc>, window_params = [{transform_indices = @transform_0, window_bounds = array<i64: 1, 36, 9, 128>}, {pipeline_mode = #tpu.pipeline_mode<synchronous>, transform_indices = @transform_1, window_bounds = array<i64: 5, 256, 128>}, {transform_indices = @transform_2, window_bounds = array<i64: 1, 64, 128>}, {transform_indices = @transform_3, window_bounds = array<i64: 1, 1, 2, 128>}]} {
    %c8_i32 = arith.constant 8 : i32
    %0 = arith.muli %arg1, %c8_i32 : i32
    %c0_i32 = arith.constant 0 : i32
    %1 = arith.addi %0, %c0_i32 : i32
    %c0 = arith.constant 0 : index
    %2 = arith.index_cast %1 : i32 to index
    %c0_0 = arith.constant 0 : index
    %c0_1 = arith.constant 0 : index
    %3 = vector.load %arg2[%c0, %2, %c0_0, %c0_1] : memref<1x36x9x128xbf16, #tpu.memory_space<vmem>>, vector<1x8x8x128xbf16>
    %4 = vector.shape_cast %3 : vector<1x8x8x128xbf16> to vector<8x8x128xbf16>
    %5 = vector.shape_cast %4 : vector<8x8x128xbf16> to vector<64x128xbf16>
    %c9_i32 = arith.constant 9 : i32
    %6 = arith.addi %0, %c9_i32 : i32
    %c0_2 = arith.constant 0 : index
    %7 = arith.index_cast %6 : i32 to index
    %c0_3 = arith.constant 0 : index
    %c0_4 = arith.constant 0 : index
    %8 = vector.load %arg2[%c0_2, %7, %c0_3, %c0_4] : memref<1x36x9x128xbf16, #tpu.memory_space<vmem>>, vector<1x8x8x128xbf16>
    %9 = vector.shape_cast %8 : vector<1x8x8x128xbf16> to vector<8x8x128xbf16>
    %10 = vector.shape_cast %9 : vector<8x8x128xbf16> to vector<64x128xbf16>
    %11 = tpu.concatenate %5, %10 in 1 : vector<64x128xbf16>, vector<64x128xbf16> -> vector<64x256xbf16>
    %c0_5 = arith.constant 0 : index
    %c0_6 = arith.constant 0 : index
    %c0_7 = arith.constant 0 : index
    %12 = vector.load %arg3[%c0_5, %c0_6, %c0_7] : memref<5x256x128xbf16, #tpu.memory_space<vmem>>, vector<1x256x128xbf16>
    %13 = vector.shape_cast %12 : vector<1x256x128xbf16> to vector<256x128xbf16>
    %cst = arith.constant dense<0.000000e+00> : vector<64x128xf32>
    %14 = tpu.matmul %11, %13, %cst {dimension_numbers = #tpu.dot_dimension_numbers<[1], [0], [0], [1], [0, 0, 1, 1], [], []>} : vector<64x256xbf16>, vector<256x128xbf16>, vector<64x128xf32> -> vector<64x128xf32>
    %c0_i32_8 = arith.constant 0 : i32
    %15 = arith.addi %0, %c0_i32_8 : i32
    %c0_9 = arith.constant 0 : index
    %16 = arith.index_cast %15 : i32 to index
    %c1 = arith.constant 1 : index
    %c0_10 = arith.constant 0 : index
    %17 = vector.load %arg2[%c0_9, %16, %c1, %c0_10] : memref<1x36x9x128xbf16, #tpu.memory_space<vmem>>, vector<1x8x8x128xbf16>
    %18 = vector.shape_cast %17 : vector<1x8x8x128xbf16> to vector<8x8x128xbf16>
    %19 = vector.shape_cast %18 : vector<8x8x128xbf16> to vector<64x128xbf16>
    %c18_i32 = arith.constant 18 : i32
    %20 = arith.addi %0, %c18_i32 : i32
    %c0_11 = arith.constant 0 : index
    %21 = arith.index_cast %20 : i32 to index
    %c0_12 = arith.constant 0 : index
    %c0_13 = arith.constant 0 : index
    %22 = vector.load %arg2[%c0_11, %21, %c0_12, %c0_13] : memref<1x36x9x128xbf16, #tpu.memory_space<vmem>>, vector<1x8x8x128xbf16>
    %23 = vector.shape_cast %22 : vector<1x8x8x128xbf16> to vector<8x8x128xbf16>
    %24 = vector.shape_cast %23 : vector<8x8x128xbf16> to vector<64x128xbf16>
    %25 = tpu.concatenate %19, %24 in 1 : vector<64x128xbf16>, vector<64x128xbf16> -> vector<64x256xbf16>
    %c1_14 = arith.constant 1 : index
    %c0_15 = arith.constant 0 : index
    %c0_16 = arith.constant 0 : index
    %26 = vector.load %arg3[%c1_14, %c0_15, %c0_16] : memref<5x256x128xbf16, #tpu.memory_space<vmem>>, vector<1x256x128xbf16>
    %27 = vector.shape_cast %26 : vector<1x256x128xbf16> to vector<256x128xbf16>
    %cst_17 = arith.constant dense<0.000000e+00> : vector<64x128xf32>
    %28 = tpu.matmul %25, %27, %cst_17 {dimension_numbers = #tpu.dot_dimension_numbers<[1], [0], [0], [1], [0, 0, 1, 1], [], []>} : vector<64x256xbf16>, vector<256x128xbf16>, vector<64x128xf32> -> vector<64x128xf32>
    %29 = arith.addf %14, %28 : vector<64x128xf32>
    %c27_i32 = arith.constant 27 : i32
    %30 = arith.addi %0, %c27_i32 : i32
    %c0_18 = arith.constant 0 : index
    %31 = arith.index_cast %30 : i32 to index
    %c0_19 = arith.constant 0 : index
    %c0_20 = arith.constant 0 : index
    %32 = vector.load %arg2[%c0_18, %31, %c0_19, %c0_20] : memref<1x36x9x128xbf16, #tpu.memory_space<vmem>>, vector<1x8x8x128xbf16>
    %33 = vector.shape_cast %32 : vector<1x8x8x128xbf16> to vector<8x8x128xbf16>
    %34 = vector.shape_cast %33 : vector<8x8x128xbf16> to vector<64x128xbf16>
    %c18_i32_21 = arith.constant 18 : i32
    %35 = arith.addi %0, %c18_i32_21 : i32
    %c0_22 = arith.constant 0 : index
    %36 = arith.index_cast %35 : i32 to index
    %c1_23 = arith.constant 1 : index
    %c0_24 = arith.constant 0 : index
    %37 = vector.load %arg2[%c0_22, %36, %c1_23, %c0_24] : memref<1x36x9x128xbf16, #tpu.memory_space<vmem>>, vector<1x8x8x128xbf16>
    %38 = vector.shape_cast %37 : vector<1x8x8x128xbf16> to vector<8x8x128xbf16>
    %39 = vector.shape_cast %38 : vector<8x8x128xbf16> to vector<64x128xbf16>
    %40 = tpu.concatenate %34, %39 in 1 : vector<64x128xbf16>, vector<64x128xbf16> -> vector<64x256xbf16>
    %c2 = arith.constant 2 : index
    %c0_25 = arith.constant 0 : index
    %c0_26 = arith.constant 0 : index
    %41 = vector.load %arg3[%c2, %c0_25, %c0_26] : memref<5x256x128xbf16, #tpu.memory_space<vmem>>, vector<1x256x128xbf16>
    %42 = vector.shape_cast %41 : vector<1x256x128xbf16> to vector<256x128xbf16>
    %cst_27 = arith.constant dense<0.000000e+00> : vector<64x128xf32>
    %43 = tpu.matmul %40, %42, %cst_27 {dimension_numbers = #tpu.dot_dimension_numbers<[1], [0], [0], [1], [0, 0, 1, 1], [], []>} : vector<64x256xbf16>, vector<256x128xbf16>, vector<64x128xf32> -> vector<64x128xf32>
    %44 = arith.addf %29, %43 : vector<64x128xf32>
    %c1_i32 = arith.constant 1 : i32
    %45 = arith.addi %0, %c1_i32 : i32
    %c0_28 = arith.constant 0 : index
    %46 = arith.index_cast %45 : i32 to index
    %c0_29 = arith.constant 0 : index
    %c0_30 = arith.constant 0 : index
    %47 = vector.load %arg2[%c0_28, %46, %c0_29, %c0_30] : memref<1x36x9x128xbf16, #tpu.memory_space<vmem>>, vector<1x8x8x128xbf16>
    %48 = vector.shape_cast %47 : vector<1x8x8x128xbf16> to vector<8x8x128xbf16>
    %49 = vector.shape_cast %48 : vector<8x8x128xbf16> to vector<64x128xbf16>
    %c10_i32 = arith.constant 10 : i32
    %50 = arith.addi %0, %c10_i32 : i32
    %c0_31 = arith.constant 0 : index
    %51 = arith.index_cast %50 : i32 to index
    %c0_32 = arith.constant 0 : index
    %c0_33 = arith.constant 0 : index
    %52 = vector.load %arg2[%c0_31, %51, %c0_32, %c0_33] : memref<1x36x9x128xbf16, #tpu.memory_space<vmem>>, vector<1x8x8x128xbf16>
    %53 = vector.shape_cast %52 : vector<1x8x8x128xbf16> to vector<8x8x128xbf16>
    %54 = vector.shape_cast %53 : vector<8x8x128xbf16> to vector<64x128xbf16>
    %55 = tpu.concatenate %49, %54 in 1 : vector<64x128xbf16>, vector<64x128xbf16> -> vector<64x256xbf16>
    %c3 = arith.constant 3 : index
    %c0_34 = arith.constant 0 : index
    %c0_35 = arith.constant 0 : index
    %56 = vector.load %arg3[%c3, %c0_34, %c0_35] : memref<5x256x128xbf16, #tpu.memory_space<vmem>>, vector<1x256x128xbf16>
    %57 = vector.shape_cast %56 : vector<1x256x128xbf16> to vector<256x128xbf16>
    %cst_36 = arith.constant dense<0.000000e+00> : vector<64x128xf32>
    %58 = tpu.matmul %55, %57, %cst_36 {dimension_numbers = #tpu.dot_dimension_numbers<[1], [0], [0], [1], [0, 0, 1, 1], [], []>} : vector<64x256xbf16>, vector<256x128xbf16>, vector<64x128xf32> -> vector<64x128xf32>
    %59 = arith.addf %44, %58 : vector<64x128xf32>
    %c1_i32_37 = arith.constant 1 : i32
    %60 = arith.addi %0, %c1_i32_37 : i32
    %c0_38 = arith.constant 0 : index
    %61 = arith.index_cast %60 : i32 to index
    %c1_39 = arith.constant 1 : index
    %c0_40 = arith.constant 0 : index
    %62 = vector.load %arg2[%c0_38, %61, %c1_39, %c0_40] : memref<1x36x9x128xbf16, #tpu.memory_space<vmem>>, vector<1x8x8x128xbf16>
    %63 = vector.shape_cast %62 : vector<1x8x8x128xbf16> to vector<8x8x128xbf16>
    %64 = vector.shape_cast %63 : vector<8x8x128xbf16> to vector<64x128xbf16>
    %c1_i32_41 = arith.constant 1 : i32
    %65 = arith.addi %0, %c1_i32_41 : i32
    %c0_42 = arith.constant 0 : index
    %66 = arith.index_cast %65 : i32 to index
    %c1_43 = arith.constant 1 : index
    %c0_44 = arith.constant 0 : index
    %67 = vector.load %arg2[%c0_42, %66, %c1_43, %c0_44] : memref<1x36x9x128xbf16, #tpu.memory_space<vmem>>, vector<1x8x8x128xbf16>
    %68 = vector.shape_cast %67 : vector<1x8x8x128xbf16> to vector<8x8x128xbf16>
    %69 = vector.shape_cast %68 : vector<8x8x128xbf16> to vector<64x128xbf16>
    %70 = tpu.concatenate %64, %69 in 1 : vector<64x128xbf16>, vector<64x128xbf16> -> vector<64x256xbf16>
    %c4 = arith.constant 4 : index
    %c0_45 = arith.constant 0 : index
    %c0_46 = arith.constant 0 : index
    %71 = vector.load %arg3[%c4, %c0_45, %c0_46] : memref<5x256x128xbf16, #tpu.memory_space<vmem>>, vector<1x256x128xbf16>
    %72 = vector.shape_cast %71 : vector<1x256x128xbf16> to vector<256x128xbf16>
    %cst_47 = arith.constant dense<0.000000e+00> : vector<64x128xf32>
    %73 = tpu.matmul %70, %72, %cst_47 {dimension_numbers = #tpu.dot_dimension_numbers<[1], [0], [0], [1], [0, 0, 1, 1], [], []>} : vector<64x256xbf16>, vector<256x128xbf16>, vector<64x128xf32> -> vector<64x128xf32>
    %74 = arith.addf %59, %73 : vector<64x128xf32>
    %cst_48 = arith.constant dense<0.000000e+00> : vector<128xf32>
    %75 = vector.multi_reduction <add>, %74, %cst_48 [0] : vector<64x128xf32> to vector<128xf32>
    %76 = vector.shape_cast %75 : vector<128xf32> to vector<1x128xf32>
    %c0_49 = arith.constant 0 : index
    %c0_50 = arith.constant 0 : index
    %c0_51 = arith.constant 0 : index
    %c0_52 = arith.constant 0 : index
    %77 = vector.load %arg5[%c0_49, %c0_50, %c0_51, %c0_52] : memref<1x1x2x128xf32, #tpu.memory_space<vmem>>, vector<1x1x1x128xf32>
    %78 = vector.shape_cast %77 : vector<1x1x1x128xf32> to vector<1x128xf32>
    %79 = vector.shape_cast %76 : vector<1x128xf32> to vector<1x1x1x128xf32>
    tpu.vector_store %arg5[%c0_49, %c0_50, %c0_51, %c0_52], %79 {strides = array<i32>} : memref<1x1x2x128xf32, #tpu.memory_space<vmem>>, vector<1x1x1x128xf32>,
    %80 = arith.mulf %74, %74 : vector<64x128xf32>
    %cst_53 = arith.constant dense<0.000000e+00> : vector<128xf32>
    %81 = vector.multi_reduction <add>, %80, %cst_53 [0] : vector<64x128xf32> to vector<128xf32>
    %82 = vector.shape_cast %81 : vector<128xf32> to vector<1x128xf32>
    %c0_54 = arith.constant 0 : index
    %c0_55 = arith.constant 0 : index
    %c1_56 = arith.constant 1 : index
    %c0_57 = arith.constant 0 : index
    %83 = vector.load %arg5[%c0_54, %c0_55, %c1_56, %c0_57] : memref<1x1x2x128xf32, #tpu.memory_space<vmem>>, vector<1x1x1x128xf32>
    %84 = vector.shape_cast %83 : vector<1x1x1x128xf32> to vector<1x128xf32>
    %85 = vector.shape_cast %82 : vector<1x128xf32> to vector<1x1x1x128xf32>
    tpu.vector_store %arg5[%c0_54, %c0_55, %c1_56, %c0_57], %85 {strides = array<i32>} : memref<1x1x2x128xf32, #tpu.memory_space<vmem>>, vector<1x1x1x128xf32>,
    %86 = arith.truncf %74 : vector<64x128xf32> to vector<64x128xbf16>
    %c0_58 = arith.constant 0 : index
    %c0_59 = arith.constant 0 : index
    %c0_60 = arith.constant 0 : index
    %87 = vector.load %arg4[%c0_58, %c0_59, %c0_60] : memref<1x64x128xbf16, #tpu.memory_space<vmem>>, vector<1x64x128xbf16>
    %88 = vector.shape_cast %87 : vector<1x64x128xbf16> to vector<64x128xbf16>
    %89 = vector.shape_cast %86 : vector<64x128xbf16> to vector<1x64x128xbf16>
    tpu.vector_store %arg4[%c0_58, %c0_59, %c0_60], %89 {strides = array<i32>} : memref<1x64x128xbf16, #tpu.memory_space<vmem>>, vector<1x64x128xbf16>,
    return
  }
  func.func @transform_0(%arg0: i32, %arg1: i32) -> (i32, i32, i32, i32) {
    %c0_i32 = arith.constant 0 : i32
    %c0_i32_0 = arith.constant 0 : i32
    %c0_i32_1 = arith.constant 0 : i32
    %c0_i32_2 = arith.constant 0 : i32
    return %arg0, %c0_i32, %c0_i32_0, %c0_i32_1 : i32, i32, i32, i32
  }
  func.func @transform_1(%arg0: i32, %arg1: i32) -> (i32, i32, i32) {
    %c0_i32 = arith.constant 0 : i32
    %c0_i32_0 = arith.constant 0 : i32
    %c0_i32_1 = arith.constant 0 : i32
    %c0_i32_2 = arith.constant 0 : i32
    return %c0_i32, %c0_i32_0, %c0_i32_1 : i32, i32, i32
  }
  func.func @transform_2(%arg0: i32, %arg1: i32) -> (i32, i32, i32) {
    %c0_i32 = arith.constant 0 : i32
    %c0_i32_0 = arith.constant 0 : i32
    return %arg0, %arg1, %c0_i32 : i32, i32, i32
  }
  func.func @transform_3(%arg0: i32, %arg1: i32) -> (i32, i32, i32, i32) {
    %c0_i32 = arith.constant 0 : i32
    %c0_i32_0 = arith.constant 0 : i32
    %c0_i32_1 = arith.constant 0 : i32
    return %arg0, %arg1, %c0_i32, %c0_i32_0 : i32, i32, i32, i32
  }
}

module attributes {stable_mosaic.version = 11 : i64} {
  func.func @_finalize_kernel(%arg0: i32, %arg1: i32, %arg2: memref<1x64x128xbf16, #tpu.memory_space<vmem>>, %arg3: memref<1x1x128xf32, #tpu.memory_space<vmem>>, %arg4: memref<1x1x128xf32, #tpu.memory_space<vmem>>, %arg5: memref<1x64x128xbf16, #tpu.memory_space<vmem>>) attributes {dimension_semantics = [#tpu.dimension_semantics<parallel>, #tpu.dimension_semantics<parallel>], iteration_bounds = array<i64: 2, 1>, scalar_prefetch = 0 : i64, scratch_operands = 0 : i64, tpu.core_type = #tpu.core_type<tc>, window_params = [{transform_indices = @transform_0, window_bounds = array<i64: 1, 64, 128>}, {transform_indices = @transform_1, window_bounds = array<i64: 1, 1, 128>}, {transform_indices = @transform_2, window_bounds = array<i64: 1, 1, 128>}, {transform_indices = @transform_3, window_bounds = array<i64: 1, 64, 128>}]} {
    %c0 = arith.constant 0 : index
    %c0_0 = arith.constant 0 : index
    %c0_1 = arith.constant 0 : index
    %0 = vector.load %arg2[%c0, %c0_0, %c0_1] : memref<1x64x128xbf16, #tpu.memory_space<vmem>>, vector<1x64x128xbf16>
    %1 = vector.shape_cast %0 : vector<1x64x128xbf16> to vector<64x128xbf16>
    %2 = arith.extf %1 : vector<64x128xbf16> to vector<64x128xf32>
    %c0_2 = arith.constant 0 : index
    %c0_3 = arith.constant 0 : index
    %c0_4 = arith.constant 0 : index
    %3 = vector.load %arg3[%c0_2, %c0_3, %c0_4] : memref<1x1x128xf32, #tpu.memory_space<vmem>>, vector<1x1x128xf32>
    %4 = vector.shape_cast %3 : vector<1x1x128xf32> to vector<1x128xf32>
    %5 = vector.broadcast %4 : vector<1x128xf32> to vector<64x128xf32>
    %6 = arith.mulf %2, %5 : vector<64x128xf32>
    %c0_5 = arith.constant 0 : index
    %c0_6 = arith.constant 0 : index
    %c0_7 = arith.constant 0 : index
    %7 = vector.load %arg4[%c0_5, %c0_6, %c0_7] : memref<1x1x128xf32, #tpu.memory_space<vmem>>, vector<1x1x128xf32>
    %8 = vector.shape_cast %7 : vector<1x1x128xf32> to vector<1x128xf32>
    %9 = vector.broadcast %8 : vector<1x128xf32> to vector<64x128xf32>
    %10 = arith.addf %6, %9 : vector<64x128xf32>
    %cst = arith.constant 0.000000e+00 : f32
    %11 = vector.broadcast %cst : f32 to vector<64x128xf32>
    %12 = arith.maximumf %10, %11 : vector<64x128xf32>
    %13 = arith.truncf %12 : vector<64x128xf32> to vector<64x128xbf16>
    %c0_8 = arith.constant 0 : index
    %c0_9 = arith.constant 0 : index
    %c0_10 = arith.constant 0 : index
    %14 = vector.load %arg5[%c0_8, %c0_9, %c0_10] : memref<1x64x128xbf16, #tpu.memory_space<vmem>>, vector<1x64x128xbf16>
    %15 = vector.shape_cast %14 : vector<1x64x128xbf16> to vector<64x128xbf16>
    %16 = vector.shape_cast %13 : vector<64x128xbf16> to vector<1x64x128xbf16>
    tpu.vector_store %arg5[%c0_8, %c0_9, %c0_10], %16 {strides = array<i32>} : memref<1x64x128xbf16, #tpu.memory_space<vmem>>, vector<1x64x128xbf16>,
    return
  }
  func.func @transform_0(%arg0: i32, %arg1: i32) -> (i32, i32, i32) {
    %c0_i32 = arith.constant 0 : i32
    %c0_i32_0 = arith.constant 0 : i32
    return %arg0, %arg1, %c0_i32 : i32, i32, i32
  }
  func.func @transform_1(%arg0: i32, %arg1: i32) -> (i32, i32, i32) {
    %c0_i32 = arith.constant 0 : i32
    %c0_i32_0 = arith.constant 0 : i32
    %c0_i32_1 = arith.constant 0 : i32
    return %arg0, %c0_i32, %c0_i32_0 : i32, i32, i32
  }
  func.func @transform_2(%arg0: i32, %arg1: i32) -> (i32, i32, i32) {
    %c0_i32 = arith.constant 0 : i32
    %c0_i32_0 = arith.constant 0 : i32
    %c0_i32_1 = arith.constant 0 : i32
    return %arg0, %c0_i32, %c0_i32_0 : i32, i32, i32
  }
  func.func @transform_3(%arg0: i32, %arg1: i32) -> (i32, i32, i32) {
    %c0_i32 = arith.constant 0 : i32
    %c0_i32_0 = arith.constant 0 : i32
    return %arg0, %arg1, %c0_i32 : i32, i32, i32
  }
}

module attributes {stable_mosaic.version = 11 : i64} {
  func.func @_conv_stats_kernel(%arg0: i32, %arg1: i32, %arg2: memref<1x10x10x128xbf16, #tpu.memory_space<vmem>>, %arg3: memref<5x256x128xbf16, #tpu.memory_space<vmem>>, %arg4: memref<1x64x128xbf16, #tpu.memory_space<vmem>>, %arg5: memref<1x1x2x128xf32, #tpu.memory_space<vmem>>) attributes {dimension_semantics = [#tpu.dimension_semantics<parallel>, #tpu.dimension_semantics<parallel>], iteration_bounds = array<i64: 2, 1>, scalar_prefetch = 0 : i64, scratch_operands = 0 : i64, tpu.core_type = #tpu.core_type<tc>, window_params = [{transform_indices = @transform_0, window_bounds = array<i64: 1, 10, 10, 128>}, {pipeline_mode = #tpu.pipeline_mode<synchronous>, transform_indices = @transform_1, window_bounds = array<i64: 5, 256, 128>}, {transform_indices = @transform_2, window_bounds = array<i64: 1, 64, 128>}, {transform_indices = @transform_3, window_bounds = array<i64: 1, 1, 2, 128>}]} {
    %c8_i32 = arith.constant 8 : i32
    %0 = arith.muli %arg1, %c8_i32 : i32
    %c0_i32 = arith.constant 0 : i32
    %1 = arith.addi %0, %c0_i32 : i32
    %c0 = arith.constant 0 : index
    %2 = arith.index_cast %1 : i32 to index
    %c0_0 = arith.constant 0 : index
    %c0_1 = arith.constant 0 : index
    %3 = vector.load %arg2[%c0, %2, %c0_0, %c0_1] : memref<1x10x10x128xbf16, #tpu.memory_space<vmem>>, vector<1x8x8x128xbf16>
    %4 = vector.shape_cast %3 : vector<1x8x8x128xbf16> to vector<8x8x128xbf16>
    %5 = vector.shape_cast %4 : vector<8x8x128xbf16> to vector<64x128xbf16>
    %c0_i32_2 = arith.constant 0 : i32
    %6 = arith.addi %0, %c0_i32_2 : i32
    %c0_3 = arith.constant 0 : index
    %7 = arith.index_cast %6 : i32 to index
    %c1 = arith.constant 1 : index
    %c0_4 = arith.constant 0 : index
    %8 = vector.load %arg2[%c0_3, %7, %c1, %c0_4] : memref<1x10x10x128xbf16, #tpu.memory_space<vmem>>, vector<1x8x8x128xbf16>
    %9 = vector.shape_cast %8 : vector<1x8x8x128xbf16> to vector<8x8x128xbf16>
    %10 = vector.shape_cast %9 : vector<8x8x128xbf16> to vector<64x128xbf16>
    %11 = tpu.concatenate %5, %10 in 1 : vector<64x128xbf16>, vector<64x128xbf16> -> vector<64x256xbf16>
    %c0_5 = arith.constant 0 : index
    %c0_6 = arith.constant 0 : index
    %c0_7 = arith.constant 0 : index
    %12 = vector.load %arg3[%c0_5, %c0_6, %c0_7] : memref<5x256x128xbf16, #tpu.memory_space<vmem>>, vector<1x256x128xbf16>
    %13 = vector.shape_cast %12 : vector<1x256x128xbf16> to vector<256x128xbf16>
    %cst = arith.constant dense<0.000000e+00> : vector<64x128xf32>
    %14 = tpu.matmul %11, %13, %cst {dimension_numbers = #tpu.dot_dimension_numbers<[1], [0], [0], [1], [0, 0, 1, 1], [], []>} : vector<64x256xbf16>, vector<256x128xbf16>, vector<64x128xf32> -> vector<64x128xf32>
    %c0_i32_8 = arith.constant 0 : i32
    %15 = arith.addi %0, %c0_i32_8 : i32
    %c0_9 = arith.constant 0 : index
    %16 = arith.index_cast %15 : i32 to index
    %c2 = arith.constant 2 : index
    %c0_10 = arith.constant 0 : index
    %17 = vector.load %arg2[%c0_9, %16, %c2, %c0_10] : memref<1x10x10x128xbf16, #tpu.memory_space<vmem>>, vector<1x8x8x128xbf16>
    %18 = vector.shape_cast %17 : vector<1x8x8x128xbf16> to vector<8x8x128xbf16>
    %19 = vector.shape_cast %18 : vector<8x8x128xbf16> to vector<64x128xbf16>
    %c1_i32 = arith.constant 1 : i32
    %20 = arith.addi %0, %c1_i32 : i32
    %c0_11 = arith.constant 0 : index
    %21 = arith.index_cast %20 : i32 to index
    %c0_12 = arith.constant 0 : index
    %c0_13 = arith.constant 0 : index
    %22 = vector.load %arg2[%c0_11, %21, %c0_12, %c0_13] : memref<1x10x10x128xbf16, #tpu.memory_space<vmem>>, vector<1x8x8x128xbf16>
    %23 = vector.shape_cast %22 : vector<1x8x8x128xbf16> to vector<8x8x128xbf16>
    %24 = vector.shape_cast %23 : vector<8x8x128xbf16> to vector<64x128xbf16>
    %25 = tpu.concatenate %19, %24 in 1 : vector<64x128xbf16>, vector<64x128xbf16> -> vector<64x256xbf16>
    %c1_14 = arith.constant 1 : index
    %c0_15 = arith.constant 0 : index
    %c0_16 = arith.constant 0 : index
    %26 = vector.load %arg3[%c1_14, %c0_15, %c0_16] : memref<5x256x128xbf16, #tpu.memory_space<vmem>>, vector<1x256x128xbf16>
    %27 = vector.shape_cast %26 : vector<1x256x128xbf16> to vector<256x128xbf16>
    %cst_17 = arith.constant dense<0.000000e+00> : vector<64x128xf32>
    %28 = tpu.matmul %25, %27, %cst_17 {dimension_numbers = #tpu.dot_dimension_numbers<[1], [0], [0], [1], [0, 0, 1, 1], [], []>} : vector<64x256xbf16>, vector<256x128xbf16>, vector<64x128xf32> -> vector<64x128xf32>
    %29 = arith.addf %14, %28 : vector<64x128xf32>
    %c1_i32_18 = arith.constant 1 : i32
    %30 = arith.addi %0, %c1_i32_18 : i32
    %c0_19 = arith.constant 0 : index
    %31 = arith.index_cast %30 : i32 to index
    %c1_20 = arith.constant 1 : index
    %c0_21 = arith.constant 0 : index
    %32 = vector.load %arg2[%c0_19, %31, %c1_20, %c0_21] : memref<1x10x10x128xbf16, #tpu.memory_space<vmem>>, vector<1x8x8x128xbf16>
    %33 = vector.shape_cast %32 : vector<1x8x8x128xbf16> to vector<8x8x128xbf16>
    %34 = vector.shape_cast %33 : vector<8x8x128xbf16> to vector<64x128xbf16>
    %c1_i32_22 = arith.constant 1 : i32
    %35 = arith.addi %0, %c1_i32_22 : i32
    %c0_23 = arith.constant 0 : index
    %36 = arith.index_cast %35 : i32 to index
    %c2_24 = arith.constant 2 : index
    %c0_25 = arith.constant 0 : index
    %37 = vector.load %arg2[%c0_23, %36, %c2_24, %c0_25] : memref<1x10x10x128xbf16, #tpu.memory_space<vmem>>, vector<1x8x8x128xbf16>
    %38 = vector.shape_cast %37 : vector<1x8x8x128xbf16> to vector<8x8x128xbf16>
    %39 = vector.shape_cast %38 : vector<8x8x128xbf16> to vector<64x128xbf16>
    %40 = tpu.concatenate %34, %39 in 1 : vector<64x128xbf16>, vector<64x128xbf16> -> vector<64x256xbf16>
    %c2_26 = arith.constant 2 : index
    %c0_27 = arith.constant 0 : index
    %c0_28 = arith.constant 0 : index
    %41 = vector.load %arg3[%c2_26, %c0_27, %c0_28] : memref<5x256x128xbf16, #tpu.memory_space<vmem>>, vector<1x256x128xbf16>
    %42 = vector.shape_cast %41 : vector<1x256x128xbf16> to vector<256x128xbf16>
    %cst_29 = arith.constant dense<0.000000e+00> : vector<64x128xf32>
    %43 = tpu.matmul %40, %42, %cst_29 {dimension_numbers = #tpu.dot_dimension_numbers<[1], [0], [0], [1], [0, 0, 1, 1], [], []>} : vector<64x256xbf16>, vector<256x128xbf16>, vector<64x128xf32> -> vector<64x128xf32>
    %44 = arith.addf %29, %43 : vector<64x128xf32>
    %c2_i32 = arith.constant 2 : i32
    %45 = arith.addi %0, %c2_i32 : i32
    %c0_30 = arith.constant 0 : index
    %46 = arith.index_cast %45 : i32 to index
    %c0_31 = arith.constant 0 : index
    %c0_32 = arith.constant 0 : index
    %47 = vector.load %arg2[%c0_30, %46, %c0_31, %c0_32] : memref<1x10x10x128xbf16, #tpu.memory_space<vmem>>, vector<1x8x8x128xbf16>
    %48 = vector.shape_cast %47 : vector<1x8x8x128xbf16> to vector<8x8x128xbf16>
    %49 = vector.shape_cast %48 : vector<8x8x128xbf16> to vector<64x128xbf16>
    %c2_i32_33 = arith.constant 2 : i32
    %50 = arith.addi %0, %c2_i32_33 : i32
    %c0_34 = arith.constant 0 : index
    %51 = arith.index_cast %50 : i32 to index
    %c1_35 = arith.constant 1 : index
    %c0_36 = arith.constant 0 : index
    %52 = vector.load %arg2[%c0_34, %51, %c1_35, %c0_36] : memref<1x10x10x128xbf16, #tpu.memory_space<vmem>>, vector<1x8x8x128xbf16>
    %53 = vector.shape_cast %52 : vector<1x8x8x128xbf16> to vector<8x8x128xbf16>
    %54 = vector.shape_cast %53 : vector<8x8x128xbf16> to vector<64x128xbf16>
    %55 = tpu.concatenate %49, %54 in 1 : vector<64x128xbf16>, vector<64x128xbf16> -> vector<64x256xbf16>
    %c3 = arith.constant 3 : index
    %c0_37 = arith.constant 0 : index
    %c0_38 = arith.constant 0 : index
    %56 = vector.load %arg3[%c3, %c0_37, %c0_38] : memref<5x256x128xbf16, #tpu.memory_space<vmem>>, vector<1x256x128xbf16>
    %57 = vector.shape_cast %56 : vector<1x256x128xbf16> to vector<256x128xbf16>
    %cst_39 = arith.constant dense<0.000000e+00> : vector<64x128xf32>
    %58 = tpu.matmul %55, %57, %cst_39 {dimension_numbers = #tpu.dot_dimension_numbers<[1], [0], [0], [1], [0, 0, 1, 1], [], []>} : vector<64x256xbf16>, vector<256x128xbf16>, vector<64x128xf32> -> vector<64x128xf32>
    %59 = arith.addf %44, %58 : vector<64x128xf32>
    %c2_i32_40 = arith.constant 2 : i32
    %60 = arith.addi %0, %c2_i32_40 : i32
    %c0_41 = arith.constant 0 : index
    %61 = arith.index_cast %60 : i32 to index
    %c2_42 = arith.constant 2 : index
    %c0_43 = arith.constant 0 : index
    %62 = vector.load %arg2[%c0_41, %61, %c2_42, %c0_43] : memref<1x10x10x128xbf16, #tpu.memory_space<vmem>>, vector<1x8x8x128xbf16>
    %63 = vector.shape_cast %62 : vector<1x8x8x128xbf16> to vector<8x8x128xbf16>
    %64 = vector.shape_cast %63 : vector<8x8x128xbf16> to vector<64x128xbf16>
    %c2_i32_44 = arith.constant 2 : i32
    %65 = arith.addi %0, %c2_i32_44 : i32
    %c0_45 = arith.constant 0 : index
    %66 = arith.index_cast %65 : i32 to index
    %c2_46 = arith.constant 2 : index
    %c0_47 = arith.constant 0 : index
    %67 = vector.load %arg2[%c0_45, %66, %c2_46, %c0_47] : memref<1x10x10x128xbf16, #tpu.memory_space<vmem>>, vector<1x8x8x128xbf16>
    %68 = vector.shape_cast %67 : vector<1x8x8x128xbf16> to vector<8x8x128xbf16>
    %69 = vector.shape_cast %68 : vector<8x8x128xbf16> to vector<64x128xbf16>
    %70 = tpu.concatenate %64, %69 in 1 : vector<64x128xbf16>, vector<64x128xbf16> -> vector<64x256xbf16>
    %c4 = arith.constant 4 : index
    %c0_48 = arith.constant 0 : index
    %c0_49 = arith.constant 0 : index
    %71 = vector.load %arg3[%c4, %c0_48, %c0_49] : memref<5x256x128xbf16, #tpu.memory_space<vmem>>, vector<1x256x128xbf16>
    %72 = vector.shape_cast %71 : vector<1x256x128xbf16> to vector<256x128xbf16>
    %cst_50 = arith.constant dense<0.000000e+00> : vector<64x128xf32>
    %73 = tpu.matmul %70, %72, %cst_50 {dimension_numbers = #tpu.dot_dimension_numbers<[1], [0], [0], [1], [0, 0, 1, 1], [], []>} : vector<64x256xbf16>, vector<256x128xbf16>, vector<64x128xf32> -> vector<64x128xf32>
    %74 = arith.addf %59, %73 : vector<64x128xf32>
    %cst_51 = arith.constant dense<0.000000e+00> : vector<128xf32>
    %75 = vector.multi_reduction <add>, %74, %cst_51 [0] : vector<64x128xf32> to vector<128xf32>
    %76 = vector.shape_cast %75 : vector<128xf32> to vector<1x128xf32>
    %c0_52 = arith.constant 0 : index
    %c0_53 = arith.constant 0 : index
    %c0_54 = arith.constant 0 : index
    %c0_55 = arith.constant 0 : index
    %77 = vector.load %arg5[%c0_52, %c0_53, %c0_54, %c0_55] : memref<1x1x2x128xf32, #tpu.memory_space<vmem>>, vector<1x1x1x128xf32>
    %78 = vector.shape_cast %77 : vector<1x1x1x128xf32> to vector<1x128xf32>
    %79 = vector.shape_cast %76 : vector<1x128xf32> to vector<1x1x1x128xf32>
    tpu.vector_store %arg5[%c0_52, %c0_53, %c0_54, %c0_55], %79 {strides = array<i32>} : memref<1x1x2x128xf32, #tpu.memory_space<vmem>>, vector<1x1x1x128xf32>,
    %80 = arith.mulf %74, %74 : vector<64x128xf32>
    %cst_56 = arith.constant dense<0.000000e+00> : vector<128xf32>
    %81 = vector.multi_reduction <add>, %80, %cst_56 [0] : vector<64x128xf32> to vector<128xf32>
    %82 = vector.shape_cast %81 : vector<128xf32> to vector<1x128xf32>
    %c0_57 = arith.constant 0 : index
    %c0_58 = arith.constant 0 : index
    %c1_59 = arith.constant 1 : index
    %c0_60 = arith.constant 0 : index
    %83 = vector.load %arg5[%c0_57, %c0_58, %c1_59, %c0_60] : memref<1x1x2x128xf32, #tpu.memory_space<vmem>>, vector<1x1x1x128xf32>
    %84 = vector.shape_cast %83 : vector<1x1x1x128xf32> to vector<1x128xf32>
    %85 = vector.shape_cast %82 : vector<1x128xf32> to vector<1x1x1x128xf32>
    tpu.vector_store %arg5[%c0_57, %c0_58, %c1_59, %c0_60], %85 {strides = array<i32>} : memref<1x1x2x128xf32, #tpu.memory_space<vmem>>, vector<1x1x1x128xf32>,
    %86 = arith.truncf %74 : vector<64x128xf32> to vector<64x128xbf16>
    %c0_61 = arith.constant 0 : index
    %c0_62 = arith.constant 0 : index
    %c0_63 = arith.constant 0 : index
    %87 = vector.load %arg4[%c0_61, %c0_62, %c0_63] : memref<1x64x128xbf16, #tpu.memory_space<vmem>>, vector<1x64x128xbf16>
    %88 = vector.shape_cast %87 : vector<1x64x128xbf16> to vector<64x128xbf16>
    %89 = vector.shape_cast %86 : vector<64x128xbf16> to vector<1x64x128xbf16>
    tpu.vector_store %arg4[%c0_61, %c0_62, %c0_63], %89 {strides = array<i32>} : memref<1x64x128xbf16, #tpu.memory_space<vmem>>, vector<1x64x128xbf16>,
    return
  }
  func.func @transform_0(%arg0: i32, %arg1: i32) -> (i32, i32, i32, i32) {
    %c0_i32 = arith.constant 0 : i32
    %c0_i32_0 = arith.constant 0 : i32
    %c0_i32_1 = arith.constant 0 : i32
    %c0_i32_2 = arith.constant 0 : i32
    return %arg0, %c0_i32, %c0_i32_0, %c0_i32_1 : i32, i32, i32, i32
  }
  func.func @transform_1(%arg0: i32, %arg1: i32) -> (i32, i32, i32) {
    %c0_i32 = arith.constant 0 : i32
    %c0_i32_0 = arith.constant 0 : i32
    %c0_i32_1 = arith.constant 0 : i32
    %c0_i32_2 = arith.constant 0 : i32
    return %c0_i32, %c0_i32_0, %c0_i32_1 : i32, i32, i32
  }
  func.func @transform_2(%arg0: i32, %arg1: i32) -> (i32, i32, i32) {
    %c0_i32 = arith.constant 0 : i32
    %c0_i32_0 = arith.constant 0 : i32
    return %arg0, %arg1, %c0_i32 : i32, i32, i32
  }
  func.func @transform_3(%arg0: i32, %arg1: i32) -> (i32, i32, i32, i32) {
    %c0_i32 = arith.constant 0 : i32
    %c0_i32_0 = arith.constant 0 : i32
    %c0_i32_1 = arith.constant 0 : i32
    return %arg0, %arg1, %c0_i32, %c0_i32_0 : i32, i32, i32, i32
  }
}

module attributes {stable_mosaic.version = 11 : i64} {
  func.func @_conv_stats_kernel(%arg0: i32, %arg1: i32, %arg2: memref<1x8x8x128xbf16, #tpu.memory_space<vmem>>, %arg3: memref<1x128x128xbf16, #tpu.memory_space<vmem>>, %arg4: memref<1x64x128xbf16, #tpu.memory_space<vmem>>, %arg5: memref<1x1x2x128xf32, #tpu.memory_space<vmem>>) attributes {dimension_semantics = [#tpu.dimension_semantics<parallel>, #tpu.dimension_semantics<parallel>], iteration_bounds = array<i64: 2, 1>, scalar_prefetch = 0 : i64, scratch_operands = 0 : i64, tpu.core_type = #tpu.core_type<tc>, window_params = [{transform_indices = @transform_0, window_bounds = array<i64: 1, 8, 8, 128>}, {pipeline_mode = #tpu.pipeline_mode<synchronous>, transform_indices = @transform_1, window_bounds = array<i64: 1, 128, 128>}, {transform_indices = @transform_2, window_bounds = array<i64: 1, 64, 128>}, {transform_indices = @transform_3, window_bounds = array<i64: 1, 1, 2, 128>}]} {
    %c8_i32 = arith.constant 8 : i32
    %0 = arith.muli %arg1, %c8_i32 : i32
    %c0_i32 = arith.constant 0 : i32
    %1 = arith.addi %0, %c0_i32 : i32
    %c0 = arith.constant 0 : index
    %2 = arith.index_cast %1 : i32 to index
    %c0_0 = arith.constant 0 : index
    %c0_1 = arith.constant 0 : index
    %3 = vector.load %arg2[%c0, %2, %c0_0, %c0_1] : memref<1x8x8x128xbf16, #tpu.memory_space<vmem>>, vector<1x8x8x128xbf16>
    %4 = vector.shape_cast %3 : vector<1x8x8x128xbf16> to vector<8x8x128xbf16>
    %5 = vector.shape_cast %4 : vector<8x8x128xbf16> to vector<64x128xbf16>
    %c0_2 = arith.constant 0 : index
    %c0_3 = arith.constant 0 : index
    %c0_4 = arith.constant 0 : index
    %6 = vector.load %arg3[%c0_2, %c0_3, %c0_4] : memref<1x128x128xbf16, #tpu.memory_space<vmem>>, vector<1x128x128xbf16>
    %7 = vector.shape_cast %6 : vector<1x128x128xbf16> to vector<128x128xbf16>
    %cst = arith.constant dense<0.000000e+00> : vector<64x128xf32>
    %8 = tpu.matmul %5, %7, %cst {dimension_numbers = #tpu.dot_dimension_numbers<[1], [0], [0], [1], [0, 0, 1, 1], [], []>} : vector<64x128xbf16>, vector<128x128xbf16>, vector<64x128xf32> -> vector<64x128xf32>
    %cst_5 = arith.constant dense<0.000000e+00> : vector<128xf32>
    %9 = vector.multi_reduction <add>, %8, %cst_5 [0] : vector<64x128xf32> to vector<128xf32>
    %10 = vector.shape_cast %9 : vector<128xf32> to vector<1x128xf32>
    %c0_6 = arith.constant 0 : index
    %c0_7 = arith.constant 0 : index
    %c0_8 = arith.constant 0 : index
    %c0_9 = arith.constant 0 : index
    %11 = vector.load %arg5[%c0_6, %c0_7, %c0_8, %c0_9] : memref<1x1x2x128xf32, #tpu.memory_space<vmem>>, vector<1x1x1x128xf32>
    %12 = vector.shape_cast %11 : vector<1x1x1x128xf32> to vector<1x128xf32>
    %13 = vector.shape_cast %10 : vector<1x128xf32> to vector<1x1x1x128xf32>
    tpu.vector_store %arg5[%c0_6, %c0_7, %c0_8, %c0_9], %13 {strides = array<i32>} : memref<1x1x2x128xf32, #tpu.memory_space<vmem>>, vector<1x1x1x128xf32>,
    %14 = arith.mulf %8, %8 : vector<64x128xf32>
    %cst_10 = arith.constant dense<0.000000e+00> : vector<128xf32>
    %15 = vector.multi_reduction <add>, %14, %cst_10 [0] : vector<64x128xf32> to vector<128xf32>
    %16 = vector.shape_cast %15 : vector<128xf32> to vector<1x128xf32>
    %c0_11 = arith.constant 0 : index
    %c0_12 = arith.constant 0 : index
    %c1 = arith.constant 1 : index
    %c0_13 = arith.constant 0 : index
    %17 = vector.load %arg5[%c0_11, %c0_12, %c1, %c0_13] : memref<1x1x2x128xf32, #tpu.memory_space<vmem>>, vector<1x1x1x128xf32>
    %18 = vector.shape_cast %17 : vector<1x1x1x128xf32> to vector<1x128xf32>
    %19 = vector.shape_cast %16 : vector<1x128xf32> to vector<1x1x1x128xf32>
    tpu.vector_store %arg5[%c0_11, %c0_12, %c1, %c0_13], %19 {strides = array<i32>} : memref<1x1x2x128xf32, #tpu.memory_space<vmem>>, vector<1x1x1x128xf32>,
    %20 = arith.truncf %8 : vector<64x128xf32> to vector<64x128xbf16>
    %c0_14 = arith.constant 0 : index
    %c0_15 = arith.constant 0 : index
    %c0_16 = arith.constant 0 : index
    %21 = vector.load %arg4[%c0_14, %c0_15, %c0_16] : memref<1x64x128xbf16, #tpu.memory_space<vmem>>, vector<1x64x128xbf16>
    %22 = vector.shape_cast %21 : vector<1x64x128xbf16> to vector<64x128xbf16>
    %23 = vector.shape_cast %20 : vector<64x128xbf16> to vector<1x64x128xbf16>
    tpu.vector_store %arg4[%c0_14, %c0_15, %c0_16], %23 {strides = array<i32>} : memref<1x64x128xbf16, #tpu.memory_space<vmem>>, vector<1x64x128xbf16>,
    return
  }
  func.func @transform_0(%arg0: i32, %arg1: i32) -> (i32, i32, i32, i32) {
    %c0_i32 = arith.constant 0 : i32
    %c0_i32_0 = arith.constant 0 : i32
    %c0_i32_1 = arith.constant 0 : i32
    %c0_i32_2 = arith.constant 0 : i32
    return %arg0, %c0_i32, %c0_i32_0, %c0_i32_1 : i32, i32, i32, i32
  }
  func.func @transform_1(%arg0: i32, %arg1: i32) -> (i32, i32, i32) {
    %c0_i32 = arith.constant 0 : i32
    %c0_i32_0 = arith.constant 0 : i32
    %c0_i32_1 = arith.constant 0 : i32
    %c0_i32_2 = arith.constant 0 : i32
    return %c0_i32, %c0_i32_0, %c0_i32_1 : i32, i32, i32
  }
  func.func @transform_2(%arg0: i32, %arg1: i32) -> (i32, i32, i32) {
    %c0_i32 = arith.constant 0 : i32
    %c0_i32_0 = arith.constant 0 : i32
    return %arg0, %arg1, %c0_i32 : i32, i32, i32
  }
  func.func @transform_3(%arg0: i32, %arg1: i32) -> (i32, i32, i32, i32) {
    %c0_i32 = arith.constant 0 : i32
    %c0_i32_0 = arith.constant 0 : i32
    %c0_i32_1 = arith.constant 0 : i32
    return %arg0, %arg1, %c0_i32, %c0_i32_0 : i32, i32, i32, i32
  }
}

module attributes {stable_mosaic.version = 11 : i64} {
  func.func @_finalize_res_kernel(%arg0: i32, %arg1: i32, %arg2: memref<1x64x128xbf16, #tpu.memory_space<vmem>>, %arg3: memref<1x64x128xbf16, #tpu.memory_space<vmem>>, %arg4: memref<1x1x128xf32, #tpu.memory_space<vmem>>, %arg5: memref<1x1x128xf32, #tpu.memory_space<vmem>>, %arg6: memref<1x1x128xf32, #tpu.memory_space<vmem>>, %arg7: memref<1x1x128xf32, #tpu.memory_space<vmem>>, %arg8: memref<1x64x128xf32, #tpu.memory_space<vmem>>) attributes {dimension_semantics = [#tpu.dimension_semantics<parallel>, #tpu.dimension_semantics<parallel>], iteration_bounds = array<i64: 2, 1>, scalar_prefetch = 0 : i64, scratch_operands = 0 : i64, tpu.core_type = #tpu.core_type<tc>, window_params = [{transform_indices = @transform_0, window_bounds = array<i64: 1, 64, 128>}, {transform_indices = @transform_1, window_bounds = array<i64: 1, 64, 128>}, {transform_indices = @transform_2, window_bounds = array<i64: 1, 1, 128>}, {transform_indices = @transform_3, window_bounds = array<i64: 1, 1, 128>}, {transform_indices = @transform_4, window_bounds = array<i64: 1, 1, 128>}, {transform_indices = @transform_5, window_bounds = array<i64: 1, 1, 128>}, {transform_indices = @transform_6, window_bounds = array<i64: 1, 64, 128>}]} {
    %c0 = arith.constant 0 : index
    %c0_0 = arith.constant 0 : index
    %c0_1 = arith.constant 0 : index
    %0 = vector.load %arg2[%c0, %c0_0, %c0_1] : memref<1x64x128xbf16, #tpu.memory_space<vmem>>, vector<1x64x128xbf16>
    %1 = vector.shape_cast %0 : vector<1x64x128xbf16> to vector<64x128xbf16>
    %2 = arith.extf %1 : vector<64x128xbf16> to vector<64x128xf32>
    %c0_2 = arith.constant 0 : index
    %c0_3 = arith.constant 0 : index
    %c0_4 = arith.constant 0 : index
    %3 = vector.load %arg4[%c0_2, %c0_3, %c0_4] : memref<1x1x128xf32, #tpu.memory_space<vmem>>, vector<1x1x128xf32>
    %4 = vector.shape_cast %3 : vector<1x1x128xf32> to vector<1x128xf32>
    %5 = vector.broadcast %4 : vector<1x128xf32> to vector<64x128xf32>
    %6 = arith.mulf %2, %5 : vector<64x128xf32>
    %c0_5 = arith.constant 0 : index
    %c0_6 = arith.constant 0 : index
    %c0_7 = arith.constant 0 : index
    %7 = vector.load %arg5[%c0_5, %c0_6, %c0_7] : memref<1x1x128xf32, #tpu.memory_space<vmem>>, vector<1x1x128xf32>
    %8 = vector.shape_cast %7 : vector<1x1x128xf32> to vector<1x128xf32>
    %9 = vector.broadcast %8 : vector<1x128xf32> to vector<64x128xf32>
    %10 = arith.addf %6, %9 : vector<64x128xf32>
    %c0_8 = arith.constant 0 : index
    %c0_9 = arith.constant 0 : index
    %c0_10 = arith.constant 0 : index
    %11 = vector.load %arg3[%c0_8, %c0_9, %c0_10] : memref<1x64x128xbf16, #tpu.memory_space<vmem>>, vector<1x64x128xbf16>
    %12 = vector.shape_cast %11 : vector<1x64x128xbf16> to vector<64x128xbf16>
    %13 = arith.extf %12 : vector<64x128xbf16> to vector<64x128xf32>
    %c0_11 = arith.constant 0 : index
    %c0_12 = arith.constant 0 : index
    %c0_13 = arith.constant 0 : index
    %14 = vector.load %arg6[%c0_11, %c0_12, %c0_13] : memref<1x1x128xf32, #tpu.memory_space<vmem>>, vector<1x1x128xf32>
    %15 = vector.shape_cast %14 : vector<1x1x128xf32> to vector<1x128xf32>
    %16 = vector.broadcast %15 : vector<1x128xf32> to vector<64x128xf32>
    %17 = arith.mulf %13, %16 : vector<64x128xf32>
    %c0_14 = arith.constant 0 : index
    %c0_15 = arith.constant 0 : index
    %c0_16 = arith.constant 0 : index
    %18 = vector.load %arg7[%c0_14, %c0_15, %c0_16] : memref<1x1x128xf32, #tpu.memory_space<vmem>>, vector<1x1x128xf32>
    %19 = vector.shape_cast %18 : vector<1x1x128xf32> to vector<1x128xf32>
    %20 = vector.broadcast %19 : vector<1x128xf32> to vector<64x128xf32>
    %21 = arith.addf %17, %20 : vector<64x128xf32>
    %22 = arith.addf %10, %21 : vector<64x128xf32>
    %cst = arith.constant 0.000000e+00 : f32
    %23 = vector.broadcast %cst : f32 to vector<64x128xf32>
    %24 = arith.maximumf %22, %23 : vector<64x128xf32>
    %c0_17 = arith.constant 0 : index
    %c0_18 = arith.constant 0 : index
    %c0_19 = arith.constant 0 : index
    %25 = vector.load %arg8[%c0_17, %c0_18, %c0_19] : memref<1x64x128xf32, #tpu.memory_space<vmem>>, vector<1x64x128xf32>
    %26 = vector.shape_cast %25 : vector<1x64x128xf32> to vector<64x128xf32>
    %27 = vector.shape_cast %24 : vector<64x128xf32> to vector<1x64x128xf32>
    tpu.vector_store %arg8[%c0_17, %c0_18, %c0_19], %27 {strides = array<i32>} : memref<1x64x128xf32, #tpu.memory_space<vmem>>, vector<1x64x128xf32>,
    return
  }
  func.func @transform_0(%arg0: i32, %arg1: i32) -> (i32, i32, i32) {
    %c0_i32 = arith.constant 0 : i32
    %c0_i32_0 = arith.constant 0 : i32
    return %arg0, %arg1, %c0_i32 : i32, i32, i32
  }
  func.func @transform_1(%arg0: i32, %arg1: i32) -> (i32, i32, i32) {
    %c0_i32 = arith.constant 0 : i32
    %c0_i32_0 = arith.constant 0 : i32
    return %arg0, %arg1, %c0_i32 : i32, i32, i32
  }
  func.func @transform_2(%arg0: i32, %arg1: i32) -> (i32, i32, i32) {
    %c0_i32 = arith.constant 0 : i32
    %c0_i32_0 = arith.constant 0 : i32
    %c0_i32_1 = arith.constant 0 : i32
    return %arg0, %c0_i32, %c0_i32_0 : i32, i32, i32
  }
  func.func @transform_3(%arg0: i32, %arg1: i32) -> (i32, i32, i32) {
    %c0_i32 = arith.constant 0 : i32
    %c0_i32_0 = arith.constant 0 : i32
    %c0_i32_1 = arith.constant 0 : i32
    return %arg0, %c0_i32, %c0_i32_0 : i32, i32, i32
  }
  func.func @transform_4(%arg0: i32, %arg1: i32) -> (i32, i32, i32) {
    %c0_i32 = arith.constant 0 : i32
    %c0_i32_0 = arith.constant 0 : i32
    %c0_i32_1 = arith.constant 0 : i32
    return %arg0, %c0_i32, %c0_i32_0 : i32, i32, i32
  }
  func.func @transform_5(%arg0: i32, %arg1: i32) -> (i32, i32, i32) {
    %c0_i32 = arith.constant 0 : i32
    %c0_i32_0 = arith.constant 0 : i32
    %c0_i32_1 = arith.constant 0 : i32
    return %arg0, %c0_i32, %c0_i32_0 : i32, i32, i32
  }
  func.func @transform_6(%arg0: i32, %arg1: i32) -> (i32, i32, i32) {
    %c0_i32 = arith.constant 0 : i32
    %c0_i32_0 = arith.constant 0 : i32
    return %arg0, %arg1, %c0_i32 : i32, i32, i32
  }
}

</mosaic_0001>

<llo_original>
// kernel: basic_block_ws_forward.6
$region0: #{basic_block_ws_forward.6}
  #allocation0 [shape = 'u32[]', space=smem, size = 0x4, offset = 0x4, fixed_abs, tag = 'smem constant byte address 0x4 - core index']
  #allocation1 [shape = 'u32[144,128]{1,0:T(1,128)}', space=vmem, size = 0x12000, scoped, tag = 'internal scratch']
  %s0 = inlined_call_operand.hbm [shape: bf16[2,64,128], index: 0, kind: input, shape index: {}]
  %s1 = inlined_call_operand.hbm [shape: f32[2,1,128], index: 1, kind: input, shape index: {}]
  %s2 = inlined_call_operand.hbm [shape: f32[2,1,128], index: 2, kind: input, shape index: {}]
  %s3 = inlined_call_operand.hbm [shape: bf16[2,64,128], index: 3, kind: output, shape index: {}]
  %s4 = sld [smem:[#allocation0]]
  $region57: #{basic_block_ws_forward.6} parent=0
    _
  %s6 = ssub.s32 1, %s4
  %s7 = scalar_select 0, %s6, %s4
  $region1: #{basic_block_ws_forward.6} parent=0
    #allocation2 [shape = 'u8[32768]{0}', space=vmem, size = 0x8000, scoped, tag = 'input window, operand 0']
    #allocation3 [shape = 's32[2]{0}', space=sflag, size = 0x8, scoped, tag = 'scoped memory for basic_block_ws_forward.6']
    #allocation4 [shape = 's32[2]{0}', space=sflag, size = 0x8, scoped, tag = 'scoped memory for basic_block_ws_forward.6']
    #allocation5 [shape = 'u8[1024]{0}', space=vmem, size = 0x400, scoped, tag = 'input window, operand 1']
    #allocation6 [shape = 's32[2]{0}', space=sflag, size = 0x8, scoped, tag = 'scoped memory for basic_block_ws_forward.6']
    #allocation7 [shape = 'u8[1024]{0}', space=vmem, size = 0x400, scoped, tag = 'input window, operand 2']
    #allocation8 [shape = 'u8[32768]{0}', space=vmem, size = 0x8000, scoped, tag = 'output window, operand 0']
    %8 = vsyncpa [#allocation3], 0
    %s9 = scalar_lea.sflag [#allocation3], 1
    %10 = vsyncpa %s9, 0
    %11 = vsyncpa [#allocation6], 0
    %s12 = scalar_lea.sflag [#allocation6], 1
    %13 = vsyncpa %s12, 0
    %14 = vsyncpa [#allocation4], 0
    %s15 = scalar_lea.sflag [#allocation4], 1
    %16 = vsyncpa %s15, 0
    loop: start=0, step=1, limit=4
    $region2: #{basic_block_ws_forward.6} parent=1 // loop_pre_header
      _
    $region3: #{basic_block_ws_forward.6} parent=1 // loop_header
      %s18 = sphi 0, %s22
      %p19 = scmp.ge.s32.totalorder %s18, 4
      %s25 = sphi 0, %s37
      %s26 = sphi 0, %s33
      %s27 = sphi 0, %s25
      %s28 = sphi 0, %s26
      %s29 = sphi 0, %s27
      %s30 = sphi 0, %s28
      %s42 = sphi 0, %s44
      %s45 = sphi 0, %s42
      %s46 = sphi 0, %s45
      %s62 = sphi 0, %s46
      %s68 = sphi 0, %s70
      %s71 = sphi 0, %s68
      %s72 = sphi 0, %s71
      %s88 = sphi 0, %s72
      %s94 = sphi 0, %s96
      %s97 = sphi 0, %s94
      %s98 = sphi 0, %s97
      %s114 = sphi 0, %s98
      %s122 = sphi 0, %s124
      %s125 = sphi 0, %s122
      %s126 = sphi 0, %s125
      %s142 = sphi 0, %s126
    $region4: #{basic_block_ws_forward.6} parent=1 // loop_header_branch
      %21 = sbr.rel (%p19) target = $region8
    $region5: #{basic_block_ws_forward.6} parent=1 // loop_body
      %s23 = ssub.s32 %s18, 1
      %s24 = ssub.s32 %s18, 2
      %s31 = sadd.s32 1, %s26
      %p32 = scmp.ge.s32.totalorder %s31, 1
      %s33 = scalar_select %p32, 0, %s31
      %s34 = sadd.s32 1, %s25
      %s35 = scalar_select %p32, %s34, %s25
      %p36 = scmp.ge.s32.totalorder %s35, 2
      %s37 = scalar_select %p36, 0, %s35
      %s38 = ssub.s32 %s25, %s37
      %s39 = ssub.s32 %s26, %s33
      %s40 = sor.u32 %s38, %s39
      %p41 = scmp.eq.s32.totalorder %s40, 0
      %s43 = sadd.s32 %s42, 1
      %s44 = scalar_select %p41, %s42, %s43
      %p47 = pneg %p41
      %p48 = scmp.eq.s32.totalorder %s18, 1
      %p49 = por %p47, %p48
      %p50 = scmp.ne.s32.totalorder %s42, %s45
      %p51 = scmp.eq.s32.totalorder %s18, 0
      %p52 = por %p50, %p51
      %p53 = scmp.ne.s32.totalorder %s42, %s45
      %p54 = scmp.eq.s32.totalorder %s23, 1
      %p55 = por %p53, %p54
      %p56 = scmp.ne.s32.totalorder %s45, %s46
      %p57 = scmp.eq.s32.totalorder %s23, 0
      %p58 = por %p56, %p57
      %p59 = scmp.ne.s32.totalorder %s45, %s46
      %p60 = scmp.eq.s32.totalorder %s24, 1
      %p61 = por %p59, %p60
      %p63 = scmp.ne.s32.totalorder %s46, %s62
      %p64 = scmp.eq.s32.totalorder %s24, 0
      %p65 = por %p63, %p64
      %s66 = ssub.s32 %s25, %s37
      %p67 = scmp.eq.s32.totalorder %s66, 0
      %s69 = sadd.s32 %s68, 1
      %s70 = scalar_select %p67, %s68, %s69
      %p73 = pneg %p67
      %p74 = scmp.eq.s32.totalorder %s18, 1
      %p75 = por %p73, %p74
      %p76 = scmp.ne.s32.totalorder %s68, %s71
      %p77 = scmp.eq.s32.totalorder %s18, 0
      %p78 = por %p76, %p77
      %p79 = scmp.ne.s32.totalorder %s68, %s71
      %p80 = scmp.eq.s32.totalorder %s23, 1
      %p81 = por %p79, %p80
      %p82 = scmp.ne.s32.totalorder %s71, %s72
      %p83 = scmp.eq.s32.totalorder %s23, 0
      %p84 = por %p82, %p83
      %p85 = scmp.ne.s32.totalorder %s71, %s72
      %p86 = scmp.eq.s32.totalorder %s24, 1
      %p87 = por %p85, %p86
      %p89 = scmp.ne.s32.totalorder %s72, %s88
      %p90 = scmp.eq.s32.totalorder %s24, 0
      %p91 = por %p89, %p90
      %s92 = ssub.s32 %s25, %s37
      %p93 = scmp.eq.s32.totalorder %s92, 0
      %s95 = sadd.s32 %s94, 1
      %s96 = scalar_select %p93, %s94, %s95
      %p99 = pneg %p93
      %p100 = scmp.eq.s32.totalorder %s18, 1
      %p101 = por %p99, %p100
      %p102 = scmp.ne.s32.totalorder %s94, %s97
      %p103 = scmp.eq.s32.totalorder %s18, 0
      %p104 = por %p102, %p103
      %p105 = scmp.ne.s32.totalorder %s94, %s97
      %p106 = scmp.eq.s32.totalorder %s23, 1
      %p107 = por %p105, %p106
      %p108 = scmp.ne.s32.totalorder %s97, %s98
      %p109 = scmp.eq.s32.totalorder %s23, 0
      %p110 = por %p108, %p109
      %p111 = scmp.ne.s32.totalorder %s97, %s98
      %p112 = scmp.eq.s32.totalorder %s24, 1
      %p113 = por %p111, %p112
      %p115 = scmp.ne.s32.totalorder %s98, %s114
      %p116 = scmp.eq.s32.totalorder %s24, 0
      %p117 = por %p115, %p116
      %s118 = ssub.s32 %s25, %s37
      %s119 = ssub.s32 %s26, %s33
      %s120 = sor.u32 %s118, %s119
      %p121 = scmp.eq.s32.totalorder %s120, 0
      %s123 = sadd.s32 %s122, 1
      %s124 = scalar_select %p121, %s122, %s123
      %p127 = pneg %p121
      %p128 = scmp.eq.s32.totalorder %s18, 1
      %p129 = por %p127, %p128
      %p130 = scmp.ne.s32.totalorder %s122, %s125
      %p131 = scmp.eq.s32.totalorder %s18, 0
      %p132 = por %p130, %p131
      %p133 = scmp.ne.s32.totalorder %s122, %s125
      %p134 = scmp.eq.s32.totalorder %s23, 1
      %p135 = por %p133, %p134
      %p136 = scmp.ne.s32.totalorder %s125, %s126
      %p137 = scmp.eq.s32.totalorder %s23, 0
      %p138 = por %p136, %p137
      %p139 = scmp.ne.s32.totalorder %s125, %s126
      %p140 = scmp.eq.s32.totalorder %s24, 1
      %p141 = por %p139, %p140
      %p143 = scmp.ne.s32.totalorder %s126, %s142
      %p144 = scmp.eq.s32.totalorder %s24, 0
      %p145 = por %p143, %p144
      %p146 = scmp.le.s32.totalorder 1, %s18
      %p147 = scmp.lt.s32.totalorder %s18, 3
      %p148 = pnand %p146, %p147
      %p149 = pneg %p148
      // Predicated region
      $region9: #{basic_block_ws_forward.6} parent=5 // pred_check
        _
      $region10: #{basic_block_ws_forward.6} parent=5 // pred_check_branch
        %151 = sbr.rel (%p148) target = $region12
      $region11: #{basic_block_ws_forward.6} parent=5 // pred_region
        %s152 = ssub.s32 %s18, 1
      $region12: #{basic_block_ws_forward.6} parent=5 // pred_fallthru
        _
      %p153 = scmp.lt.s32.totalorder %s18, 2
      // Predicated region
      $region13: #{basic_block_ws_forward.6} parent=5 // pred_check
        %p154 = pneg %p153
      $region14: #{basic_block_ws_forward.6} parent=5 // pred_check_branch
        %156 = sbr.rel (%p154) target = $region16
      $region15: #{basic_block_ws_forward.6} parent=5 // pred_region
        // Predicated region
        $region17: #{basic_block_ws_forward.6} parent=15 // pred_check
          %p157 = pneg %p52
        $region18: #{basic_block_ws_forward.6} parent=15 // pred_check_branch
          %159 = sbr.rel (%p157) target = $region20
        $region19: #{basic_block_ws_forward.6} parent=15 // pred_region
          %s160 = sand.u32 %s42, 1
          %s161 = scalar_lea.sflag [#allocation3], %s160
          %s162 = sand.u32 %s42, 1
          %s163 = smul.addr %s162, 32
          %s164 = scalar_lea.vmem [#allocation2], %s163
          %s165 = smul.u32 8, %s26
          %s167 = ssub.s32 512, 512
          %168 = vsyncadd %s161, %s167
          %s169 = smul.addr %s25, 8
          %s170 = sadd.s32 %s165, %s169
          %s171 = smul.addr %s170, 64
          %s172 = scalar_lea.hbm %s0, %s171
          %s173 = sshll.u32 %s164, 4
          %s174 = int_to_ptr.vmem [resolvable:$true] %s173
          %179 = dma.hbm_to_vmem [thread:$0]  %s172, 512, %s174, %s161, 64, 64, 4
        $region20: #{basic_block_ws_forward.6} parent=15 // pred_fallthru
          _
        // Predicated region
        $region21: #{basic_block_ws_forward.6} parent=15 // pred_check
          %p180 = pneg %p78
        $region22: #{basic_block_ws_forward.6} parent=15 // pred_check_branch
          %182 = sbr.rel (%p180) target = $region24
        $region23: #{basic_block_ws_forward.6} parent=15 // pred_region
          %s183 = sand.u32 %s18, 1
          %s184 = scalar_lea.sflag [#allocation6], %s183
          %s185 = sand.u32 %s68, 1
          %s186 = scalar_lea.vmem [#allocation5], %s185
          %s188 = ssub.s32 16, 16
          %189 = vsyncadd %s184, %s188
          %s190 = smul.addr %s25, 16
          %s191 = scalar_lea.hbm %s1, %s190
          %s193 = sshll.u32 %s186, 4
          %s194 = int_to_ptr.vmem [resolvable:$true] %s193
          %196 = dma.hbm_to_vmem [thread:$0]  %s191, 16, %s194, %s184
        $region24: #{basic_block_ws_forward.6} parent=15 // pred_fallthru
          _
        // Predicated region
        $region25: #{basic_block_ws_forward.6} parent=15 // pred_check
          %p197 = pneg %p104
        $region26: #{basic_block_ws_forward.6} parent=15 // pred_check_branch
          %199 = sbr.rel (%p197) target = $region28
        $region27: #{basic_block_ws_forward.6} parent=15 // pred_region
          %s200 = sand.u32 %s18, 1
          %s201 = scalar_lea.sflag [#allocation6], %s200
          %s202 = sand.u32 %s94, 1
          %s203 = scalar_lea.vmem [#allocation7], %s202
          %s205 = ssub.s32 16, 16
          %206 = vsyncadd %s201, %s205
          %s207 = smul.addr %s25, 16
          %s208 = scalar_lea.hbm %s2, %s207
          %s210 = sshll.u32 %s203, 4
          %s211 = int_to_ptr.vmem [resolvable:$true] %s210
          %213 = dma.hbm_to_vmem [thread:$0]  %s208, 16, %s211, %s201
        $region28: #{basic_block_ws_forward.6} parent=15 // pred_fallthru
          _
      $region16: #{basic_block_ws_forward.6} parent=5 // pred_fallthru
        _
      %p214 = scmp.le.s32.totalorder 1, %s18
      %p215 = scmp.lt.s32.totalorder %s18, 3
      %p216 = pnand %p214, %p215
      %p217 = pneg %p216
      // Predicated region
      $region29: #{basic_block_ws_forward.6} parent=5 // pred_check
        _
      $region30: #{basic_block_ws_forward.6} parent=5 // pred_check_branch
        %219 = sbr.rel (%p216) target = $region32
      $region31: #{basic_block_ws_forward.6} parent=5 // pred_region
        %s220 = ssub.s32 %s18, 1
        %s221 = sand.u32 %s45, 1
        %s222 = scalar_lea.sflag [#allocation3], %s221
        %s223 = sand.u32 %s45, 1
        %s224 = smul.addr %s223, 32
        %s225 = scalar_lea.vmem [#allocation2], %s224
        // Predicated region
        $region33: #{basic_block_ws_forward.6} parent=31 // pred_check
          %p226 = pneg %p58
        $region34: #{basic_block_ws_forward.6} parent=31 // pred_check_branch
          %228 = sbr.rel (%p226) target = $region36
        $region35: #{basic_block_ws_forward.6} parent=31 // pred_region
          %229 = dma.done %s222, 512
        $region36: #{basic_block_ws_forward.6} parent=31 // pred_fallthru
          _
        %s230 = sand.u32 %s23, 1
        %s231 = scalar_lea.sflag [#allocation6], %s230
        %s232 = sand.u32 %s71, 1
        %s233 = scalar_lea.vmem [#allocation5], %s232
        // Predicated region
        $region37: #{basic_block_ws_forward.6} parent=31 // pred_check
          %p234 = pneg %p84
        $region38: #{basic_block_ws_forward.6} parent=31 // pred_check_branch
          %236 = sbr.rel (%p234) target = $region40
        $region39: #{basic_block_ws_forward.6} parent=31 // pred_region
          %237 = dma.done %s231, 16
        $region40: #{basic_block_ws_forward.6} parent=31 // pred_fallthru
          _
        %s238 = sand.u32 %s23, 1
        %s239 = scalar_lea.sflag [#allocation6], %s238
        %s240 = sand.u32 %s97, 1
        %s241 = scalar_lea.vmem [#allocation7], %s240
        // Predicated region
        $region41: #{basic_block_ws_forward.6} parent=31 // pred_check
          %p242 = pneg %p110
        $region42: #{basic_block_ws_forward.6} parent=31 // pred_check_branch
          %244 = sbr.rel (%p242) target = $region44
        $region43: #{basic_block_ws_forward.6} parent=31 // pred_region
          %245 = dma.done %s239, 16
        $region44: #{basic_block_ws_forward.6} parent=31 // pred_fallthru
          _
        %s246 = sand.u32 %s45, 1
        %s247 = scalar_lea.sflag [#allocation3], %s246
        %s248 = sand.u32 %s45, 1
        %s249 = smul.addr %s248, 32
        %s250 = scalar_lea.vmem [#allocation2], %s249
        %p251 = pneg %p58
        %p252 = pneg %p55
        %s253 = sand.u32 %s23, 1
        %s254 = scalar_lea.sflag [#allocation6], %s253
        %s255 = sand.u32 %s71, 1
        %s256 = scalar_lea.vmem [#allocation5], %s255
        %p257 = pneg %p84
        %p258 = pneg %p81
        %s259 = sand.u32 %s23, 1
        %s260 = scalar_lea.sflag [#allocation6], %s259
        %s261 = sand.u32 %s97, 1
        %s262 = scalar_lea.vmem [#allocation7], %s261
        %p263 = pneg %p110
        %p264 = pneg %p107
        %p265 = pneg %p138
        %p266 = pneg %p135
        %s267 = sand.u32 %s125, 1
        %s268 = scalar_lea.sflag [#allocation4], %s267
        %s269 = sand.u32 %s125, 1
        %s270 = smul.addr %s269, 32
        %s271 = scalar_lea.vmem [#allocation8], %s270
        %s272 = smul.u32 8, %s28
        %s273 = smul.u32 8, %s28
        %v274 = vld [vmem:[%s225] sm:$0xf]
        %v275 = vld [vmem:[%s225 + $0x4] sm:$0xf]
        %v276 = vld [vmem:[%s225 + $0x8] sm:$0xf]
        %v277 = vld [vmem:[%s225 + $0xc] sm:$0xf]
        %v278 = vld [vmem:[%s225 + $0x10] sm:$0xf]
        %v279 = vld [vmem:[%s225 + $0x14] sm:$0xf]
        %v280 = vld [vmem:[%s225 + $0x18] sm:$0xf]
        %v281 = vld [vmem:[%s225 + $0x1c] sm:$0xf]
        %v282 = vunpack.c.l.bf16 %v274
        %v283 = vunpack.c.l.bf16 %v275
        %v284 = vunpack.c.l.bf16 %v276
        %v285 = vunpack.c.l.bf16 %v277
        %v286 = vunpack.c.l.bf16 %v278
        %v287 = vunpack.c.l.bf16 %v279
        %v288 = vunpack.c.l.bf16 %v280
        %v289 = vunpack.c.l.bf16 %v281
        %v290 = vld [vmem:[%s233] sm:$0x1]
        %v292 = vlaneseq
        %v293 = vshrl.u32 %v292, 7
        %v294 = vsub.s32 0, %v293
        %v295 = vrot.slane %v290, %v294
        %v297 = vmul.f32 %v282, %v295
        %v298 = vmul.f32 %v283, %v295
        %v299 = vmul.f32 %v284, %v295
        %v300 = vmul.f32 %v285, %v295
        %v301 = vmul.f32 %v286, %v295
        %v302 = vmul.f32 %v287, %v295
        %v303 = vmul.f32 %v288, %v295
        %v304 = vmul.f32 %v289, %v295
        %v305 = vld [vmem:[%s241] sm:$0x1]
        %v307 = vlaneseq
        %v308 = vshrl.u32 %v307, 7
        %v309 = vsub.s32 0, %v308
        %v310 = vrot.slane %v305, %v309
        %v312 = vadd.f32 %v297, %v310
        %v313 = vadd.f32 %v298, %v310
        %v314 = vadd.f32 %v299, %v310
        %v315 = vadd.f32 %v300, %v310
        %v316 = vadd.f32 %v301, %v310
        %v317 = vadd.f32 %v302, %v310
        %v318 = vadd.f32 %v303, %v310
        %v319 = vadd.f32 %v304, %v310
        %v320 = vmax.f32 %v312, 0.0
        %v321 = vmax.f32 %v313, 0.0
        %v322 = vmax.f32 %v314, 0.0
        %v323 = vmax.f32 %v315, 0.0
        %v324 = vmax.f32 %v316, 0.0
        %v325 = vmax.f32 %v317, 0.0
        %v326 = vmax.f32 %v318, 0.0
        %v327 = vmax.f32 %v319, 0.0
        %v328 = vpack.c.bf16 %v321, %v320
        %v329 = vpack.c.bf16 %v323, %v322
        %v330 = vpack.c.bf16 %v325, %v324
        %v331 = vpack.c.bf16 %v327, %v326
        %v336 = vunpack.c.l.b16 %v328
        %v337 = vunpack.c.h.b16 %v328
        %v338 = vunpack.c.l.b16 %v329
        %v339 = vunpack.c.h.b16 %v329
        %v340 = vunpack.c.l.b16 %v330
        %v341 = vunpack.c.h.b16 %v330
        %v342 = vunpack.c.l.b16 %v331
        %v343 = vunpack.c.h.b16 %v331
        %v344 = vpack.c.b16 %v336, %v336
        %v345 = vpack.c.b16 %v337, %v337
        %v346 = vpack.c.b16 %v338, %v338
        %v347 = vpack.c.b16 %v339, %v339
        %v348 = vpack.c.b16 %v340, %v340
        %v349 = vpack.c.b16 %v341, %v341
        %v350 = vpack.c.b16 %v342, %v342
        %v351 = vpack.c.b16 %v343, %v343
        %360 = vst [vmem:[%s271] sm:$0xf] %v344
        %361 = vst [vmem:[%s271 + $0x4] sm:$0xf] %v345
        %362 = vst [vmem:[%s271 + $0x8] sm:$0xf] %v346
        %363 = vst [vmem:[%s271 + $0xc] sm:$0xf] %v347
        %364 = vst [vmem:[%s271 + $0x10] sm:$0xf] %v348
        %365 = vst [vmem:[%s271 + $0x14] sm:$0xf] %v349
        %366 = vst [vmem:[%s271 + $0x18] sm:$0xf] %v350
        %367 = vst [vmem:[%s271 + $0x1c] sm:$0xf] %v351
        %s368 = sand.u32 %s125, 1
        %s369 = scalar_lea.sflag [#allocation4], %s368
        %s370 = sand.u32 %s125, 1
        %s371 = smul.addr %s370, 32
        %s372 = scalar_lea.vmem [#allocation8], %s371
        // Predicated region
        $region45: #{basic_block_ws_forward.6} parent=31 // pred_check
          %p373 = pneg %p135
        $region46: #{basic_block_ws_forward.6} parent=31 // pred_check_branch
          %375 = sbr.rel (%p373) target = $region48
        $region47: #{basic_block_ws_forward.6} parent=31 // pred_region
          %s376 = smul.u32 8, %s28
          %s378 = ssub.s32 512, 512
          %379 = vsyncadd %s369, %s378
          %s380 = smul.addr %s27, 8
          %s381 = sadd.s32 %s376, %s380
          %s382 = smul.addr %s381, 64
          %s383 = scalar_lea.hbm %s3, %s382
          %s384 = sshll.u32 %s372, 4
          %s385 = int_to_ptr.vmem [resolvable:$true] %s384
          %390 = dma.vmem_to_hbm [thread:$0]  %s385, 512, %s383, %s369, 64, 64, 4
        $region48: #{basic_block_ws_forward.6} parent=31 // pred_fallthru
          _
      $region32: #{basic_block_ws_forward.6} parent=5 // pred_fallthru
        _
      %p391 = scmp.le.s32.totalorder 2, %s18
      // Predicated region
      $region49: #{basic_block_ws_forward.6} parent=5 // pred_check
        %p392 = pneg %p391
      $region50: #{basic_block_ws_forward.6} parent=5 // pred_check_branch
        %394 = sbr.rel (%p392) target = $region52
      $region51: #{basic_block_ws_forward.6} parent=5 // pred_region
        %s395 = ssub.s32 %s18, 2
        // Predicated region
        $region53: #{basic_block_ws_forward.6} parent=51 // pred_check
          %p396 = pneg %p141
        $region54: #{basic_block_ws_forward.6} parent=51 // pred_check_branch
          %398 = sbr.rel (%p396) target = $region56
        $region55: #{basic_block_ws_forward.6} parent=51 // pred_region
          %s399 = sand.u32 %s126, 1
          %s400 = scalar_lea.sflag [#allocation4], %s399
          %s401 = sand.u32 %s126, 1
          %s402 = smul.addr %s401, 32
          %s403 = scalar_lea.vmem [#allocation8], %s402
          %404 = dma.done %s400, 512
        $region56: #{basic_block_ws_forward.6} parent=51 // pred_fallthru
          _
      $region52: #{basic_block_ws_forward.6} parent=5 // pred_fallthru
        _
    $region6: #{basic_block_ws_forward.6} parent=1 // loop_footer
      %s22 = sadd.s32 1, %s18
    $region7: #{basic_block_ws_forward.6} parent=1 // loop_footer_branch
      %17 = sbr.rel target = $region3
    $region8: #{basic_block_ws_forward.6} parent=1 // loop_exit
      _
    %405 = vsyncpa [#allocation3], 1
    %s406 = scalar_lea.sflag [#allocation3], 1
    %407 = vsyncpa %s406, 1
    %408 = vsyncpa [#allocation6], 1
    %s409 = scalar_lea.sflag [#allocation6], 1
    %410 = vsyncpa %s409, 1
    %411 = vsyncpa [#allocation4], 1
    %s412 = scalar_lea.sflag [#allocation4], 1
    %413 = vsyncpa %s412, 1

// kernel: basic_block_ws_forward.5
$region0: #{basic_block_ws_forward.5}
  #allocation0 [shape = 'u32[]', space=smem, size = 0x4, offset = 0x4, fixed_abs, tag = 'smem constant byte address 0x4 - core index']
  #allocation1 [shape = 'u32[144,128]{1,0:T(1,128)}', space=vmem, size = 0x12000, scoped, tag = 'internal scratch']
  %s0 = inlined_call_operand.hbm [shape: bf16[2,36,9,128], index: 0, kind: input, shape index: {}]
  %s1 = inlined_call_operand.hbm [shape: bf16[5,256,128], index: 1, kind: input, shape index: {}]
  %s2 = inlined_call_operand.hbm [shape: bf16[2,64,128], index: 2, kind: output, shape index: {0}]
  %s3 = inlined_call_operand.hbm [shape: f32[2,1,2,128], index: 3, kind: output, shape index: {1}]
  %4 = xla_tuple %s2, %s3
  %s5 = sld [smem:[#allocation0]]
  $region57: #{basic_block_ws_forward.5} parent=0
    _
  %s7 = ssub.s32 1, %s5
  %s8 = scalar_select 0, %s7, %s5
  $region1: #{basic_block_ws_forward.5} parent=0
    #allocation2 [shape = 'u8[294912]{0}', space=vmem, size = 0x48000, scoped, tag = 'input window, operand 0']
    #allocation3 [shape = 's32[2]{0}', space=sflag, size = 0x8, scoped, tag = 'scoped memory for basic_block_ws_forward.5']
    #allocation4 [shape = 's32[2]{0}', space=sflag, size = 0x8, scoped, tag = 'scoped memory for basic_block_ws_forward.5']
    #allocation5 [shape = 'u8[327680]{0}', space=vmem, size = 0x50000, scoped, tag = 'input window, operand 1, single buffered']
    #allocation6 [shape = 's32[1]{0}', space=sflag, size = 0x4, scoped, tag = 'scoped memory for basic_block_ws_forward.5']
    #allocation7 [shape = 'u8[32768]{0}', space=vmem, size = 0x8000, scoped, tag = 'output window, operand 0']
    #allocation8 [shape = 'u8[2048]{0}', space=vmem, size = 0x800, scoped, tag = 'output window, operand 1']
    #allocation9 [shape = 's32[2]{0}', space=sflag, size = 0x8, scoped, tag = 'scoped memory for basic_block_ws_forward.5']
    %9 = vsyncpa [#allocation3], 0
    %s10 = scalar_lea.sflag [#allocation3], 1
    %11 = vsyncpa %s10, 0
    %12 = vsyncpa [#allocation6], 0
    %13 = vsyncpa [#allocation4], 0
    %s14 = scalar_lea.sflag [#allocation4], 1
    %15 = vsyncpa %s14, 0
    %16 = vsyncpa [#allocation9], 0
    %s17 = scalar_lea.sflag [#allocation9], 1
    %18 = vsyncpa %s17, 0
    loop: start=0, step=1, limit=4
    $region2: #{basic_block_ws_forward.5} parent=1 // loop_pre_header
      _
    $region3: #{basic_block_ws_forward.5} parent=1 // loop_header
      %s20 = sphi 0, %s24
      %p21 = scmp.ge.s32.totalorder %s20, 4
      %s27 = sphi 0, %s39
      %s28 = sphi 0, %s35
      %s29 = sphi 0, %s27
      %s30 = sphi 0, %s28
      %s31 = sphi 0, %s29
      %s32 = sphi 0, %s30
      %s42 = sphi 0, %s44
      %s45 = sphi 0, %s42
      %s46 = sphi 0, %s45
      %s62 = sphi 0, %s46
      %s66 = sphi 0, %s66
      %s68 = sphi 0, %s66
      %s69 = sphi 0, %s68
      %s83 = sphi 0, %s69
      %s91 = sphi 0, %s93
      %s94 = sphi 0, %s91
      %s95 = sphi 0, %s94
      %s111 = sphi 0, %s95
      %s119 = sphi 0, %s121
      %s122 = sphi 0, %s119
      %s123 = sphi 0, %s122
      %s139 = sphi 0, %s123
    $region4: #{basic_block_ws_forward.5} parent=1 // loop_header_branch
      %23 = sbr.rel (%p21) target = $region8
    $region5: #{basic_block_ws_forward.5} parent=1 // loop_body
      %s25 = ssub.s32 %s20, 1
      %s26 = ssub.s32 %s20, 2
      %s33 = sadd.s32 1, %s28
      %p34 = scmp.ge.s32.totalorder %s33, 1
      %s35 = scalar_select %p34, 0, %s33
      %s36 = sadd.s32 1, %s27
      %s37 = scalar_select %p34, %s36, %s27
      %p38 = scmp.ge.s32.totalorder %s37, 2
      %s39 = scalar_select %p38, 0, %s37
      %s40 = ssub.s32 %s27, %s39
      %p41 = scmp.eq.s32.totalorder %s40, 0
      %s43 = sadd.s32 %s42, 1
      %s44 = scalar_select %p41, %s42, %s43
      %p47 = pneg %p41
      %p48 = scmp.eq.s32.totalorder %s20, 1
      %p49 = por %p47, %p48
      %p50 = scmp.ne.s32.totalorder %s42, %s45
      %p51 = scmp.eq.s32.totalorder %s20, 0
      %p52 = por %p50, %p51
      %p53 = scmp.ne.s32.totalorder %s42, %s45
      %p54 = scmp.eq.s32.totalorder %s25, 1
      %p55 = por %p53, %p54
      %p56 = scmp.ne.s32.totalorder %s45, %s46
      %p57 = scmp.eq.s32.totalorder %s25, 0
      %p58 = por %p56, %p57
      %p59 = scmp.ne.s32.totalorder %s45, %s46
      %p60 = scmp.eq.s32.totalorder %s26, 1
      %p61 = por %p59, %p60
      %p63 = scmp.ne.s32.totalorder %s46, %s62
      %p64 = scmp.eq.s32.totalorder %s26, 0
      %p65 = por %p63, %p64
      %s67 = sadd.s32 %s66, 1
      %p70 = scmp.eq.s32.totalorder %s20, 1
      %p71 = scmp.ne.s32.totalorder %s66, %s68
      %p72 = scmp.eq.s32.totalorder %s20, 0
      %p73 = por %p71, %p72
      %p74 = scmp.ne.s32.totalorder %s66, %s68
      %p75 = scmp.eq.s32.totalorder %s25, 1
      %p76 = por %p74, %p75
      %p77 = scmp.ne.s32.totalorder %s68, %s69
      %p78 = scmp.eq.s32.totalorder %s25, 0
      %p79 = por %p77, %p78
      %p80 = scmp.ne.s32.totalorder %s68, %s69
      %p81 = scmp.eq.s32.totalorder %s26, 1
      %p82 = por %p80, %p81
      %p84 = scmp.ne.s32.totalorder %s69, %s83
      %p85 = scmp.eq.s32.totalorder %s26, 0
      %p86 = por %p84, %p85
      %s87 = ssub.s32 %s27, %s39
      %s88 = ssub.s32 %s28, %s35
      %s89 = sor.u32 %s87, %s88
      %p90 = scmp.eq.s32.totalorder %s89, 0
      %s92 = sadd.s32 %s91, 1
      %s93 = scalar_select %p90, %s91, %s92
      %p96 = pneg %p90
      %p97 = scmp.eq.s32.totalorder %s20, 1
      %p98 = por %p96, %p97
      %p99 = scmp.ne.s32.totalorder %s91, %s94
      %p100 = scmp.eq.s32.totalorder %s20, 0
      %p101 = por %p99, %p100
      %p102 = scmp.ne.s32.totalorder %s91, %s94
      %p103 = scmp.eq.s32.totalorder %s25, 1
      %p104 = por %p102, %p103
      %p105 = scmp.ne.s32.totalorder %s94, %s95
      %p106 = scmp.eq.s32.totalorder %s25, 0
      %p107 = por %p105, %p106
      %p108 = scmp.ne.s32.totalorder %s94, %s95
      %p109 = scmp.eq.s32.totalorder %s26, 1
      %p110 = por %p108, %p109
      %p112 = scmp.ne.s32.totalorder %s95, %s111
      %p113 = scmp.eq.s32.totalorder %s26, 0
      %p114 = por %p112, %p113
      %s115 = ssub.s32 %s27, %s39
      %s116 = ssub.s32 %s28, %s35
      %s117 = sor.u32 %s115, %s116
      %p118 = scmp.eq.s32.totalorder %s117, 0
      %s120 = sadd.s32 %s119, 1
      %s121 = scalar_select %p118, %s119, %s120
      %p124 = pneg %p118
      %p125 = scmp.eq.s32.totalorder %s20, 1
      %p126 = por %p124, %p125
      %p127 = scmp.ne.s32.totalorder %s119, %s122
      %p128 = scmp.eq.s32.totalorder %s20, 0
      %p129 = por %p127, %p128
      %p130 = scmp.ne.s32.totalorder %s119, %s122
      %p131 = scmp.eq.s32.totalorder %s25, 1
      %p132 = por %p130, %p131
      %p133 = scmp.ne.s32.totalorder %s122, %s123
      %p134 = scmp.eq.s32.totalorder %s25, 0
      %p135 = por %p133, %p134
      %p136 = scmp.ne.s32.totalorder %s122, %s123
      %p137 = scmp.eq.s32.totalorder %s26, 1
      %p138 = por %p136, %p137
      %p140 = scmp.ne.s32.totalorder %s123, %s139
      %p141 = scmp.eq.s32.totalorder %s26, 0
      %p142 = por %p140, %p141
      %p143 = scmp.le.s32.totalorder 1, %s20
      %p144 = scmp.lt.s32.totalorder %s20, 3
      %p145 = pnand %p143, %p144
      %p146 = pneg %p145
      // Predicated region
      $region9: #{basic_block_ws_forward.5} parent=5 // pred_check
        _
      $region10: #{basic_block_ws_forward.5} parent=5 // pred_check_branch
        %148 = sbr.rel (%p145) target = $region12
      $region11: #{basic_block_ws_forward.5} parent=5 // pred_region
        %s149 = ssub.s32 %s20, 1
        // Predicated region
        $region13: #{basic_block_ws_forward.5} parent=11 // pred_check
          %p150 = pneg %p79
        $region14: #{basic_block_ws_forward.5} parent=11 // pred_check_branch
          %152 = sbr.rel (%p150) target = $region16
        $region15: #{basic_block_ws_forward.5} parent=11 // pred_region
          %s154 = ssub.s32 10240, 10240
          %155 = vsyncadd [#allocation6], %s154
          %s156 = sshll.u32 [#allocation5], 4
          %s157 = int_to_ptr.vmem [resolvable:$true] %s156
          %162 = dma.hbm_to_vmem [thread:$0]  %s1, 10240, %s157, [#allocation6], 64, 64, 4
        $region16: #{basic_block_ws_forward.5} parent=11 // pred_fallthru
          _
      $region12: #{basic_block_ws_forward.5} parent=5 // pred_fallthru
        _
      %p163 = scmp.lt.s32.totalorder %s20, 2
      // Predicated region
      $region17: #{basic_block_ws_forward.5} parent=5 // pred_check
        %p164 = pneg %p163
      $region18: #{basic_block_ws_forward.5} parent=5 // pred_check_branch
        %166 = sbr.rel (%p164) target = $region20
      $region19: #{basic_block_ws_forward.5} parent=5 // pred_region
        // Predicated region
        $region21: #{basic_block_ws_forward.5} parent=19 // pred_check
          %p167 = pneg %p52
        $region22: #{basic_block_ws_forward.5} parent=19 // pred_check_branch
          %169 = sbr.rel (%p167) target = $region24
        $region23: #{basic_block_ws_forward.5} parent=19 // pred_region
          %s170 = sand.u32 %s42, 1
          %s171 = scalar_lea.sflag [#allocation3], %s170
          %s172 = sand.u32 %s42, 1
          %s173 = smul.addr %s172, 288
          %s174 = scalar_lea.vmem [#allocation2], %s173
          %s176 = ssub.s32 4608, 4608
          %177 = vsyncadd %s171, %s176
          %s178 = smul.addr %s27, 72
          %s179 = smul.addr %s178, 64
          %s180 = scalar_lea.hbm %s0, %s179
          %s181 = sshll.u32 %s174, 4
          %s182 = int_to_ptr.vmem [resolvable:$true] %s181
          %187 = dma.hbm_to_vmem [thread:$0]  %s180, 4608, %s182, %s171, 64, 64, 4
        $region24: #{basic_block_ws_forward.5} parent=19 // pred_fallthru
          _
      $region20: #{basic_block_ws_forward.5} parent=5 // pred_fallthru
        _
      %p188 = scmp.le.s32.totalorder 1, %s20
      %p189 = scmp.lt.s32.totalorder %s20, 3
      %p190 = pnand %p188, %p189
      %p191 = pneg %p190
      // Predicated region
      $region25: #{basic_block_ws_forward.5} parent=5 // pred_check
        _
      $region26: #{basic_block_ws_forward.5} parent=5 // pred_check_branch
        %193 = sbr.rel (%p190) target = $region28
      $region27: #{basic_block_ws_forward.5} parent=5 // pred_region
        %s194 = ssub.s32 %s20, 1
        %s195 = sand.u32 %s45, 1
        %s196 = scalar_lea.sflag [#allocation3], %s195
        %s197 = sand.u32 %s45, 1
        %s198 = smul.addr %s197, 288
        %s199 = scalar_lea.vmem [#allocation2], %s198
        // Predicated region
        $region29: #{basic_block_ws_forward.5} parent=27 // pred_check
          %p200 = pneg %p58
        $region30: #{basic_block_ws_forward.5} parent=27 // pred_check_branch
          %202 = sbr.rel (%p200) target = $region32
        $region31: #{basic_block_ws_forward.5} parent=27 // pred_region
          %203 = dma.done %s196, 4608
        $region32: #{basic_block_ws_forward.5} parent=27 // pred_fallthru
          _
        // Predicated region
        $region33: #{basic_block_ws_forward.5} parent=27 // pred_check
          %p204 = pneg %p79
        $region34: #{basic_block_ws_forward.5} parent=27 // pred_check_branch
          %206 = sbr.rel (%p204) target = $region36
        $region35: #{basic_block_ws_forward.5} parent=27 // pred_region
          %207 = dma.done [#allocation6], 10240
        $region36: #{basic_block_ws_forward.5} parent=27 // pred_fallthru
          _
        %s208 = sand.u32 %s45, 1
        %s209 = scalar_lea.sflag [#allocation3], %s208
        %s210 = sand.u32 %s45, 1
        %s211 = smul.addr %s210, 288
        %s212 = scalar_lea.vmem [#allocation2], %s211
        %p213 = pneg %p58
        %p214 = pneg %p55
        %p215 = pneg %p79
        %p216 = pneg %p76
        %p217 = pneg %p107
        %p218 = pneg %p104
        %s219 = sand.u32 %s94, 1
        %s220 = scalar_lea.sflag [#allocation4], %s219
        %s221 = sand.u32 %s94, 1
        %s222 = smul.addr %s221, 32
        %s223 = scalar_lea.vmem [#allocation7], %s222
        %p224 = pneg %p135
        %p225 = pneg %p132
        %s226 = sand.u32 %s122, 1
        %s227 = scalar_lea.sflag [#allocation9], %s226
        %s228 = sand.u32 %s122, 1
        %s229 = smul.addr %s228, 2
        %s230 = scalar_lea.vmem [#allocation8], %s229
        %s231 = smul.u32 8, %s30
        %s233 = smul.u32 %s30, 8
        %s234 = smul.u32 %s233, 2
        %s235 = smul.addr %s234, 4
        %s236 = scalar_lea.vmem %s199, %s235 [#allocation2]
        %v237 = vld [vmem:[%s236] sm:$0xf]
        %v238 = vld [vmem:[%s236 + $0x8] sm:$0xf]
        %v239 = vld [vmem:[%s236 + $0x10] sm:$0xf]
        %v240 = vld [vmem:[%s236 + $0x18] sm:$0xf]
        %v241 = vld [vmem:[%s236 + $0x20] sm:$0xf]
        %v242 = vld [vmem:[%s236 + $0x28] sm:$0xf]
        %v243 = vld [vmem:[%s236 + $0x30] sm:$0xf]
        %v244 = vld [vmem:[%s236 + $0x38] sm:$0xf]
        %s245 = sadd.s32 %s233, 9
        %s246 = smul.u32 %s245, 2
        %s247 = smul.addr %s246, 4
        %s248 = scalar_lea.vmem %s199, %s247 [#allocation2]
        %v249 = vld [vmem:[%s248] sm:$0xf]
        %v250 = vld [vmem:[%s248 + $0x8] sm:$0xf]
        %v251 = vld [vmem:[%s248 + $0x10] sm:$0xf]
        %v252 = vld [vmem:[%s248 + $0x18] sm:$0xf]
        %v253 = vld [vmem:[%s248 + $0x20] sm:$0xf]
        %v254 = vld [vmem:[%s248 + $0x28] sm:$0xf]
        %v255 = vld [vmem:[%s248 + $0x30] sm:$0xf]
        %v256 = vld [vmem:[%s248 + $0x38] sm:$0xf]
        %v265 = vunpack.c.l.b16 %v237
        %v266 = vunpack.c.l.b16 %v238
        %v267 = vunpack.c.l.b16 %v239
        %v268 = vunpack.c.l.b16 %v240
        %v269 = vunpack.c.l.b16 %v241
        %v270 = vunpack.c.l.b16 %v242
        %v271 = vunpack.c.l.b16 %v243
        %v272 = vunpack.c.l.b16 %v244
        %v273 = vpack.c.b16 %v266, %v265
        %v274 = vpack.c.b16 %v268, %v267
        %v275 = vpack.c.b16 %v270, %v269
        %v276 = vpack.c.b16 %v272, %v271
        %v289 = vunpack.c.l.b16 %v249
        %v290 = vunpack.c.l.b16 %v250
        %v291 = vunpack.c.l.b16 %v251
        %v292 = vunpack.c.l.b16 %v252
        %v293 = vunpack.c.l.b16 %v253
        %v294 = vunpack.c.l.b16 %v254
        %v295 = vunpack.c.l.b16 %v255
        %v296 = vunpack.c.l.b16 %v256
        %v297 = vpack.c.b16 %v290, %v289
        %v298 = vpack.c.b16 %v292, %v291
        %v299 = vpack.c.b16 %v294, %v293
        %v300 = vpack.c.b16 %v296, %v295
        %v305 = vld [vmem:[#allocation5] sm:$0xf]
        %v306 = vld [vmem:[#allocation5 + $0x4] sm:$0xf]
        %v307 = vld [vmem:[#allocation5 + $0x8] sm:$0xf]
        %v308 = vld [vmem:[#allocation5 + $0xc] sm:$0xf]
        %v309 = vld [vmem:[#allocation5 + $0x10] sm:$0xf]
        %v310 = vld [vmem:[#allocation5 + $0x14] sm:$0xf]
        %v311 = vld [vmem:[#allocation5 + $0x18] sm:$0xf]
        %v312 = vld [vmem:[#allocation5 + $0x1c] sm:$0xf]
        %v313 = vld [vmem:[#allocation5 + $0x20] sm:$0xf]
        %v314 = vld [vmem:[#allocation5 + $0x24] sm:$0xf]
        %v315 = vld [vmem:[#allocation5 + $0x28] sm:$0xf]
        %v316 = vld [vmem:[#allocation5 + $0x2c] sm:$0xf]
        %v317 = vld [vmem:[#allocation5 + $0x30] sm:$0xf]
        %v318 = vld [vmem:[#allocation5 + $0x34] sm:$0xf]
        %v319 = vld [vmem:[#allocation5 + $0x38] sm:$0xf]
        %v320 = vld [vmem:[#allocation5 + $0x3c] sm:$0xf]
        %v321 = vld [vmem:[#allocation5 + $0x40] sm:$0xf]
        %v322 = vld [vmem:[#allocation5 + $0x44] sm:$0xf]
        %v323 = vld [vmem:[#allocation5 + $0x48] sm:$0xf]
        %v324 = vld [vmem:[#allocation5 + $0x4c] sm:$0xf]
        %v325 = vld [vmem:[#allocation5 + $0x50] sm:$0xf]
        %v326 = vld [vmem:[#allocation5 + $0x54] sm:$0xf]
        %v327 = vld [vmem:[#allocation5 + $0x58] sm:$0xf]
        %v328 = vld [vmem:[#allocation5 + $0x5c] sm:$0xf]
        %v329 = vld [vmem:[#allocation5 + $0x60] sm:$0xf]
        %v330 = vld [vmem:[#allocation5 + $0x64] sm:$0xf]
        %v331 = vld [vmem:[#allocation5 + $0x68] sm:$0xf]
        %v332 = vld [vmem:[#allocation5 + $0x6c] sm:$0xf]
        %v333 = vld [vmem:[#allocation5 + $0x70] sm:$0xf]
        %v334 = vld [vmem:[#allocation5 + $0x74] sm:$0xf]
        %v335 = vld [vmem:[#allocation5 + $0x78] sm:$0xf]
        %v336 = vld [vmem:[#allocation5 + $0x7c] sm:$0xf]
        %v337 = vld [vmem:[%s236 + $0x4] sm:$0x1]
        %v338 = vld [vmem:[%s236 + $0xc] sm:$0x1]
        %v339 = vld [vmem:[%s236 + $0x14] sm:$0x1]
        %v340 = vld [vmem:[%s236 + $0x1c] sm:$0x1]
        %v341 = vld [vmem:[%s236 + $0x24] sm:$0x1]
        %v342 = vld [vmem:[%s236 + $0x2c] sm:$0x1]
        %v343 = vld [vmem:[%s236 + $0x34] sm:$0x1]
        %v344 = vld [vmem:[%s236 + $0x3c] sm:$0x1]
        %vm345 = vsmask.f32 3328
        %vm346 = vsmask.f32 7440
        %vm347 = vmor %vm345, %vm346
        %v349 = vshrl.u32 %v237, 16
        %v351 = vrot.slane %v349, 4
        %v352 = vshll.u32 %v237, 16
        %v354 = vrot.slane %v352, 5
        %v355 = vor.u32 %v351, %v354
        %v356 = vrot.slane %v355, 4
        %v358 = vshll.u32 %v337, 16
        %v360 = vrot.slane %v358, 5
        %v361 = vsel %vm347, %v356, %v360
        %v363 = vshrl.u32 %v238, 16
        %v365 = vrot.slane %v363, 4
        %v366 = vshll.u32 %v238, 16
        %v368 = vrot.slane %v366, 5
        %v369 = vor.u32 %v365, %v368
        %v370 = vrot.slane %v369, 4
        %v372 = vshll.u32 %v338, 16
        %v374 = vrot.slane %v372, 5
        %v375 = vsel %vm347, %v370, %v374
        %v377 = vshrl.u32 %v239, 16
        %v379 = vrot.slane %v377, 4
        %v380 = vshll.u32 %v239, 16
        %v382 = vrot.slane %v380, 5
        %v383 = vor.u32 %v379, %v382
        %v384 = vrot.slane %v383, 4
        %v386 = vshll.u32 %v339, 16
        %v388 = vrot.slane %v386, 5
        %v389 = vsel %vm347, %v384, %v388
        %v391 = vshrl.u32 %v240, 16
        %v393 = vrot.slane %v391, 4
        %v394 = vshll.u32 %v240, 16
        %v396 = vrot.slane %v394, 5
        %v397 = vor.u32 %v393, %v396
        %v398 = vrot.slane %v397, 4
        %v400 = vshll.u32 %v340, 16
        %v402 = vrot.slane %v400, 5
        %v403 = vsel %vm347, %v398, %v402
        %v405 = vshrl.u32 %v241, 16
        %v407 = vrot.slane %v405, 4
        %v408 = vshll.u32 %v241, 16
        %v410 = vrot.slane %v408, 5
        %v411 = vor.u32 %v407, %v410
        %v412 = vrot.slane %v411, 4
        %v414 = vshll.u32 %v341, 16
        %v416 = vrot.slane %v414, 5
        %v417 = vsel %vm347, %v412, %v416
        %v419 = vshrl.u32 %v242, 16
        %v421 = vrot.slane %v419, 4
        %v422 = vshll.u32 %v242, 16
        %v424 = vrot.slane %v422, 5
        %v425 = vor.u32 %v421, %v424
        %v426 = vrot.slane %v425, 4
        %v428 = vshll.u32 %v342, 16
        %v430 = vrot.slane %v428, 5
        %v431 = vsel %vm347, %v426, %v430
        %v433 = vshrl.u32 %v243, 16
        %v435 = vrot.slane %v433, 4
        %v436 = vshll.u32 %v243, 16
        %v438 = vrot.slane %v436, 5
        %v439 = vor.u32 %v435, %v438
        %v440 = vrot.slane %v439, 4
        %v442 = vshll.u32 %v343, 16
        %v444 = vrot.slane %v442, 5
        %v445 = vsel %vm347, %v440, %v444
        %v447 = vshrl.u32 %v244, 16
        %v449 = vrot.slane %v447, 4
        %v450 = vshll.u32 %v244, 16
        %v452 = vrot.slane %v450, 5
        %v453 = vor.u32 %v449, %v452
        %v454 = vrot.slane %v453, 4
        %v456 = vshll.u32 %v344, 16
        %v458 = vrot.slane %v456, 5
        %v459 = vsel %vm347, %v454, %v458
        %s460 = sadd.s32 %s233, 18
        %s461 = smul.u32 %s460, 2
        %s462 = smul.addr %s461, 4
        %s463 = scalar_lea.vmem %s199, %s462 [#allocation2]
        %v464 = vld [vmem:[%s463] sm:$0xf]
        %v465 = vld [vmem:[%s463 + $0x8] sm:$0xf]
        %v466 = vld [vmem:[%s463 + $0x10] sm:$0xf]
        %v467 = vld [vmem:[%s463 + $0x18] sm:$0xf]
        %v468 = vld [vmem:[%s463 + $0x20] sm:$0xf]
        %v469 = vld [vmem:[%s463 + $0x28] sm:$0xf]
        %v470 = vld [vmem:[%s463 + $0x30] sm:$0xf]
        %v471 = vld [vmem:[%s463 + $0x38] sm:$0xf]
        %v472 = vunpack.c.l.b16 %v361
        %v473 = vunpack.c.l.b16 %v375
        %v474 = vunpack.c.l.b16 %v389
        %v475 = vunpack.c.l.b16 %v403
        %v476 = vunpack.c.l.b16 %v417
        %v477 = vunpack.c.l.b16 %v431
        %v478 = vunpack.c.l.b16 %v445
        %v479 = vunpack.c.l.b16 %v459
        %v480 = vpack.c.b16 %v473, %v472
        %v481 = vpack.c.b16 %v475, %v474
        %v482 = vpack.c.b16 %v477, %v476
        %v483 = vpack.c.b16 %v479, %v478
        %v496 = vunpack.c.l.b16 %v464
        %v497 = vunpack.c.l.b16 %v465
        %v498 = vunpack.c.l.b16 %v466
        %v499 = vunpack.c.l.b16 %v467
        %v500 = vunpack.c.l.b16 %v468
        %v501 = vunpack.c.l.b16 %v469
        %v502 = vunpack.c.l.b16 %v470
        %v503 = vunpack.c.l.b16 %v471
        %v504 = vpack.c.b16 %v497, %v496
        %v505 = vpack.c.b16 %v499, %v498
        %v506 = vpack.c.b16 %v501, %v500
        %v507 = vpack.c.b16 %v503, %v502
        %s512 = scalar_lea.vmem [#allocation5], 128
        %v513 = vld [vmem:[%s512] sm:$0xf]
        %v514 = vld [vmem:[%s512 + $0x4] sm:$0xf]
        %v515 = vld [vmem:[%s512 + $0x8] sm:$0xf]
        %v516 = vld [vmem:[%s512 + $0xc] sm:$0xf]
        %v517 = vld [vmem:[%s512 + $0x10] sm:$0xf]
        %v518 = vld [vmem:[%s512 + $0x14] sm:$0xf]
        %v519 = vld [vmem:[%s512 + $0x18] sm:$0xf]
        %v520 = vld [vmem:[%s512 + $0x1c] sm:$0xf]
        %v521 = vld [vmem:[%s512 + $0x20] sm:$0xf]
        %v522 = vld [vmem:[%s512 + $0x24] sm:$0xf]
        %v523 = vld [vmem:[%s512 + $0x28] sm:$0xf]
        %v524 = vld [vmem:[%s512 + $0x2c] sm:$0xf]
        %v525 = vld [vmem:[%s512 + $0x30] sm:$0xf]
        %v526 = vld [vmem:[%s512 + $0x34] sm:$0xf]
        %v527 = vld [vmem:[%s512 + $0x38] sm:$0xf]
        %v528 = vld [vmem:[%s512 + $0x3c] sm:$0xf]
        %v529 = vld [vmem:[%s512 + $0x40] sm:$0xf]
        %v530 = vld [vmem:[%s512 + $0x44] sm:$0xf]
        %v531 = vld [vmem:[%s512 + $0x48] sm:$0xf]
        %v532 = vld [vmem:[%s512 + $0x4c] sm:$0xf]
        %v533 = vld [vmem:[%s512 + $0x50] sm:$0xf]
        %v534 = vld [vmem:[%s512 + $0x54] sm:$0xf]
        %v535 = vld [vmem:[%s512 + $0x58] sm:$0xf]
        %v536 = vld [vmem:[%s512 + $0x5c] sm:$0xf]
        %v537 = vld [vmem:[%s512 + $0x60] sm:$0xf]
        %v538 = vld [vmem:[%s512 + $0x64] sm:$0xf]
        %v539 = vld [vmem:[%s512 + $0x68] sm:$0xf]
        %v540 = vld [vmem:[%s512 + $0x6c] sm:$0xf]
        %v541 = vld [vmem:[%s512 + $0x70] sm:$0xf]
        %v542 = vld [vmem:[%s512 + $0x74] sm:$0xf]
        %v543 = vld [vmem:[%s512 + $0x78] sm:$0xf]
        %v544 = vld [vmem:[%s512 + $0x7c] sm:$0xf]
        %v577 = vunpack.c.l.b16 %v513
        %v578 = vunpack.c.l.b16 %v514
        %v579 = vunpack.c.l.b16 %v515
        %v580 = vunpack.c.l.b16 %v516
        %v581 = vunpack.c.l.b16 %v517
        %v582 = vunpack.c.l.b16 %v518
        %v583 = vunpack.c.l.b16 %v519
        %v584 = vunpack.c.l.b16 %v520
        %v585 = vunpack.c.l.b16 %v521
        %v586 = vunpack.c.l.b16 %v522
        %v587 = vunpack.c.l.b16 %v523
        %v588 = vunpack.c.l.b16 %v524
        %v589 = vunpack.c.l.b16 %v525
        %v590 = vunpack.c.l.b16 %v526
        %v591 = vunpack.c.l.b16 %v527
        %v592 = vunpack.c.l.b16 %v528
        %v593 = vunpack.c.l.b16 %v529
        %v594 = vunpack.c.l.b16 %v530
        %v595 = vunpack.c.l.b16 %v531
        %v596 = vunpack.c.l.b16 %v532
        %v597 = vunpack.c.l.b16 %v533
        %v598 = vunpack.c.l.b16 %v534
        %v599 = vunpack.c.l.b16 %v535
        %v600 = vunpack.c.l.b16 %v536
        %v601 = vunpack.c.l.b16 %v537
        %v602 = vunpack.c.l.b16 %v538
        %v603 = vunpack.c.l.b16 %v539
        %v604 = vunpack.c.l.b16 %v540
        %v605 = vunpack.c.l.b16 %v541
        %v606 = vunpack.c.l.b16 %v542
        %v607 = vunpack.c.l.b16 %v543
        %v608 = vunpack.c.l.b16 %v544
        %v609 = vpack.c.b16 %v578, %v577
        %v610 = vpack.c.b16 %v580, %v579
        %v611 = vpack.c.b16 %v582, %v581
        %v612 = vpack.c.b16 %v584, %v583
        %v613 = vpack.c.b16 %v586, %v585
        %v614 = vpack.c.b16 %v588, %v587
        %v615 = vpack.c.b16 %v590, %v589
        %v616 = vpack.c.b16 %v592, %v591
        %v617 = vpack.c.b16 %v594, %v593
        %v618 = vpack.c.b16 %v596, %v595
        %v619 = vpack.c.b16 %v598, %v597
        %v620 = vpack.c.b16 %v600, %v599
        %v621 = vpack.c.b16 %v602, %v601
        %v622 = vpack.c.b16 %v604, %v603
        %v623 = vpack.c.b16 %v606, %v605
        %v624 = vpack.c.b16 %v608, %v607
        %641 = vmatprep.subr.bf16.mxu0 0
        %642 = vmatpush1.bf16.msra.mxu0 %v609
        %643 = vmatprep.subr.bf16.mxu0 0
        %644 = vmatpush1.bf16.msra.mxu0 %v610
        %645 = vmatprep.subr.bf16.mxu0 0
        %646 = vmatpush1.bf16.msra.mxu0 %v611
        %647 = vmatprep.subr.bf16.mxu0 0
        %648 = vmatpush1.bf16.msra.mxu0 %v612
        %649 = vmatprep.subr.bf16.mxu0 0
        %650 = vmatpush1.bf16.msra.mxu0 %v613
        %651 = vmatprep.subr.bf16.mxu0 0
        %652 = vmatpush1.bf16.msra.mxu0 %v614
        %653 = vmatprep.subr.bf16.mxu0 0
        %654 = vmatpush1.bf16.msra.mxu0 %v615
        %655 = vmatprep.subr.bf16.mxu0 0
        %656 = vmatpush1.bf16.msra.mxu0 %v616
        %657 = vmatprep.subr.bf16.mxu0 0
        %658 = vmatpush1.bf16.msra.mxu0 %v617
        %659 = vmatprep.subr.bf16.mxu0 0
        %660 = vmatpush1.bf16.msra.mxu0 %v618
        %661 = vmatprep.subr.bf16.mxu0 0
        %662 = vmatpush1.bf16.msra.mxu0 %v619
        %663 = vmatprep.subr.bf16.mxu0 0
        %664 = vmatpush1.bf16.msra.mxu0 %v620
        %665 = vmatprep.subr.bf16.mxu0 0
        %666 = vmatpush1.bf16.msra.mxu0 %v621
        %667 = vmatprep.subr.bf16.mxu0 0
        %668 = vmatpush1.bf16.msra.mxu0 %v622
        %669 = vmatprep.subr.bf16.mxu0 0
        %670 = vmatpush1.bf16.msra.mxu0 %v623
        %671 = vmatprep.subr.bf16.mxu0 0
        %672 = vmatpush1.bf16.msra.mxu0 %v624
        %673 = vmatprep.mubr.bf16.mxu0 %v504
        %674 = vmatmul.mubr.bf16.gmra.mrb[0].mxu0 %v480
        %v675 = vpop.f32.mrb[0].mxu0
        %v676 = vadd.f32 0.0, %v675
        %v677 = vpop.f32.mrb[0].mxu0
        %v678 = vpop.f32.mrb[0].mxu0
        %v679 = vadd.f32 0.0, %v678
        %v680 = vpop.f32.mrb[0].mxu0
        %681 = vmatprep.mubr.bf16.mxu0 %v505
        %682 = vmatmul.mubr.bf16.gmra.mrb[0].mxu0 %v481
        %v683 = vpop.f32.mrb[0].mxu0
        %v684 = vadd.f32 0.0, %v683
        %v685 = vpop.f32.mrb[0].mxu0
        %v686 = vpop.f32.mrb[0].mxu0
        %v687 = vadd.f32 0.0, %v686
        %v688 = vpop.f32.mrb[0].mxu0
        %689 = vmatprep.mubr.bf16.mxu0 %v506
        %690 = vmatmul.mubr.bf16.gmra.mrb[0].mxu0 %v482
        %v691 = vpop.f32.mrb[0].mxu0
        %v692 = vadd.f32 0.0, %v691
        %v693 = vpop.f32.mrb[0].mxu0
        %v694 = vpop.f32.mrb[0].mxu0
        %v695 = vadd.f32 0.0, %v694
        %v696 = vpop.f32.mrb[0].mxu0
        %697 = vmatprep.mubr.bf16.mxu0 %v507
        %698 = vmatmul.mubr.bf16.gmra.mrb[0].mxu0 %v483
        %v699 = vpop.f32.mrb[0].mxu0
        %v700 = vadd.f32 0.0, %v699
        %v701 = vpop.f32.mrb[0].mxu0
        %v702 = vpop.f32.mrb[0].mxu0
        %v703 = vadd.f32 0.0, %v702
        %v704 = vpop.f32.mrb[0].mxu0
        %705 = vdwg.mxu0
        %v738 = vunpack.c.l.b16 %v305
        %v739 = vunpack.c.l.b16 %v306
        %v740 = vunpack.c.l.b16 %v307
        %v741 = vunpack.c.l.b16 %v308
        %v742 = vunpack.c.l.b16 %v309
        %v743 = vunpack.c.l.b16 %v310
        %v744 = vunpack.c.l.b16 %v311
        %v745 = vunpack.c.l.b16 %v312
        %v746 = vunpack.c.l.b16 %v313
        %v747 = vunpack.c.l.b16 %v314
        %v748 = vunpack.c.l.b16 %v315
        %v749 = vunpack.c.l.b16 %v316
        %v750 = vunpack.c.l.b16 %v317
        %v751 = vunpack.c.l.b16 %v318
        %v752 = vunpack.c.l.b16 %v319
        %v753 = vunpack.c.l.b16 %v320
        %v754 = vunpack.c.l.b16 %v321
        %v755 = vunpack.c.l.b16 %v322
        %v756 = vunpack.c.l.b16 %v323
        %v757 = vunpack.c.l.b16 %v324
        %v758 = vunpack.c.l.b16 %v325
        %v759 = vunpack.c.l.b16 %v326
        %v760 = vunpack.c.l.b16 %v327
        %v761 = vunpack.c.l.b16 %v328
        %v762 = vunpack.c.l.b16 %v329
        %v763 = vunpack.c.l.b16 %v330
        %v764 = vunpack.c.l.b16 %v331
        %v765 = vunpack.c.l.b16 %v332
        %v766 = vunpack.c.l.b16 %v333
        %v767 = vunpack.c.l.b16 %v334
        %v768 = vunpack.c.l.b16 %v335
        %v769 = vunpack.c.l.b16 %v336
        %v770 = vpack.c.b16 %v739, %v738
        %v771 = vpack.c.b16 %v741, %v740
        %v772 = vpack.c.b16 %v743, %v742
        %v773 = vpack.c.b16 %v745, %v744
        %v774 = vpack.c.b16 %v747, %v746
        %v775 = vpack.c.b16 %v749, %v748
        %v776 = vpack.c.b16 %v751, %v750
        %v777 = vpack.c.b16 %v753, %v752
        %v778 = vpack.c.b16 %v755, %v754
        %v779 = vpack.c.b16 %v757, %v756
        %v780 = vpack.c.b16 %v759, %v758
        %v781 = vpack.c.b16 %v761, %v760
        %v782 = vpack.c.b16 %v763, %v762
        %v783 = vpack.c.b16 %v765, %v764
        %v784 = vpack.c.b16 %v767, %v766
        %v785 = vpack.c.b16 %v769, %v768
        %802 = vmatprep.subr.bf16.mxu0 0
        %803 = vmatpush1.bf16.msra.mxu0 %v770
        %804 = vmatprep.subr.bf16.mxu0 0
        %805 = vmatpush1.bf16.msra.mxu0 %v771
        %806 = vmatprep.subr.bf16.mxu0 0
        %807 = vmatpush1.bf16.msra.mxu0 %v772
        %808 = vmatprep.subr.bf16.mxu0 0
        %809 = vmatpush1.bf16.msra.mxu0 %v773
        %810 = vmatprep.subr.bf16.mxu0 0
        %811 = vmatpush1.bf16.msra.mxu0 %v774
        %812 = vmatprep.subr.bf16.mxu0 0
        %813 = vmatpush1.bf16.msra.mxu0 %v775
        %814 = vmatprep.subr.bf16.mxu0 0
        %815 = vmatpush1.bf16.msra.mxu0 %v776
        %816 = vmatprep.subr.bf16.mxu0 0
        %817 = vmatpush1.bf16.msra.mxu0 %v777
        %818 = vmatprep.subr.bf16.mxu0 0
        %819 = vmatpush1.bf16.msra.mxu0 %v778
        %820 = vmatprep.subr.bf16.mxu0 0
        %821 = vmatpush1.bf16.msra.mxu0 %v779
        %822 = vmatprep.subr.bf16.mxu0 0
        %823 = vmatpush1.bf16.msra.mxu0 %v780
        %824 = vmatprep.subr.bf16.mxu0 0
        %825 = vmatpush1.bf16.msra.mxu0 %v781
        %826 = vmatprep.subr.bf16.mxu0 0
        %827 = vmatpush1.bf16.msra.mxu0 %v782
        %828 = vmatprep.subr.bf16.mxu0 0
        %829 = vmatpush1.bf16.msra.mxu0 %v783
        %830 = vmatprep.subr.bf16.mxu0 0
        %831 = vmatpush1.bf16.msra.mxu0 %v784
        %832 = vmatprep.subr.bf16.mxu0 0
        %833 = vmatpush1.bf16.msra.mxu0 %v785
        %834 = vmatprep.mubr.bf16.mxu0 %v297
        %835 = vmatmul.mubr.bf16.gmra.mrb[0].mxu0 %v273
        %v836 = vpop.f32.mrb[0].mxu0
        %v837 = vadd.f32 %v676, %v836
        %v838 = vpop.f32.mrb[0].mxu0
        %v839 = vpop.f32.mrb[0].mxu0
        %v840 = vadd.f32 %v679, %v839
        %v841 = vpop.f32.mrb[0].mxu0
        %842 = vmatprep.mubr.bf16.mxu0 %v298
        %843 = vmatmul.mubr.bf16.gmra.mrb[0].mxu0 %v274
        %v844 = vpop.f32.mrb[0].mxu0
        %v845 = vadd.f32 %v684, %v844
        %v846 = vpop.f32.mrb[0].mxu0
        %v847 = vpop.f32.mrb[0].mxu0
        %v848 = vadd.f32 %v687, %v847
        %v849 = vpop.f32.mrb[0].mxu0
        %850 = vmatprep.mubr.bf16.mxu0 %v299
        %851 = vmatmul.mubr.bf16.gmra.mrb[0].mxu0 %v275
        %v852 = vpop.f32.mrb[0].mxu0
        %v853 = vadd.f32 %v692, %v852
        %v854 = vpop.f32.mrb[0].mxu0
        %v855 = vpop.f32.mrb[0].mxu0
        %v856 = vadd.f32 %v695, %v855
        %v857 = vpop.f32.mrb[0].mxu0
        %858 = vmatprep.mubr.bf16.mxu0 %v300
        %859 = vmatmul.mubr.bf16.gmra.mrb[0].mxu0 %v276
        %v860 = vpop.f32.mrb[0].mxu0
        %v861 = vadd.f32 %v700, %v860
        %v862 = vpop.f32.mrb[0].mxu0
        %v863 = vpop.f32.mrb[0].mxu0
        %v864 = vadd.f32 %v703, %v863
        %v865 = vpop.f32.mrb[0].mxu0
        %866 = vdwg.mxu0
        %s867 = sadd.s32 %s233, 27
        %s868 = smul.u32 %s867, 2
        %s869 = smul.addr %s868, 4
        %s870 = scalar_lea.vmem %s199, %s869 [#allocation2]
        %v871 = vld [vmem:[%s870] sm:$0xf]
        %v872 = vld [vmem:[%s870 + $0x8] sm:$0xf]
        %v873 = vld [vmem:[%s870 + $0x10] sm:$0xf]
        %v874 = vld [vmem:[%s870 + $0x18] sm:$0xf]
        %v875 = vld [vmem:[%s870 + $0x20] sm:$0xf]
        %v876 = vld [vmem:[%s870 + $0x28] sm:$0xf]
        %v877 = vld [vmem:[%s870 + $0x30] sm:$0xf]
        %v878 = vld [vmem:[%s870 + $0x38] sm:$0xf]
        %v879 = vld [vmem:[%s463] sm:$0xf]
        %v880 = vld [vmem:[%s463 + $0x4] sm:$0x1]
        %v881 = vld [vmem:[%s463 + $0x8] sm:$0xf]
        %v882 = vld [vmem:[%s463 + $0xc] sm:$0x1]
        %v883 = vld [vmem:[%s463 + $0x10] sm:$0xf]
        %v884 = vld [vmem:[%s463 + $0x14] sm:$0x1]
        %v885 = vld [vmem:[%s463 + $0x18] sm:$0xf]
        %v886 = vld [vmem:[%s463 + $0x1c] sm:$0x1]
        %v887 = vld [vmem:[%s463 + $0x20] sm:$0xf]
        %v888 = vld [vmem:[%s463 + $0x24] sm:$0x1]
        %v889 = vld [vmem:[%s463 + $0x28] sm:$0xf]
        %v890 = vld [vmem:[%s463 + $0x2c] sm:$0x1]
        %v891 = vld [vmem:[%s463 + $0x30] sm:$0xf]
        %v892 = vld [vmem:[%s463 + $0x34] sm:$0x1]
        %v893 = vld [vmem:[%s463 + $0x38] sm:$0xf]
        %v894 = vld [vmem:[%s463 + $0x3c] sm:$0x1]
        %v896 = vshrl.u32 %v879, 16
        %v898 = vrot.slane %v896, 4
        %v899 = vshll.u32 %v879, 16
        %v901 = vrot.slane %v899, 5
        %v902 = vor.u32 %v898, %v901
        %v903 = vrot.slane %v902, 4
        %v905 = vshll.u32 %v880, 16
        %v907 = vrot.slane %v905, 5
        %v908 = vsel %vm347, %v903, %v907
        %v910 = vshrl.u32 %v881, 16
        %v912 = vrot.slane %v910, 4
        %v913 = vshll.u32 %v881, 16
        %v915 = vrot.slane %v913, 5
        %v916 = vor.u32 %v912, %v915
        %v917 = vrot.slane %v916, 4
        %v919 = vshll.u32 %v882, 16
        %v921 = vrot.slane %v919, 5
        %v922 = vsel %vm347, %v917, %v921
        %v924 = vshrl.u32 %v883, 16
        %v926 = vrot.slane %v924, 4
        %v927 = vshll.u32 %v883, 16
        %v929 = vrot.slane %v927, 5
        %v930 = vor.u32 %v926, %v929
        %v931 = vrot.slane %v930, 4
        %v933 = vshll.u32 %v884, 16
        %v935 = vrot.slane %v933, 5
        %v936 = vsel %vm347, %v931, %v935
        %v938 = vshrl.u32 %v885, 16
        %v940 = vrot.slane %v938, 4
        %v941 = vshll.u32 %v885, 16
        %v943 = vrot.slane %v941, 5
        %v944 = vor.u32 %v940, %v943
        %v945 = vrot.slane %v944, 4
        %v947 = vshll.u32 %v886, 16
        %v949 = vrot.slane %v947, 5
        %v950 = vsel %vm347, %v945, %v949
        %v952 = vshrl.u32 %v887, 16
        %v954 = vrot.slane %v952, 4
        %v955 = vshll.u32 %v887, 16
        %v957 = vrot.slane %v955, 5
        %v958 = vor.u32 %v954, %v957
        %v959 = vrot.slane %v958, 4
        %v961 = vshll.u32 %v888, 16
        %v963 = vrot.slane %v961, 5
        %v964 = vsel %vm347, %v959, %v963
        %v966 = vshrl.u32 %v889, 16
        %v968 = vrot.slane %v966, 4
        %v969 = vshll.u32 %v889, 16
        %v971 = vrot.slane %v969, 5
        %v972 = vor.u32 %v968, %v971
        %v973 = vrot.slane %v972, 4
        %v975 = vshll.u32 %v890, 16
        %v977 = vrot.slane %v975, 5
        %v978 = vsel %vm347, %v973, %v977
        %v980 = vshrl.u32 %v891, 16
        %v982 = vrot.slane %v980, 4
        %v983 = vshll.u32 %v891, 16
        %v985 = vrot.slane %v983, 5
        %v986 = vor.u32 %v982, %v985
        %v987 = vrot.slane %v986, 4
        %v989 = vshll.u32 %v892, 16
        %v991 = vrot.slane %v989, 5
        %v992 = vsel %vm347, %v987, %v991
        %v994 = vshrl.u32 %v893, 16
        %v996 = vrot.slane %v994, 4
        %v997 = vshll.u32 %v893, 16
        %v999 = vrot.slane %v997, 5
        %v1000 = vor.u32 %v996, %v999
        %v1001 = vrot.slane %v1000, 4
        %v1003 = vshll.u32 %v894, 16
        %v1005 = vrot.slane %v1003, 5
        %v1006 = vsel %vm347, %v1001, %v1005
        %v1015 = vunpack.c.l.b16 %v871
        %v1016 = vunpack.c.l.b16 %v872
        %v1017 = vunpack.c.l.b16 %v873
        %v1018 = vunpack.c.l.b16 %v874
        %v1019 = vunpack.c.l.b16 %v875
        %v1020 = vunpack.c.l.b16 %v876
        %v1021 = vunpack.c.l.b16 %v877
        %v1022 = vunpack.c.l.b16 %v878
        %v1023 = vpack.c.b16 %v1016, %v1015
        %v1024 = vpack.c.b16 %v1018, %v1017
        %v1025 = vpack.c.b16 %v1020, %v1019
        %v1026 = vpack.c.b16 %v1022, %v1021
        %v1031 = vunpack.c.l.b16 %v908
        %v1032 = vunpack.c.l.b16 %v922
        %v1033 = vunpack.c.l.b16 %v936
        %v1034 = vunpack.c.l.b16 %v950
        %v1035 = vunpack.c.l.b16 %v964
        %v1036 = vunpack.c.l.b16 %v978
        %v1037 = vunpack.c.l.b16 %v992
        %v1038 = vunpack.c.l.b16 %v1006
        %v1039 = vpack.c.b16 %v1032, %v1031
        %v1040 = vpack.c.b16 %v1034, %v1033
        %v1041 = vpack.c.b16 %v1036, %v1035
        %v1042 = vpack.c.b16 %v1038, %v1037
        %s1047 = scalar_lea.vmem [#allocation5], 256
        %v1048 = vld [vmem:[%s1047] sm:$0xf]
        %v1049 = vld [vmem:[%s1047 + $0x4] sm:$0xf]
        %v1050 = vld [vmem:[%s1047 + $0x8] sm:$0xf]
        %v1051 = vld [vmem:[%s1047 + $0xc] sm:$0xf]
        %v1052 = vld [vmem:[%s1047 + $0x10] sm:$0xf]
        %v1053 = vld [vmem:[%s1047 + $0x14] sm:$0xf]
        %v1054 = vld [vmem:[%s1047 + $0x18] sm:$0xf]
        %v1055 = vld [vmem:[%s1047 + $0x1c] sm:$0xf]
        %v1056 = vld [vmem:[%s1047 + $0x20] sm:$0xf]
        %v1057 = vld [vmem:[%s1047 + $0x24] sm:$0xf]
        %v1058 = vld [vmem:[%s1047 + $0x28] sm:$0xf]
        %v1059 = vld [vmem:[%s1047 + $0x2c] sm:$0xf]
        %v1060 = vld [vmem:[%s1047 + $0x30] sm:$0xf]
        %v1061 = vld [vmem:[%s1047 + $0x34] sm:$0xf]
        %v1062 = vld [vmem:[%s1047 + $0x38] sm:$0xf]
        %v1063 = vld [vmem:[%s1047 + $0x3c] sm:$0xf]
        %v1064 = vld [vmem:[%s1047 + $0x40] sm:$0xf]
        %v1065 = vld [vmem:[%s1047 + $0x44] sm:$0xf]
        %v1066 = vld [vmem:[%s1047 + $0x48] sm:$0xf]
        %v1067 = vld [vmem:[%s1047 + $0x4c] sm:$0xf]
        %v1068 = vld [vmem:[%s1047 + $0x50] sm:$0xf]
        %v1069 = vld [vmem:[%s1047 + $0x54] sm:$0xf]
        %v1070 = vld [vmem:[%s1047 + $0x58] sm:$0xf]
        %v1071 = vld [vmem:[%s1047 + $0x5c] sm:$0xf]
        %v1072 = vld [vmem:[%s1047 + $0x60] sm:$0xf]
        %v1073 = vld [vmem:[%s1047 + $0x64] sm:$0xf]
        %v1074 = vld [vmem:[%s1047 + $0x68] sm:$0xf]
        %v1075 = vld [vmem:[%s1047 + $0x6c] sm:$0xf]
        %v1076 = vld [vmem:[%s1047 + $0x70] sm:$0xf]
        %v1077 = vld [vmem:[%s1047 + $0x74] sm:$0xf]
        %v1078 = vld [vmem:[%s1047 + $0x78] sm:$0xf]
        %v1079 = vld [vmem:[%s1047 + $0x7c] sm:$0xf]
        %v1112 = vunpack.c.l.b16 %v1048
        %v1113 = vunpack.c.l.b16 %v1049
        %v1114 = vunpack.c.l.b16 %v1050
        %v1115 = vunpack.c.l.b16 %v1051
        %v1116 = vunpack.c.l.b16 %v1052
        %v1117 = vunpack.c.l.b16 %v1053
        %v1118 = vunpack.c.l.b16 %v1054
        %v1119 = vunpack.c.l.b16 %v1055
        %v1120 = vunpack.c.l.b16 %v1056
        %v1121 = vunpack.c.l.b16 %v1057
        %v1122 = vunpack.c.l.b16 %v1058
        %v1123 = vunpack.c.l.b16 %v1059
        %v1124 = vunpack.c.l.b16 %v1060
        %v1125 = vunpack.c.l.b16 %v1061
        %v1126 = vunpack.c.l.b16 %v1062
        %v1127 = vunpack.c.l.b16 %v1063
        %v1128 = vunpack.c.l.b16 %v1064
        %v1129 = vunpack.c.l.b16 %v1065
        %v1130 = vunpack.c.l.b16 %v1066
        %v1131 = vunpack.c.l.b16 %v1067
        %v1132 = vunpack.c.l.b16 %v1068
        %v1133 = vunpack.c.l.b16 %v1069
        %v1134 = vunpack.c.l.b16 %v1070
        %v1135 = vunpack.c.l.b16 %v1071
        %v1136 = vunpack.c.l.b16 %v1072
        %v1137 = vunpack.c.l.b16 %v1073
        %v1138 = vunpack.c.l.b16 %v1074
        %v1139 = vunpack.c.l.b16 %v1075
        %v1140 = vunpack.c.l.b16 %v1076
        %v1141 = vunpack.c.l.b16 %v1077
        %v1142 = vunpack.c.l.b16 %v1078
        %v1143 = vunpack.c.l.b16 %v1079
        %v1144 = vpack.c.b16 %v1113, %v1112
        %v1145 = vpack.c.b16 %v1115, %v1114
        %v1146 = vpack.c.b16 %v1117, %v1116
        %v1147 = vpack.c.b16 %v1119, %v1118
        %v1148 = vpack.c.b16 %v1121, %v1120
        %v1149 = vpack.c.b16 %v1123, %v1122
        %v1150 = vpack.c.b16 %v1125, %v1124
        %v1151 = vpack.c.b16 %v1127, %v1126
        %v1152 = vpack.c.b16 %v1129, %v1128
        %v1153 = vpack.c.b16 %v1131, %v1130
        %v1154 = vpack.c.b16 %v1133, %v1132
        %v1155 = vpack.c.b16 %v1135, %v1134
        %v1156 = vpack.c.b16 %v1137, %v1136
        %v1157 = vpack.c.b16 %v1139, %v1138
        %v1158 = vpack.c.b16 %v1141, %v1140
        %v1159 = vpack.c.b16 %v1143, %v1142
        %1176 = vmatprep.subr.bf16.mxu0 0
        %1177 = vmatpush1.bf16.msra.mxu0 %v1144
        %1178 = vmatprep.subr.bf16.mxu0 0
        %1179 = vmatpush1.bf16.msra.mxu0 %v1145
        %1180 = vmatprep.subr.bf16.mxu0 0
        %1181 = vmatpush1.bf16.msra.mxu0 %v1146
        %1182 = vmatprep.subr.bf16.mxu0 0
        %1183 = vmatpush1.bf16.msra.mxu0 %v1147
        %1184 = vmatprep.subr.bf16.mxu0 0
        %1185 = vmatpush1.bf16.msra.mxu0 %v1148
        %1186 = vmatprep.subr.bf16.mxu0 0
        %1187 = vmatpush1.bf16.msra.mxu0 %v1149
        %1188 = vmatprep.subr.bf16.mxu0 0
        %1189 = vmatpush1.bf16.msra.mxu0 %v1150
        %1190 = vmatprep.subr.bf16.mxu0 0
        %1191 = vmatpush1.bf16.msra.mxu0 %v1151
        %1192 = vmatprep.subr.bf16.mxu0 0
        %1193 = vmatpush1.bf16.msra.mxu0 %v1152
        %1194 = vmatprep.subr.bf16.mxu0 0
        %1195 = vmatpush1.bf16.msra.mxu0 %v1153
        %1196 = vmatprep.subr.bf16.mxu0 0
        %1197 = vmatpush1.bf16.msra.mxu0 %v1154
        %1198 = vmatprep.subr.bf16.mxu0 0
        %1199 = vmatpush1.bf16.msra.mxu0 %v1155
        %1200 = vmatprep.subr.bf16.mxu0 0
        %1201 = vmatpush1.bf16.msra.mxu0 %v1156
        %1202 = vmatprep.subr.bf16.mxu0 0
        %1203 = vmatpush1.bf16.msra.mxu0 %v1157
        %1204 = vmatprep.subr.bf16.mxu0 0
        %1205 = vmatpush1.bf16.msra.mxu0 %v1158
        %1206 = vmatprep.subr.bf16.mxu0 0
        %1207 = vmatpush1.bf16.msra.mxu0 %v1159
        %1208 = vmatprep.mubr.bf16.mxu0 %v1039
        %1209 = vmatmul.mubr.bf16.gmra.mrb[0].mxu0 %v1023
        %v1210 = vpop.f32.mrb[0].mxu0
        %v1211 = vadd.f32 0.0, %v1210
        %v1212 = vpop.f32.mrb[0].mxu0
        %v1213 = vpop.f32.mrb[0].mxu0
        %v1214 = vadd.f32 0.0, %v1213
        %v1215 = vpop.f32.mrb[0].mxu0
        %1216 = vmatprep.mubr.bf16.mxu0 %v1040
        %1217 = vmatmul.mubr.bf16.gmra.mrb[0].mxu0 %v1024
        %v1218 = vpop.f32.mrb[0].mxu0
        %v1219 = vadd.f32 0.0, %v1218
        %v1220 = vpop.f32.mrb[0].mxu0
        %v1221 = vpop.f32.mrb[0].mxu0
        %v1222 = vadd.f32 0.0, %v1221
        %v1223 = vpop.f32.mrb[0].mxu0
        %1224 = vmatprep.mubr.bf16.mxu0 %v1041
        %1225 = vmatmul.mubr.bf16.gmra.mrb[0].mxu0 %v1025
        %v1226 = vpop.f32.mrb[0].mxu0
        %v1227 = vadd.f32 0.0, %v1226
        %v1228 = vpop.f32.mrb[0].mxu0
        %v1229 = vpop.f32.mrb[0].mxu0
        %v1230 = vadd.f32 0.0, %v1229
        %v1231 = vpop.f32.mrb[0].mxu0
        %1232 = vmatprep.mubr.bf16.mxu0 %v1042
        %1233 = vmatmul.mubr.bf16.gmra.mrb[0].mxu0 %v1026
        %v1234 = vpop.f32.mrb[0].mxu0
        %v1235 = vadd.f32 0.0, %v1234
        %v1236 = vpop.f32.mrb[0].mxu0
        %v1237 = vpop.f32.mrb[0].mxu0
        %v1238 = vadd.f32 0.0, %v1237
        %v1239 = vpop.f32.mrb[0].mxu0
        %1240 = vdwg.mxu0
        %v1241 = vadd.f32 %v837, %v1211
        %v1242 = vadd.f32 %v840, %v1214
        %v1243 = vadd.f32 %v845, %v1219
        %v1244 = vadd.f32 %v848, %v1222
        %v1245 = vadd.f32 %v853, %v1227
        %v1246 = vadd.f32 %v856, %v1230
        %v1247 = vadd.f32 %v861, %v1235
        %v1248 = vadd.f32 %v864, %v1238
        %s1249 = sadd.s32 %s233, 1
        %s1250 = smul.u32 %s1249, 2
        %s1251 = smul.addr %s1250, 4
        %s1252 = scalar_lea.vmem %s199, %s1251 [#allocation2]
        %v1253 = vld [vmem:[%s1252] sm:$0xf]
        %v1254 = vld [vmem:[%s1252 + $0x8] sm:$0xf]
        %v1255 = vld [vmem:[%s1252 + $0x10] sm:$0xf]
        %v1256 = vld [vmem:[%s1252 + $0x18] sm:$0xf]
        %v1257 = vld [vmem:[%s1252 + $0x20] sm:$0xf]
        %v1258 = vld [vmem:[%s1252 + $0x28] sm:$0xf]
        %v1259 = vld [vmem:[%s1252 + $0x30] sm:$0xf]
        %v1260 = vld [vmem:[%s1252 + $0x38] sm:$0xf]
        %s1261 = sadd.s32 %s233, 10
        %s1262 = smul.u32 %s1261, 2
        %s1263 = smul.addr %s1262, 4
        %s1264 = scalar_lea.vmem %s199, %s1263 [#allocation2]
        %v1265 = vld [vmem:[%s1264] sm:$0xf]
        %v1266 = vld [vmem:[%s1264 + $0x8] sm:$0xf]
        %v1267 = vld [vmem:[%s1264 + $0x10] sm:$0xf]
        %v1268 = vld [vmem:[%s1264 + $0x18] sm:$0xf]
        %v1269 = vld [vmem:[%s1264 + $0x20] sm:$0xf]
        %v1270 = vld [vmem:[%s1264 + $0x28] sm:$0xf]
        %v1271 = vld [vmem:[%s1264 + $0x30] sm:$0xf]
        %v1272 = vld [vmem:[%s1264 + $0x38] sm:$0xf]
        %v1281 = vunpack.c.l.b16 %v1253
        %v1282 = vunpack.c.l.b16 %v1254
        %v1283 = vunpack.c.l.b16 %v1255
        %v1284 = vunpack.c.l.b16 %v1256
        %v1285 = vunpack.c.l.b16 %v1257
        %v1286 = vunpack.c.l.b16 %v1258
        %v1287 = vunpack.c.l.b16 %v1259
        %v1288 = vunpack.c.l.b16 %v1260
        %v1289 = vpack.c.b16 %v1282, %v1281
        %v1290 = vpack.c.b16 %v1284, %v1283
        %v1291 = vpack.c.b16 %v1286, %v1285
        %v1292 = vpack.c.b16 %v1288, %v1287
        %v1305 = vunpack.c.l.b16 %v1265
        %v1306 = vunpack.c.l.b16 %v1266
        %v1307 = vunpack.c.l.b16 %v1267
        %v1308 = vunpack.c.l.b16 %v1268
        %v1309 = vunpack.c.l.b16 %v1269
        %v1310 = vunpack.c.l.b16 %v1270
        %v1311 = vunpack.c.l.b16 %v1271
        %v1312 = vunpack.c.l.b16 %v1272
        %v1313 = vpack.c.b16 %v1306, %v1305
        %v1314 = vpack.c.b16 %v1308, %v1307
        %v1315 = vpack.c.b16 %v1310, %v1309
        %v1316 = vpack.c.b16 %v1312, %v1311
        %s1321 = scalar_lea.vmem [#allocation5], 384
        %v1322 = vld [vmem:[%s1321] sm:$0xf]
        %v1323 = vld [vmem:[%s1321 + $0x4] sm:$0xf]
        %v1324 = vld [vmem:[%s1321 + $0x8] sm:$0xf]
        %v1325 = vld [vmem:[%s1321 + $0xc] sm:$0xf]
        %v1326 = vld [vmem:[%s1321 + $0x10] sm:$0xf]
        %v1327 = vld [vmem:[%s1321 + $0x14] sm:$0xf]
        %v1328 = vld [vmem:[%s1321 + $0x18] sm:$0xf]
        %v1329 = vld [vmem:[%s1321 + $0x1c] sm:$0xf]
        %v1330 = vld [vmem:[%s1321 + $0x20] sm:$0xf]
        %v1331 = vld [vmem:[%s1321 + $0x24] sm:$0xf]
        %v1332 = vld [vmem:[%s1321 + $0x28] sm:$0xf]
        %v1333 = vld [vmem:[%s1321 + $0x2c] sm:$0xf]
        %v1334 = vld [vmem:[%s1321 + $0x30] sm:$0xf]
        %v1335 = vld [vmem:[%s1321 + $0x34] sm:$0xf]
        %v1336 = vld [vmem:[%s1321 + $0x38] sm:$0xf]
        %v1337 = vld [vmem:[%s1321 + $0x3c] sm:$0xf]
        %v1338 = vld [vmem:[%s1321 + $0x40] sm:$0xf]
        %v1339 = vld [vmem:[%s1321 + $0x44] sm:$0xf]
        %v1340 = vld [vmem:[%s1321 + $0x48] sm:$0xf]
        %v1341 = vld [vmem:[%s1321 + $0x4c] sm:$0xf]
        %v1342 = vld [vmem:[%s1321 + $0x50] sm:$0xf]
        %v1343 = vld [vmem:[%s1321 + $0x54] sm:$0xf]
        %v1344 = vld [vmem:[%s1321 + $0x58] sm:$0xf]
        %v1345 = vld [vmem:[%s1321 + $0x5c] sm:$0xf]
        %v1346 = vld [vmem:[%s1321 + $0x60] sm:$0xf]
        %v1347 = vld [vmem:[%s1321 + $0x64] sm:$0xf]
        %v1348 = vld [vmem:[%s1321 + $0x68] sm:$0xf]
        %v1349 = vld [vmem:[%s1321 + $0x6c] sm:$0xf]
        %v1350 = vld [vmem:[%s1321 + $0x70] sm:$0xf]
        %v1351 = vld [vmem:[%s1321 + $0x74] sm:$0xf]
        %v1352 = vld [vmem:[%s1321 + $0x78] sm:$0xf]
        %v1353 = vld [vmem:[%s1321 + $0x7c] sm:$0xf]
        %v1386 = vunpack.c.l.b16 %v1322
        %v1387 = vunpack.c.l.b16 %v1323
        %v1388 = vunpack.c.l.b16 %v1324
        %v1389 = vunpack.c.l.b16 %v1325
        %v1390 = vunpack.c.l.b16 %v1326
        %v1391 = vunpack.c.l.b16 %v1327
        %v1392 = vunpack.c.l.b16 %v1328
        %v1393 = vunpack.c.l.b16 %v1329
        %v1394 = vunpack.c.l.b16 %v1330
        %v1395 = vunpack.c.l.b16 %v1331
        %v1396 = vunpack.c.l.b16 %v1332
        %v1397 = vunpack.c.l.b16 %v1333
        %v1398 = vunpack.c.l.b16 %v1334
        %v1399 = vunpack.c.l.b16 %v1335
        %v1400 = vunpack.c.l.b16 %v1336
        %v1401 = vunpack.c.l.b16 %v1337
        %v1402 = vunpack.c.l.b16 %v1338
        %v1403 = vunpack.c.l.b16 %v1339
        %v1404 = vunpack.c.l.b16 %v1340
        %v1405 = vunpack.c.l.b16 %v1341
        %v1406 = vunpack.c.l.b16 %v1342
        %v1407 = vunpack.c.l.b16 %v1343
        %v1408 = vunpack.c.l.b16 %v1344
        %v1409 = vunpack.c.l.b16 %v1345
        %v1410 = vunpack.c.l.b16 %v1346
        %v1411 = vunpack.c.l.b16 %v1347
        %v1412 = vunpack.c.l.b16 %v1348
        %v1413 = vunpack.c.l.b16 %v1349
        %v1414 = vunpack.c.l.b16 %v1350
        %v1415 = vunpack.c.l.b16 %v1351
        %v1416 = vunpack.c.l.b16 %v1352
        %v1417 = vunpack.c.l.b16 %v1353
        %v1418 = vpack.c.b16 %v1387, %v1386
        %v1419 = vpack.c.b16 %v1389, %v1388
        %v1420 = vpack.c.b16 %v1391, %v1390
        %v1421 = vpack.c.b16 %v1393, %v1392
        %v1422 = vpack.c.b16 %v1395, %v1394
        %v1423 = vpack.c.b16 %v1397, %v1396
        %v1424 = vpack.c.b16 %v1399, %v1398
        %v1425 = vpack.c.b16 %v1401, %v1400
        %v1426 = vpack.c.b16 %v1403, %v1402
        %v1427 = vpack.c.b16 %v1405, %v1404
        %v1428 = vpack.c.b16 %v1407, %v1406
        %v1429 = vpack.c.b16 %v1409, %v1408
        %v1430 = vpack.c.b16 %v1411, %v1410
        %v1431 = vpack.c.b16 %v1413, %v1412
        %v1432 = vpack.c.b16 %v1415, %v1414
        %v1433 = vpack.c.b16 %v1417, %v1416
        %1450 = vmatprep.subr.bf16.mxu0 0
        %1451 = vmatpush1.bf16.msra.mxu0 %v1418
        %1452 = vmatprep.subr.bf16.mxu0 0
        %1453 = vmatpush1.bf16.msra.mxu0 %v1419
        %1454 = vmatprep.subr.bf16.mxu0 0
        %1455 = vmatpush1.bf16.msra.mxu0 %v1420
        %1456 = vmatprep.subr.bf16.mxu0 0
        %1457 = vmatpush1.bf16.msra.mxu0 %v1421
        %1458 = vmatprep.subr.bf16.mxu0 0
        %1459 = vmatpush1.bf16.msra.mxu0 %v1422
        %1460 = vmatprep.subr.bf16.mxu0 0
        %1461 = vmatpush1.bf16.msra.mxu0 %v1423
        %1462 = vmatprep.subr.bf16.mxu0 0
        %1463 = vmatpush1.bf16.msra.mxu0 %v1424
        %1464 = vmatprep.subr.bf16.mxu0 0
        %1465 = vmatpush1.bf16.msra.mxu0 %v1425
        %1466 = vmatprep.subr.bf16.mxu0 0
        %1467 = vmatpush1.bf16.msra.mxu0 %v1426
        %1468 = vmatprep.subr.bf16.mxu0 0
        %1469 = vmatpush1.bf16.msra.mxu0 %v1427
        %1470 = vmatprep.subr.bf16.mxu0 0
        %1471 = vmatpush1.bf16.msra.mxu0 %v1428
        %1472 = vmatprep.subr.bf16.mxu0 0
        %1473 = vmatpush1.bf16.msra.mxu0 %v1429
        %1474 = vmatprep.subr.bf16.mxu0 0
        %1475 = vmatpush1.bf16.msra.mxu0 %v1430
        %1476 = vmatprep.subr.bf16.mxu0 0
        %1477 = vmatpush1.bf16.msra.mxu0 %v1431
        %1478 = vmatprep.subr.bf16.mxu0 0
        %1479 = vmatpush1.bf16.msra.mxu0 %v1432
        %1480 = vmatprep.subr.bf16.mxu0 0
        %1481 = vmatpush1.bf16.msra.mxu0 %v1433
        %1482 = vmatprep.mubr.bf16.mxu0 %v1313
        %1483 = vmatmul.mubr.bf16.gmra.mrb[0].mxu0 %v1289
        %v1484 = vpop.f32.mrb[0].mxu0
        %v1485 = vadd.f32 0.0, %v1484
        %v1486 = vpop.f32.mrb[0].mxu0
        %v1487 = vpop.f32.mrb[0].mxu0
        %v1488 = vadd.f32 0.0, %v1487
        %v1489 = vpop.f32.mrb[0].mxu0
        %1490 = vmatprep.mubr.bf16.mxu0 %v1314
        %1491 = vmatmul.mubr.bf16.gmra.mrb[0].mxu0 %v1290
        %v1492 = vpop.f32.mrb[0].mxu0
        %v1493 = vadd.f32 0.0, %v1492
        %v1494 = vpop.f32.mrb[0].mxu0
        %v1495 = vpop.f32.mrb[0].mxu0
        %v1496 = vadd.f32 0.0, %v1495
        %v1497 = vpop.f32.mrb[0].mxu0
        %1498 = vmatprep.mubr.bf16.mxu0 %v1315
        %1499 = vmatmul.mubr.bf16.gmra.mrb[0].mxu0 %v1291
        %v1500 = vpop.f32.mrb[0].mxu0
        %v1501 = vadd.f32 0.0, %v1500
        %v1502 = vpop.f32.mrb[0].mxu0
        %v1503 = vpop.f32.mrb[0].mxu0
        %v1504 = vadd.f32 0.0, %v1503
        %v1505 = vpop.f32.mrb[0].mxu0
        %1506 = vmatprep.mubr.bf16.mxu0 %v1316
        %1507 = vmatmul.mubr.bf16.gmra.mrb[0].mxu0 %v1292
        %v1508 = vpop.f32.mrb[0].mxu0
        %v1509 = vadd.f32 0.0, %v1508
        %v1510 = vpop.f32.mrb[0].mxu0
        %v1511 = vpop.f32.mrb[0].mxu0
        %v1512 = vadd.f32 0.0, %v1511
        %v1513 = vpop.f32.mrb[0].mxu0
        %1514 = vdwg.mxu0
        %v1515 = vadd.f32 %v1241, %v1485
        %v1516 = vadd.f32 %v1242, %v1488
        %v1517 = vadd.f32 %v1243, %v1493
        %v1518 = vadd.f32 %v1244, %v1496
        %v1519 = vadd.f32 %v1245, %v1501
        %v1520 = vadd.f32 %v1246, %v1504
        %v1521 = vadd.f32 %v1247, %v1509
        %v1522 = vadd.f32 %v1248, %v1512
        %v1523 = vld [vmem:[%s1252] sm:$0xf]
        %v1524 = vld [vmem:[%s1252 + $0x4] sm:$0x1]
        %v1525 = vld [vmem:[%s1252 + $0x8] sm:$0xf]
        %v1526 = vld [vmem:[%s1252 + $0xc] sm:$0x1]
        %v1527 = vld [vmem:[%s1252 + $0x10] sm:$0xf]
        %v1528 = vld [vmem:[%s1252 + $0x14] sm:$0x1]
        %v1529 = vld [vmem:[%s1252 + $0x18] sm:$0xf]
        %v1530 = vld [vmem:[%s1252 + $0x1c] sm:$0x1]
        %v1531 = vld [vmem:[%s1252 + $0x20] sm:$0xf]
        %v1532 = vld [vmem:[%s1252 + $0x24] sm:$0x1]
        %v1533 = vld [vmem:[%s1252 + $0x28] sm:$0xf]
        %v1534 = vld [vmem:[%s1252 + $0x2c] sm:$0x1]
        %v1535 = vld [vmem:[%s1252 + $0x30] sm:$0xf]
        %v1536 = vld [vmem:[%s1252 + $0x34] sm:$0x1]
        %v1537 = vld [vmem:[%s1252 + $0x38] sm:$0xf]
        %v1538 = vld [vmem:[%s1252 + $0x3c] sm:$0x1]
        %v1540 = vshrl.u32 %v1523, 16
        %v1542 = vrot.slane %v1540, 4
        %v1543 = vshll.u32 %v1523, 16
        %v1545 = vrot.slane %v1543, 5
        %v1546 = vor.u32 %v1542, %v1545
        %v1547 = vrot.slane %v1546, 4
        %v1549 = vshll.u32 %v1524, 16
        %v1551 = vrot.slane %v1549, 5
        %v1552 = vsel %vm347, %v1547, %v1551
        %v1554 = vshrl.u32 %v1525, 16
        %v1556 = vrot.slane %v1554, 4
        %v1557 = vshll.u32 %v1525, 16
        %v1559 = vrot.slane %v1557, 5
        %v1560 = vor.u32 %v1556, %v1559
        %v1561 = vrot.slane %v1560, 4
        %v1563 = vshll.u32 %v1526, 16
        %v1565 = vrot.slane %v1563, 5
        %v1566 = vsel %vm347, %v1561, %v1565
        %v1568 = vshrl.u32 %v1527, 16
        %v1570 = vrot.slane %v1568, 4
        %v1571 = vshll.u32 %v1527, 16
        %v1573 = vrot.slane %v1571, 5
        %v1574 = vor.u32 %v1570, %v1573
        %v1575 = vrot.slane %v1574, 4
        %v1577 = vshll.u32 %v1528, 16
        %v1579 = vrot.slane %v1577, 5
        %v1580 = vsel %vm347, %v1575, %v1579
        %v1582 = vshrl.u32 %v1529, 16
        %v1584 = vrot.slane %v1582, 4
        %v1585 = vshll.u32 %v1529, 16
        %v1587 = vrot.slane %v1585, 5
        %v1588 = vor.u32 %v1584, %v1587
        %v1589 = vrot.slane %v1588, 4
        %v1591 = vshll.u32 %v1530, 16
        %v1593 = vrot.slane %v1591, 5
        %v1594 = vsel %vm347, %v1589, %v1593
        %v1596 = vshrl.u32 %v1531, 16
        %v1598 = vrot.slane %v1596, 4
        %v1599 = vshll.u32 %v1531, 16
        %v1601 = vrot.slane %v1599, 5
        %v1602 = vor.u32 %v1598, %v1601
        %v1603 = vrot.slane %v1602, 4
        %v1605 = vshll.u32 %v1532, 16
        %v1607 = vrot.slane %v1605, 5
        %v1608 = vsel %vm347, %v1603, %v1607
        %v1610 = vshrl.u32 %v1533, 16
        %v1612 = vrot.slane %v1610, 4
        %v1613 = vshll.u32 %v1533, 16
        %v1615 = vrot.slane %v1613, 5
        %v1616 = vor.u32 %v1612, %v1615
        %v1617 = vrot.slane %v1616, 4
        %v1619 = vshll.u32 %v1534, 16
        %v1621 = vrot.slane %v1619, 5
        %v1622 = vsel %vm347, %v1617, %v1621
        %v1624 = vshrl.u32 %v1535, 16
        %v1626 = vrot.slane %v1624, 4
        %v1627 = vshll.u32 %v1535, 16
        %v1629 = vrot.slane %v1627, 5
        %v1630 = vor.u32 %v1626, %v1629
        %v1631 = vrot.slane %v1630, 4
        %v1633 = vshll.u32 %v1536, 16
        %v1635 = vrot.slane %v1633, 5
        %v1636 = vsel %vm347, %v1631, %v1635
        %v1638 = vshrl.u32 %v1537, 16
        %v1640 = vrot.slane %v1638, 4
        %v1641 = vshll.u32 %v1537, 16
        %v1643 = vrot.slane %v1641, 5
        %v1644 = vor.u32 %v1640, %v1643
        %v1645 = vrot.slane %v1644, 4
        %v1647 = vshll.u32 %v1538, 16
        %v1649 = vrot.slane %v1647, 5
        %v1650 = vsel %vm347, %v1645, %v1649
        %v1651 = vunpack.c.l.b16 %v1552
        %v1652 = vunpack.c.l.b16 %v1566
        %v1653 = vunpack.c.l.b16 %v1580
        %v1654 = vunpack.c.l.b16 %v1594
        %v1655 = vunpack.c.l.b16 %v1608
        %v1656 = vunpack.c.l.b16 %v1622
        %v1657 = vunpack.c.l.b16 %v1636
        %v1658 = vunpack.c.l.b16 %v1650
        %v1659 = vpack.c.b16 %v1652, %v1651
        %v1660 = vpack.c.b16 %v1654, %v1653
        %v1661 = vpack.c.b16 %v1656, %v1655
        %v1662 = vpack.c.b16 %v1658, %v1657
        %s1667 = scalar_lea.vmem [#allocation5], 512
        %v1668 = vld [vmem:[%s1667] sm:$0xf]
        %v1669 = vld [vmem:[%s1667 + $0x4] sm:$0xf]
        %v1670 = vld [vmem:[%s1667 + $0x8] sm:$0xf]
        %v1671 = vld [vmem:[%s1667 + $0xc] sm:$0xf]
        %v1672 = vld [vmem:[%s1667 + $0x10] sm:$0xf]
        %v1673 = vld [vmem:[%s1667 + $0x14] sm:$0xf]
        %v1674 = vld [vmem:[%s1667 + $0x18] sm:$0xf]
        %v1675 = vld [vmem:[%s1667 + $0x1c] sm:$0xf]
        %v1676 = vld [vmem:[%s1667 + $0x20] sm:$0xf]
        %v1677 = vld [vmem:[%s1667 + $0x24] sm:$0xf]
        %v1678 = vld [vmem:[%s1667 + $0x28] sm:$0xf]
        %v1679 = vld [vmem:[%s1667 + $0x2c] sm:$0xf]
        %v1680 = vld [vmem:[%s1667 + $0x30] sm:$0xf]
        %v1681 = vld [vmem:[%s1667 + $0x34] sm:$0xf]
        %v1682 = vld [vmem:[%s1667 + $0x38] sm:$0xf]
        %v1683 = vld [vmem:[%s1667 + $0x3c] sm:$0xf]
        %v1684 = vld [vmem:[%s1667 + $0x40] sm:$0xf]
        %v1685 = vld [vmem:[%s1667 + $0x44] sm:$0xf]
        %v1686 = vld [vmem:[%s1667 + $0x48] sm:$0xf]
        %v1687 = vld [vmem:[%s1667 + $0x4c] sm:$0xf]
        %v1688 = vld [vmem:[%s1667 + $0x50] sm:$0xf]
        %v1689 = vld [vmem:[%s1667 + $0x54] sm:$0xf]
        %v1690 = vld [vmem:[%s1667 + $0x58] sm:$0xf]
        %v1691 = vld [vmem:[%s1667 + $0x5c] sm:$0xf]
        %v1692 = vld [vmem:[%s1667 + $0x60] sm:$0xf]
        %v1693 = vld [vmem:[%s1667 + $0x64] sm:$0xf]
        %v1694 = vld [vmem:[%s1667 + $0x68] sm:$0xf]
        %v1695 = vld [vmem:[%s1667 + $0x6c] sm:$0xf]
        %v1696 = vld [vmem:[%s1667 + $0x70] sm:$0xf]
        %v1697 = vld [vmem:[%s1667 + $0x74] sm:$0xf]
        %v1698 = vld [vmem:[%s1667 + $0x78] sm:$0xf]
        %v1699 = vld [vmem:[%s1667 + $0x7c] sm:$0xf]
        %v1732 = vunpack.c.l.b16 %v1668
        %v1733 = vunpack.c.l.b16 %v1669
        %v1734 = vunpack.c.l.b16 %v1670
        %v1735 = vunpack.c.l.b16 %v1671
        %v1736 = vunpack.c.l.b16 %v1672
        %v1737 = vunpack.c.l.b16 %v1673
        %v1738 = vunpack.c.l.b16 %v1674
        %v1739 = vunpack.c.l.b16 %v1675
        %v1740 = vunpack.c.l.b16 %v1676
        %v1741 = vunpack.c.l.b16 %v1677
        %v1742 = vunpack.c.l.b16 %v1678
        %v1743 = vunpack.c.l.b16 %v1679
        %v1744 = vunpack.c.l.b16 %v1680
        %v1745 = vunpack.c.l.b16 %v1681
        %v1746 = vunpack.c.l.b16 %v1682
        %v1747 = vunpack.c.l.b16 %v1683
        %v1748 = vunpack.c.l.b16 %v1684
        %v1749 = vunpack.c.l.b16 %v1685
        %v1750 = vunpack.c.l.b16 %v1686
        %v1751 = vunpack.c.l.b16 %v1687
        %v1752 = vunpack.c.l.b16 %v1688
        %v1753 = vunpack.c.l.b16 %v1689
        %v1754 = vunpack.c.l.b16 %v1690
        %v1755 = vunpack.c.l.b16 %v1691
        %v1756 = vunpack.c.l.b16 %v1692
        %v1757 = vunpack.c.l.b16 %v1693
        %v1758 = vunpack.c.l.b16 %v1694
        %v1759 = vunpack.c.l.b16 %v1695
        %v1760 = vunpack.c.l.b16 %v1696
        %v1761 = vunpack.c.l.b16 %v1697
        %v1762 = vunpack.c.l.b16 %v1698
        %v1763 = vunpack.c.l.b16 %v1699
        %v1764 = vpack.c.b16 %v1733, %v1732
        %v1765 = vpack.c.b16 %v1735, %v1734
        %v1766 = vpack.c.b16 %v1737, %v1736
        %v1767 = vpack.c.b16 %v1739, %v1738
        %v1768 = vpack.c.b16 %v1741, %v1740
        %v1769 = vpack.c.b16 %v1743, %v1742
        %v1770 = vpack.c.b16 %v1745, %v1744
        %v1771 = vpack.c.b16 %v1747, %v1746
        %v1772 = vpack.c.b16 %v1749, %v1748
        %v1773 = vpack.c.b16 %v1751, %v1750
        %v1774 = vpack.c.b16 %v1753, %v1752
        %v1775 = vpack.c.b16 %v1755, %v1754
        %v1776 = vpack.c.b16 %v1757, %v1756
        %v1777 = vpack.c.b16 %v1759, %v1758
        %v1778 = vpack.c.b16 %v1761, %v1760
        %v1779 = vpack.c.b16 %v1763, %v1762
        %1796 = vmatprep.subr.bf16.mxu0 0
        %1797 = vmatpush1.bf16.msra.mxu0 %v1764
        %1798 = vmatprep.subr.bf16.mxu0 0
        %1799 = vmatpush1.bf16.msra.mxu0 %v1765
        %1800 = vmatprep.subr.bf16.mxu0 0
        %1801 = vmatpush1.bf16.msra.mxu0 %v1766
        %1802 = vmatprep.subr.bf16.mxu0 0
        %1803 = vmatpush1.bf16.msra.mxu0 %v1767
        %1804 = vmatprep.subr.bf16.mxu0 0
        %1805 = vmatpush1.bf16.msra.mxu0 %v1768
        %1806 = vmatprep.subr.bf16.mxu0 0
        %1807 = vmatpush1.bf16.msra.mxu0 %v1769
        %1808 = vmatprep.subr.bf16.mxu0 0
        %1809 = vmatpush1.bf16.msra.mxu0 %v1770
        %1810 = vmatprep.subr.bf16.mxu0 0
        %1811 = vmatpush1.bf16.msra.mxu0 %v1771
        %1812 = vmatprep.subr.bf16.mxu0 0
        %1813 = vmatpush1.bf16.msra.mxu0 %v1772
        %1814 = vmatprep.subr.bf16.mxu0 0
        %1815 = vmatpush1.bf16.msra.mxu0 %v1773
        %1816 = vmatprep.subr.bf16.mxu0 0
        %1817 = vmatpush1.bf16.msra.mxu0 %v1774
        %1818 = vmatprep.subr.bf16.mxu0 0
        %1819 = vmatpush1.bf16.msra.mxu0 %v1775
        %1820 = vmatprep.subr.bf16.mxu0 0
        %1821 = vmatpush1.bf16.msra.mxu0 %v1776
        %1822 = vmatprep.subr.bf16.mxu0 0
        %1823 = vmatpush1.bf16.msra.mxu0 %v1777
        %1824 = vmatprep.subr.bf16.mxu0 0
        %1825 = vmatpush1.bf16.msra.mxu0 %v1778
        %1826 = vmatprep.subr.bf16.mxu0 0
        %1827 = vmatpush1.bf16.msra.mxu0 %v1779
        %1828 = vmatprep.mubr.bf16.mxu0 %v1659
        %1829 = vmatmul.mubr.bf16.gmra.mrb[0].mxu0 %v1659
        %v1830 = vpop.f32.mrb[0].mxu0
        %v1831 = vadd.f32 0.0, %v1830
        %v1832 = vpop.f32.mrb[0].mxu0
        %v1833 = vpop.f32.mrb[0].mxu0
        %v1834 = vadd.f32 0.0, %v1833
        %v1835 = vpop.f32.mrb[0].mxu0
        %1836 = vmatprep.mubr.bf16.mxu0 %v1660
        %1837 = vmatmul.mubr.bf16.gmra.mrb[0].mxu0 %v1660
        %v1838 = vpop.f32.mrb[0].mxu0
        %v1839 = vadd.f32 0.0, %v1838
        %v1840 = vpop.f32.mrb[0].mxu0
        %v1841 = vpop.f32.mrb[0].mxu0
        %v1842 = vadd.f32 0.0, %v1841
        %v1843 = vpop.f32.mrb[0].mxu0
        %1844 = vmatprep.mubr.bf16.mxu0 %v1661
        %1845 = vmatmul.mubr.bf16.gmra.mrb[0].mxu0 %v1661
        %v1846 = vpop.f32.mrb[0].mxu0
        %v1847 = vadd.f32 0.0, %v1846
        %v1848 = vpop.f32.mrb[0].mxu0
        %v1849 = vpop.f32.mrb[0].mxu0
        %v1850 = vadd.f32 0.0, %v1849
        %v1851 = vpop.f32.mrb[0].mxu0
        %1852 = vmatprep.mubr.bf16.mxu0 %v1662
        %1853 = vmatmul.mubr.bf16.gmra.mrb[0].mxu0 %v1662
        %v1854 = vpop.f32.mrb[0].mxu0
        %v1855 = vadd.f32 0.0, %v1854
        %v1856 = vpop.f32.mrb[0].mxu0
        %v1857 = vpop.f32.mrb[0].mxu0
        %v1858 = vadd.f32 0.0, %v1857
        %v1859 = vpop.f32.mrb[0].mxu0
        %1860 = vdwg.mxu0
        %v1861 = vadd.f32 %v1515, %v1831
        %v1862 = vadd.f32 %v1516, %v1834
        %v1863 = vadd.f32 %v1517, %v1839
        %v1864 = vadd.f32 %v1518, %v1842
        %v1865 = vadd.f32 %v1519, %v1847
        %v1866 = vadd.f32 %v1520, %v1850
        %v1867 = vadd.f32 %v1521, %v1855
        %v1868 = vadd.f32 %v1522, %v1858
        %v1869 = vadd.f32 %v1861, %v1862
        %v1870 = vadd.f32 %v1869, %v1863
        %v1871 = vadd.f32 %v1870, %v1864
        %v1872 = vadd.f32 %v1871, %v1865
        %v1873 = vadd.f32 %v1872, %v1866
        %v1874 = vadd.f32 %v1873, %v1867
        %v1875 = vadd.f32 %v1874, %v1868
        %v1876 = vrot.slane %v1875, 4
        %v1877 = vadd.f32 %v1875, %v1876
        %v1878 = vrot.slane %v1877, 2
        %v1879 = vadd.f32 %v1877, %v1878
        %v1880 = vrot.slane %v1879, 1
        %v1881 = vadd.f32 %v1879, %v1880
        %1882 = vst [vmem:[%s230] sm:$0x1] %v1881
        %v1883 = vmul.f32 %v1861, %v1861
        %v1884 = vmul.f32 %v1862, %v1862
        %v1885 = vmul.f32 %v1863, %v1863
        %v1886 = vmul.f32 %v1864, %v1864
        %v1887 = vmul.f32 %v1865, %v1865
        %v1888 = vmul.f32 %v1866, %v1866
        %v1889 = vmul.f32 %v1867, %v1867
        %v1890 = vmul.f32 %v1868, %v1868
        %v1891 = vadd.f32 %v1883, %v1884
        %v1892 = vadd.f32 %v1891, %v1885
        %v1893 = vadd.f32 %v1892, %v1886
        %v1894 = vadd.f32 %v1893, %v1887
        %v1895 = vadd.f32 %v1894, %v1888
        %v1896 = vadd.f32 %v1895, %v1889
        %v1897 = vadd.f32 %v1896, %v1890
        %v1898 = vrot.slane %v1897, 4
        %v1899 = vadd.f32 %v1897, %v1898
        %v1900 = vrot.slane %v1899, 2
        %v1901 = vadd.f32 %v1899, %v1900
        %v1902 = vrot.slane %v1901, 1
        %v1903 = vadd.f32 %v1901, %v1902
        %1904 = vst [vmem:[%s230 + $0x1] sm:$0x1] %v1903
        %v1905 = vpack.c.bf16 %v1862, %v1861
        %v1906 = vpack.c.bf16 %v1864, %v1863
        %v1907 = vpack.c.bf16 %v1866, %v1865
        %v1908 = vpack.c.bf16 %v1868, %v1867
        %v1913 = vunpack.c.l.b16 %v1905
        %v1914 = vunpack.c.h.b16 %v1905
        %v1915 = vunpack.c.l.b16 %v1906
        %v1916 = vunpack.c.h.b16 %v1906
        %v1917 = vunpack.c.l.b16 %v1907
        %v1918 = vunpack.c.h.b16 %v1907
        %v1919 = vunpack.c.l.b16 %v1908
        %v1920 = vunpack.c.h.b16 %v1908
        %v1921 = vpack.c.b16 %v1913, %v1913
        %v1922 = vpack.c.b16 %v1914, %v1914
        %v1923 = vpack.c.b16 %v1915, %v1915
        %v1924 = vpack.c.b16 %v1916, %v1916
        %v1925 = vpack.c.b16 %v1917, %v1917
        %v1926 = vpack.c.b16 %v1918, %v1918
        %v1927 = vpack.c.b16 %v1919, %v1919
        %v1928 = vpack.c.b16 %v1920, %v1920
        %1937 = vst [vmem:[%s223] sm:$0xf] %v1921
        %1938 = vst [vmem:[%s223 + $0x4] sm:$0xf] %v1922
        %1939 = vst [vmem:[%s223 + $0x8] sm:$0xf] %v1923
        %1940 = vst [vmem:[%s223 + $0xc] sm:$0xf] %v1924
        %1941 = vst [vmem:[%s223 + $0x10] sm:$0xf] %v1925
        %1942 = vst [vmem:[%s223 + $0x14] sm:$0xf] %v1926
        %1943 = vst [vmem:[%s223 + $0x18] sm:$0xf] %v1927
        %1944 = vst [vmem:[%s223 + $0x1c] sm:$0xf] %v1928
        %s1945 = sand.u32 %s94, 1
        %s1946 = scalar_lea.sflag [#allocation4], %s1945
        %s1947 = sand.u32 %s94, 1
        %s1948 = smul.addr %s1947, 32
        %s1949 = scalar_lea.vmem [#allocation7], %s1948
        %s1950 = sand.u32 %s122, 1
        %s1951 = scalar_lea.sflag [#allocation9], %s1950
        %s1952 = sand.u32 %s122, 1
        %s1953 = smul.addr %s1952, 2
        %s1954 = scalar_lea.vmem [#allocation8], %s1953
        // Predicated region
        $region37: #{basic_block_ws_forward.5} parent=27 // pred_check
          %p1955 = pneg %p104
        $region38: #{basic_block_ws_forward.5} parent=27 // pred_check_branch
          %1957 = sbr.rel (%p1955) target = $region40
        $region39: #{basic_block_ws_forward.5} parent=27 // pred_region
          %s1958 = smul.u32 8, %s30
          %s1960 = ssub.s32 512, 512
          %1961 = vsyncadd %s1946, %s1960
          %s1962 = smul.addr %s29, 8
          %s1963 = sadd.s32 %s1958, %s1962
          %s1964 = smul.addr %s1963, 64
          %s1965 = scalar_lea.hbm %s2, %s1964
          %s1966 = sshll.u32 %s1949, 4
          %s1967 = int_to_ptr.vmem [resolvable:$true] %s1966
          %1972 = dma.vmem_to_hbm [thread:$0]  %s1967, 512, %s1965, %s1946, 64, 64, 4
        $region40: #{basic_block_ws_forward.5} parent=27 // pred_fallthru
          _
        // Predicated region
        $region41: #{basic_block_ws_forward.5} parent=27 // pred_check
          %p1973 = pneg %p132
        $region42: #{basic_block_ws_forward.5} parent=27 // pred_check_branch
          %1975 = sbr.rel (%p1973) target = $region44
        $region43: #{basic_block_ws_forward.5} parent=27 // pred_region
          %s1977 = ssub.s32 32, 32
          %1978 = vsyncadd %s1951, %s1977
          %s1979 = sadd.s32 %s30, %s29
          %s1980 = smul.addr %s1979, 32
          %s1981 = scalar_lea.hbm %s3, %s1980
          %s1983 = sshll.u32 %s1954, 4
          %s1984 = int_to_ptr.vmem [resolvable:$true] %s1983
          %1986 = dma.vmem_to_hbm [thread:$0]  %s1984, 32, %s1981, %s1951
        $region44: #{basic_block_ws_forward.5} parent=27 // pred_fallthru
          _
      $region28: #{basic_block_ws_forward.5} parent=5 // pred_fallthru
        _
      %p1987 = scmp.le.s32.totalorder 2, %s20
      // Predicated region
      $region45: #{basic_block_ws_forward.5} parent=5 // pred_check
        %p1988 = pneg %p1987
      $region46: #{basic_block_ws_forward.5} parent=5 // pred_check_branch
        %1990 = sbr.rel (%p1988) target = $region48
      $region47: #{basic_block_ws_forward.5} parent=5 // pred_region
        %s1991 = ssub.s32 %s20, 2
        // Predicated region
        $region49: #{basic_block_ws_forward.5} parent=47 // pred_check
          %p1992 = pneg %p110
        $region50: #{basic_block_ws_forward.5} parent=47 // pred_check_branch
          %1994 = sbr.rel (%p1992) target = $region52
        $region51: #{basic_block_ws_forward.5} parent=47 // pred_region
          %s1995 = sand.u32 %s95, 1
          %s1996 = scalar_lea.sflag [#allocation4], %s1995
          %s1997 = sand.u32 %s95, 1
          %s1998 = smul.addr %s1997, 32
          %s1999 = scalar_lea.vmem [#allocation7], %s1998
          %2000 = dma.done %s1996, 512
        $region52: #{basic_block_ws_forward.5} parent=47 // pred_fallthru
          _
        // Predicated region
        $region53: #{basic_block_ws_forward.5} parent=47 // pred_check
          %p2001 = pneg %p138
        $region54: #{basic_block_ws_forward.5} parent=47 // pred_check_branch
          %2003 = sbr.rel (%p2001) target = $region56
        $region55: #{basic_block_ws_forward.5} parent=47 // pred_region
          %s2004 = sand.u32 %s123, 1
          %s2005 = scalar_lea.sflag [#allocation9], %s2004
          %s2006 = sand.u32 %s123, 1
          %s2007 = smul.addr %s2006, 2
          %s2008 = scalar_lea.vmem [#allocation8], %s2007
          %2009 = dma.done %s2005, 32
        $region56: #{basic_block_ws_forward.5} parent=47 // pred_fallthru
          _
      $region48: #{basic_block_ws_forward.5} parent=5 // pred_fallthru
        _
    $region6: #{basic_block_ws_forward.5} parent=1 // loop_footer
      %s24 = sadd.s32 1, %s20
    $region7: #{basic_block_ws_forward.5} parent=1 // loop_footer_branch
      %19 = sbr.rel target = $region3
    $region8: #{basic_block_ws_forward.5} parent=1 // loop_exit
      _
    %2010 = vsyncpa [#allocation3], 1
    %s2011 = scalar_lea.sflag [#allocation3], 1
    %2012 = vsyncpa %s2011, 1
    %2013 = vsyncpa [#allocation6], 1
    %2014 = vsyncpa [#allocation4], 1
    %s2015 = scalar_lea.sflag [#allocation4], 1
    %2016 = vsyncpa %s2015, 1
    %2017 = vsyncpa [#allocation9], 1
    %s2018 = scalar_lea.sflag [#allocation9], 1
    %2019 = vsyncpa %s2018, 1

// kernel: basic_block_ws_forward.8
$region0: #{basic_block_ws_forward.8}
  #allocation0 [shape = 'u32[]', space=smem, size = 0x4, offset = 0x4, fixed_abs, tag = 'smem constant byte address 0x4 - core index']
  #allocation1 [shape = 'u32[144,128]{1,0:T(1,128)}', space=vmem, size = 0x12000, scoped, tag = 'internal scratch']
  %s0 = inlined_call_operand.hbm [shape: bf16[2,8,8,128], index: 0, kind: input, shape index: {}]
  %s1 = inlined_call_operand.hbm [shape: bf16[1,128,128], index: 1, kind: input, shape index: {}]
  %s2 = inlined_call_operand.hbm [shape: bf16[2,64,128], index: 2, kind: output, shape index: {0}]
  %s3 = inlined_call_operand.hbm [shape: f32[2,1,2,128], index: 3, kind: output, shape index: {1}]
  %4 = xla_tuple %s2, %s3
  %s5 = sld [smem:[#allocation0]]
  $region57: #{basic_block_ws_forward.8} parent=0
    _
  %s7 = ssub.s32 1, %s5
  %s8 = scalar_select 0, %s7, %s5
  $region1: #{basic_block_ws_forward.8} parent=0
    #allocation2 [shape = 'u8[32768]{0}', space=vmem, size = 0x8000, scoped, tag = 'input window, operand 0']
    #allocation3 [shape = 's32[2]{0}', space=sflag, size = 0x8, scoped, tag = 'scoped memory for basic_block_ws_forward.8']
    #allocation4 [shape = 's32[2]{0}', space=sflag, size = 0x8, scoped, tag = 'scoped memory for basic_block_ws_forward.8']
    #allocation5 [shape = 'u8[32768]{0}', space=vmem, size = 0x8000, scoped, tag = 'input window, operand 1, single buffered']
    #allocation6 [shape = 's32[1]{0}', space=sflag, size = 0x4, scoped, tag = 'scoped memory for basic_block_ws_forward.8']
    #allocation7 [shape = 'u8[32768]{0}', space=vmem, size = 0x8000, scoped, tag = 'output window, operand 0']
    #allocation8 [shape = 'u8[2048]{0}', space=vmem, size = 0x800, scoped, tag = 'output window, operand 1']
    #allocation9 [shape = 's32[2]{0}', space=sflag, size = 0x8, scoped, tag = 'scoped memory for basic_block_ws_forward.8']
    %9 = vsyncpa [#allocation3], 0
    %s10 = scalar_lea.sflag [#allocation3], 1
    %11 = vsyncpa %s10, 0
    %12 = vsyncpa [#allocation6], 0
    %13 = vsyncpa [#allocation4], 0
    %s14 = scalar_lea.sflag [#allocation4], 1
    %15 = vsyncpa %s14, 0
    %16 = vsyncpa [#allocation9], 0
    %s17 = scalar_lea.sflag [#allocation9], 1
    %18 = vsyncpa %s17, 0
    loop: start=0, step=1, limit=4
    $region2: #{basic_block_ws_forward.8} parent=1 // loop_pre_header
      _
    $region3: #{basic_block_ws_forward.8} parent=1 // loop_header
      %s20 = sphi 0, %s24
      %p21 = scmp.ge.s32.totalorder %s20, 4
      %s27 = sphi 0, %s39
      %s28 = sphi 0, %s35
      %s29 = sphi 0, %s27
      %s30 = sphi 0, %s28
      %s31 = sphi 0, %s29
      %s32 = sphi 0, %s30
      %s42 = sphi 0, %s44
      %s45 = sphi 0, %s42
      %s46 = sphi 0, %s45
      %s62 = sphi 0, %s46
      %s66 = sphi 0, %s66
      %s68 = sphi 0, %s66
      %s69 = sphi 0, %s68
      %s83 = sphi 0, %s69
      %s91 = sphi 0, %s93
      %s94 = sphi 0, %s91
      %s95 = sphi 0, %s94
      %s111 = sphi 0, %s95
      %s119 = sphi 0, %s121
      %s122 = sphi 0, %s119
      %s123 = sphi 0, %s122
      %s139 = sphi 0, %s123
    $region4: #{basic_block_ws_forward.8} parent=1 // loop_header_branch
      %23 = sbr.rel (%p21) target = $region8
    $region5: #{basic_block_ws_forward.8} parent=1 // loop_body
      %s25 = ssub.s32 %s20, 1
      %s26 = ssub.s32 %s20, 2
      %s33 = sadd.s32 1, %s28
      %p34 = scmp.ge.s32.totalorder %s33, 1
      %s35 = scalar_select %p34, 0, %s33
      %s36 = sadd.s32 1, %s27
      %s37 = scalar_select %p34, %s36, %s27
      %p38 = scmp.ge.s32.totalorder %s37, 2
      %s39 = scalar_select %p38, 0, %s37
      %s40 = ssub.s32 %s27, %s39
      %p41 = scmp.eq.s32.totalorder %s40, 0
      %s43 = sadd.s32 %s42, 1
      %s44 = scalar_select %p41, %s42, %s43
      %p47 = pneg %p41
      %p48 = scmp.eq.s32.totalorder %s20, 1
      %p49 = por %p47, %p48
      %p50 = scmp.ne.s32.totalorder %s42, %s45
      %p51 = scmp.eq.s32.totalorder %s20, 0
      %p52 = por %p50, %p51
      %p53 = scmp.ne.s32.totalorder %s42, %s45
      %p54 = scmp.eq.s32.totalorder %s25, 1
      %p55 = por %p53, %p54
      %p56 = scmp.ne.s32.totalorder %s45, %s46
      %p57 = scmp.eq.s32.totalorder %s25, 0
      %p58 = por %p56, %p57
      %p59 = scmp.ne.s32.totalorder %s45, %s46
      %p60 = scmp.eq.s32.totalorder %s26, 1
      %p61 = por %p59, %p60
      %p63 = scmp.ne.s32.totalorder %s46, %s62
      %p64 = scmp.eq.s32.totalorder %s26, 0
      %p65 = por %p63, %p64
      %s67 = sadd.s32 %s66, 1
      %p70 = scmp.eq.s32.totalorder %s20, 1
      %p71 = scmp.ne.s32.totalorder %s66, %s68
      %p72 = scmp.eq.s32.totalorder %s20, 0
      %p73 = por %p71, %p72
      %p74 = scmp.ne.s32.totalorder %s66, %s68
      %p75 = scmp.eq.s32.totalorder %s25, 1
      %p76 = por %p74, %p75
      %p77 = scmp.ne.s32.totalorder %s68, %s69
      %p78 = scmp.eq.s32.totalorder %s25, 0
      %p79 = por %p77, %p78
      %p80 = scmp.ne.s32.totalorder %s68, %s69
      %p81 = scmp.eq.s32.totalorder %s26, 1
      %p82 = por %p80, %p81
      %p84 = scmp.ne.s32.totalorder %s69, %s83
      %p85 = scmp.eq.s32.totalorder %s26, 0
      %p86 = por %p84, %p85
      %s87 = ssub.s32 %s27, %s39
      %s88 = ssub.s32 %s28, %s35
      %s89 = sor.u32 %s87, %s88
      %p90 = scmp.eq.s32.totalorder %s89, 0
      %s92 = sadd.s32 %s91, 1
      %s93 = scalar_select %p90, %s91, %s92
      %p96 = pneg %p90
      %p97 = scmp.eq.s32.totalorder %s20, 1
      %p98 = por %p96, %p97
      %p99 = scmp.ne.s32.totalorder %s91, %s94
      %p100 = scmp.eq.s32.totalorder %s20, 0
      %p101 = por %p99, %p100
      %p102 = scmp.ne.s32.totalorder %s91, %s94
      %p103 = scmp.eq.s32.totalorder %s25, 1
      %p104 = por %p102, %p103
      %p105 = scmp.ne.s32.totalorder %s94, %s95
      %p106 = scmp.eq.s32.totalorder %s25, 0
      %p107 = por %p105, %p106
      %p108 = scmp.ne.s32.totalorder %s94, %s95
      %p109 = scmp.eq.s32.totalorder %s26, 1
      %p110 = por %p108, %p109
      %p112 = scmp.ne.s32.totalorder %s95, %s111
      %p113 = scmp.eq.s32.totalorder %s26, 0
      %p114 = por %p112, %p113
      %s115 = ssub.s32 %s27, %s39
      %s116 = ssub.s32 %s28, %s35
      %s117 = sor.u32 %s115, %s116
      %p118 = scmp.eq.s32.totalorder %s117, 0
      %s120 = sadd.s32 %s119, 1
      %s121 = scalar_select %p118, %s119, %s120
      %p124 = pneg %p118
      %p125 = scmp.eq.s32.totalorder %s20, 1
      %p126 = por %p124, %p125
      %p127 = scmp.ne.s32.totalorder %s119, %s122
      %p128 = scmp.eq.s32.totalorder %s20, 0
      %p129 = por %p127, %p128
      %p130 = scmp.ne.s32.totalorder %s119, %s122
      %p131 = scmp.eq.s32.totalorder %s25, 1
      %p132 = por %p130, %p131
      %p133 = scmp.ne.s32.totalorder %s122, %s123
      %p134 = scmp.eq.s32.totalorder %s25, 0
      %p135 = por %p133, %p134
      %p136 = scmp.ne.s32.totalorder %s122, %s123
      %p137 = scmp.eq.s32.totalorder %s26, 1
      %p138 = por %p136, %p137
      %p140 = scmp.ne.s32.totalorder %s123, %s139
      %p141 = scmp.eq.s32.totalorder %s26, 0
      %p142 = por %p140, %p141
      %p143 = scmp.le.s32.totalorder 1, %s20
      %p144 = scmp.lt.s32.totalorder %s20, 3
      %p145 = pnand %p143, %p144
      %p146 = pneg %p145
      // Predicated region
      $region9: #{basic_block_ws_forward.8} parent=5 // pred_check
        _
      $region10: #{basic_block_ws_forward.8} parent=5 // pred_check_branch
        %148 = sbr.rel (%p145) target = $region12
      $region11: #{basic_block_ws_forward.8} parent=5 // pred_region
        %s149 = ssub.s32 %s20, 1
        // Predicated region
        $region13: #{basic_block_ws_forward.8} parent=11 // pred_check
          %p150 = pneg %p79
        $region14: #{basic_block_ws_forward.8} parent=11 // pred_check_branch
          %152 = sbr.rel (%p150) target = $region16
        $region15: #{basic_block_ws_forward.8} parent=11 // pred_region
          %s154 = ssub.s32 1024, 1024
          %155 = vsyncadd [#allocation6], %s154
          %s156 = sshll.u32 [#allocation5], 4
          %s157 = int_to_ptr.vmem [resolvable:$true] %s156
          %162 = dma.hbm_to_vmem [thread:$0]  %s1, 1024, %s157, [#allocation6], 64, 64, 4
        $region16: #{basic_block_ws_forward.8} parent=11 // pred_fallthru
          _
      $region12: #{basic_block_ws_forward.8} parent=5 // pred_fallthru
        _
      %p163 = scmp.lt.s32.totalorder %s20, 2
      // Predicated region
      $region17: #{basic_block_ws_forward.8} parent=5 // pred_check
        %p164 = pneg %p163
      $region18: #{basic_block_ws_forward.8} parent=5 // pred_check_branch
        %166 = sbr.rel (%p164) target = $region20
      $region19: #{basic_block_ws_forward.8} parent=5 // pred_region
        // Predicated region
        $region21: #{basic_block_ws_forward.8} parent=19 // pred_check
          %p167 = pneg %p52
        $region22: #{basic_block_ws_forward.8} parent=19 // pred_check_branch
          %169 = sbr.rel (%p167) target = $region24
        $region23: #{basic_block_ws_forward.8} parent=19 // pred_region
          %s170 = sand.u32 %s42, 1
          %s171 = scalar_lea.sflag [#allocation3], %s170
          %s172 = sand.u32 %s42, 1
          %s173 = smul.addr %s172, 32
          %s174 = scalar_lea.vmem [#allocation2], %s173
          %s176 = ssub.s32 512, 512
          %177 = vsyncadd %s171, %s176
          %s178 = smul.addr %s27, 8
          %s179 = smul.addr %s178, 64
          %s180 = scalar_lea.hbm %s0, %s179
          %s181 = sshll.u32 %s174, 4
          %s182 = int_to_ptr.vmem [resolvable:$true] %s181
          %187 = dma.hbm_to_vmem [thread:$0]  %s180, 512, %s182, %s171, 64, 64, 4
        $region24: #{basic_block_ws_forward.8} parent=19 // pred_fallthru
          _
      $region20: #{basic_block_ws_forward.8} parent=5 // pred_fallthru
        _
      %p188 = scmp.le.s32.totalorder 1, %s20
      %p189 = scmp.lt.s32.totalorder %s20, 3
      %p190 = pnand %p188, %p189
      %p191 = pneg %p190
      // Predicated region
      $region25: #{basic_block_ws_forward.8} parent=5 // pred_check
        _
      $region26: #{basic_block_ws_forward.8} parent=5 // pred_check_branch
        %193 = sbr.rel (%p190) target = $region28
      $region27: #{basic_block_ws_forward.8} parent=5 // pred_region
        %s194 = ssub.s32 %s20, 1
        %s195 = sand.u32 %s45, 1
        %s196 = scalar_lea.sflag [#allocation3], %s195
        %s197 = sand.u32 %s45, 1
        %s198 = smul.addr %s197, 32
        %s199 = scalar_lea.vmem [#allocation2], %s198
        // Predicated region
        $region29: #{basic_block_ws_forward.8} parent=27 // pred_check
          %p200 = pneg %p58
        $region30: #{basic_block_ws_forward.8} parent=27 // pred_check_branch
          %202 = sbr.rel (%p200) target = $region32
        $region31: #{basic_block_ws_forward.8} parent=27 // pred_region
          %203 = dma.done %s196, 512
        $region32: #{basic_block_ws_forward.8} parent=27 // pred_fallthru
          _
        // Predicated region
        $region33: #{basic_block_ws_forward.8} parent=27 // pred_check
          %p204 = pneg %p79
        $region34: #{basic_block_ws_forward.8} parent=27 // pred_check_branch
          %206 = sbr.rel (%p204) target = $region36
        $region35: #{basic_block_ws_forward.8} parent=27 // pred_region
          %207 = dma.done [#allocation6], 1024
        $region36: #{basic_block_ws_forward.8} parent=27 // pred_fallthru
          _
        %s208 = sand.u32 %s45, 1
        %s209 = scalar_lea.sflag [#allocation3], %s208
        %s210 = sand.u32 %s45, 1
        %s211 = smul.addr %s210, 32
        %s212 = scalar_lea.vmem [#allocation2], %s211
        %p213 = pneg %p58
        %p214 = pneg %p55
        %p215 = pneg %p79
        %p216 = pneg %p76
        %p217 = pneg %p107
        %p218 = pneg %p104
        %s219 = sand.u32 %s94, 1
        %s220 = scalar_lea.sflag [#allocation4], %s219
        %s221 = sand.u32 %s94, 1
        %s222 = smul.addr %s221, 32
        %s223 = scalar_lea.vmem [#allocation7], %s222
        %p224 = pneg %p135
        %p225 = pneg %p132
        %s226 = sand.u32 %s122, 1
        %s227 = scalar_lea.sflag [#allocation9], %s226
        %s228 = sand.u32 %s122, 1
        %s229 = smul.addr %s228, 2
        %s230 = scalar_lea.vmem [#allocation8], %s229
        %s231 = smul.u32 8, %s30
        %s233 = smul.u32 %s30, 8
        %s234 = smul.addr %s233, 4
        %s235 = scalar_lea.vmem %s199, %s234 [#allocation2]
        %v236 = vld [vmem:[%s235] sm:$0xf]
        %v237 = vld [vmem:[%s235 + $0x4] sm:$0xf]
        %v238 = vld [vmem:[%s235 + $0x8] sm:$0xf]
        %v239 = vld [vmem:[%s235 + $0xc] sm:$0xf]
        %v240 = vld [vmem:[%s235 + $0x10] sm:$0xf]
        %v241 = vld [vmem:[%s235 + $0x14] sm:$0xf]
        %v242 = vld [vmem:[%s235 + $0x18] sm:$0xf]
        %v243 = vld [vmem:[%s235 + $0x1c] sm:$0xf]
        %v244 = vld [vmem:[#allocation5] sm:$0xf]
        %v245 = vld [vmem:[#allocation5 + $0x4] sm:$0xf]
        %v246 = vld [vmem:[#allocation5 + $0x8] sm:$0xf]
        %v247 = vld [vmem:[#allocation5 + $0xc] sm:$0xf]
        %v248 = vld [vmem:[#allocation5 + $0x10] sm:$0xf]
        %v249 = vld [vmem:[#allocation5 + $0x14] sm:$0xf]
        %v250 = vld [vmem:[#allocation5 + $0x18] sm:$0xf]
        %v251 = vld [vmem:[#allocation5 + $0x1c] sm:$0xf]
        %v252 = vld [vmem:[#allocation5 + $0x20] sm:$0xf]
        %v253 = vld [vmem:[#allocation5 + $0x24] sm:$0xf]
        %v254 = vld [vmem:[#allocation5 + $0x28] sm:$0xf]
        %v255 = vld [vmem:[#allocation5 + $0x2c] sm:$0xf]
        %v256 = vld [vmem:[#allocation5 + $0x30] sm:$0xf]
        %v257 = vld [vmem:[#allocation5 + $0x34] sm:$0xf]
        %v258 = vld [vmem:[#allocation5 + $0x38] sm:$0xf]
        %v259 = vld [vmem:[#allocation5 + $0x3c] sm:$0xf]
        %v268 = vunpack.c.l.b16 %v236
        %v269 = vunpack.c.l.b16 %v237
        %v270 = vunpack.c.l.b16 %v238
        %v271 = vunpack.c.l.b16 %v239
        %v272 = vunpack.c.l.b16 %v240
        %v273 = vunpack.c.l.b16 %v241
        %v274 = vunpack.c.l.b16 %v242
        %v275 = vunpack.c.l.b16 %v243
        %v276 = vpack.c.b16 %v269, %v268
        %v277 = vpack.c.b16 %v271, %v270
        %v278 = vpack.c.b16 %v273, %v272
        %v279 = vpack.c.b16 %v275, %v274
        %v300 = vunpack.c.l.b16 %v244
        %v301 = vunpack.c.l.b16 %v245
        %v302 = vunpack.c.l.b16 %v246
        %v303 = vunpack.c.l.b16 %v247
        %v304 = vunpack.c.l.b16 %v248
        %v305 = vunpack.c.l.b16 %v249
        %v306 = vunpack.c.l.b16 %v250
        %v307 = vunpack.c.l.b16 %v251
        %v308 = vunpack.c.l.b16 %v252
        %v309 = vunpack.c.l.b16 %v253
        %v310 = vunpack.c.l.b16 %v254
        %v311 = vunpack.c.l.b16 %v255
        %v312 = vunpack.c.l.b16 %v256
        %v313 = vunpack.c.l.b16 %v257
        %v314 = vunpack.c.l.b16 %v258
        %v315 = vunpack.c.l.b16 %v259
        %v316 = vpack.c.b16 %v301, %v300
        %v317 = vpack.c.b16 %v303, %v302
        %v318 = vpack.c.b16 %v305, %v304
        %v319 = vpack.c.b16 %v307, %v306
        %v320 = vpack.c.b16 %v309, %v308
        %v321 = vpack.c.b16 %v311, %v310
        %v322 = vpack.c.b16 %v313, %v312
        %v323 = vpack.c.b16 %v315, %v314
        %332 = vmatprep.subr.bf16.mxu0 0
        %333 = vmatpush1.bf16.msra.mxu0 %v316
        %334 = vmatprep.subr.bf16.mxu0 0
        %335 = vmatpush1.bf16.msra.mxu0 %v317
        %336 = vmatprep.subr.bf16.mxu0 0
        %337 = vmatpush1.bf16.msra.mxu0 %v318
        %338 = vmatprep.subr.bf16.mxu0 0
        %339 = vmatpush1.bf16.msra.mxu0 %v319
        %340 = vmatprep.subr.bf16.mxu0 0
        %341 = vmatpush1.bf16.msra.mxu0 %v320
        %342 = vmatprep.subr.bf16.mxu0 0
        %343 = vmatpush1.bf16.msra.mxu0 %v321
        %344 = vmatprep.subr.bf16.mxu0 0
        %345 = vmatpush1.bf16.msra.mxu0 %v322
        %346 = vmatprep.subr.bf16.mxu0 0
        %347 = vmatpush1.bf16.msra.mxu0 %v323
        %348 = vmatprep.subr.bf16.mxu0 0
        %349 = vmatpush1.bf16.msra.mxu0 0
        %350 = vmatprep.subr.bf16.mxu0 0
        %351 = vmatpush1.bf16.msra.mxu0 0
        %352 = vmatprep.subr.bf16.mxu0 0
        %353 = vmatpush1.bf16.msra.mxu0 0
        %354 = vmatprep.subr.bf16.mxu0 0
        %355 = vmatpush1.bf16.msra.mxu0 0
        %356 = vmatprep.subr.bf16.mxu0 0
        %357 = vmatpush1.bf16.msra.mxu0 0
        %358 = vmatprep.subr.bf16.mxu0 0
        %359 = vmatpush1.bf16.msra.mxu0 0
        %360 = vmatprep.subr.bf16.mxu0 0
        %361 = vmatpush1.bf16.msra.mxu0 0
        %362 = vmatprep.subr.bf16.mxu0 0
        %363 = vmatpush1.bf16.msra.mxu0 0
        %364 = vmatprep.mubr.bf16.mxu0 0
        %365 = vmatmul.mubr.bf16.gmra.mrb[0].mxu0 %v276
        %v366 = vpop.f32.mrb[0].mxu0
        %v367 = vadd.f32 0.0, %v366
        %v368 = vpop.f32.mrb[0].mxu0
        %v369 = vpop.f32.mrb[0].mxu0
        %v370 = vadd.f32 0.0, %v369
        %v371 = vpop.f32.mrb[0].mxu0
        %372 = vmatprep.mubr.bf16.mxu0 0
        %373 = vmatmul.mubr.bf16.gmra.mrb[0].mxu0 %v277
        %v374 = vpop.f32.mrb[0].mxu0
        %v375 = vadd.f32 0.0, %v374
        %v376 = vpop.f32.mrb[0].mxu0
        %v377 = vpop.f32.mrb[0].mxu0
        %v378 = vadd.f32 0.0, %v377
        %v379 = vpop.f32.mrb[0].mxu0
        %380 = vmatprep.mubr.bf16.mxu0 0
        %381 = vmatmul.mubr.bf16.gmra.mrb[0].mxu0 %v278
        %v382 = vpop.f32.mrb[0].mxu0
        %v383 = vadd.f32 0.0, %v382
        %v384 = vpop.f32.mrb[0].mxu0
        %v385 = vpop.f32.mrb[0].mxu0
        %v386 = vadd.f32 0.0, %v385
        %v387 = vpop.f32.mrb[0].mxu0
        %388 = vmatprep.mubr.bf16.mxu0 0
        %389 = vmatmul.mubr.bf16.gmra.mrb[0].mxu0 %v279
        %v390 = vpop.f32.mrb[0].mxu0
        %v391 = vadd.f32 0.0, %v390
        %v392 = vpop.f32.mrb[0].mxu0
        %v393 = vpop.f32.mrb[0].mxu0
        %v394 = vadd.f32 0.0, %v393
        %v395 = vpop.f32.mrb[0].mxu0
        %396 = vdwg.mxu0
        %v397 = vadd.f32 %v367, %v370
        %v398 = vadd.f32 %v397, %v375
        %v399 = vadd.f32 %v398, %v378
        %v400 = vadd.f32 %v399, %v383
        %v401 = vadd.f32 %v400, %v386
        %v402 = vadd.f32 %v401, %v391
        %v403 = vadd.f32 %v402, %v394
        %v404 = vrot.slane %v403, 4
        %v405 = vadd.f32 %v403, %v404
        %v406 = vrot.slane %v405, 2
        %v407 = vadd.f32 %v405, %v406
        %v408 = vrot.slane %v407, 1
        %v409 = vadd.f32 %v407, %v408
        %410 = vst [vmem:[%s230] sm:$0x1] %v409
        %v411 = vmul.f32 %v367, %v367
        %v412 = vmul.f32 %v370, %v370
        %v413 = vmul.f32 %v375, %v375
        %v414 = vmul.f32 %v378, %v378
        %v415 = vmul.f32 %v383, %v383
        %v416 = vmul.f32 %v386, %v386
        %v417 = vmul.f32 %v391, %v391
        %v418 = vmul.f32 %v394, %v394
        %v419 = vadd.f32 %v411, %v412
        %v420 = vadd.f32 %v419, %v413
        %v421 = vadd.f32 %v420, %v414
        %v422 = vadd.f32 %v421, %v415
        %v423 = vadd.f32 %v422, %v416
        %v424 = vadd.f32 %v423, %v417
        %v425 = vadd.f32 %v424, %v418
        %v426 = vrot.slane %v425, 4
        %v427 = vadd.f32 %v425, %v426
        %v428 = vrot.slane %v427, 2
        %v429 = vadd.f32 %v427, %v428
        %v430 = vrot.slane %v429, 1
        %v431 = vadd.f32 %v429, %v430
        %432 = vst [vmem:[%s230 + $0x1] sm:$0x1] %v431
        %v433 = vpack.c.bf16 %v370, %v367
        %v434 = vpack.c.bf16 %v378, %v375
        %v435 = vpack.c.bf16 %v386, %v383
        %v436 = vpack.c.bf16 %v394, %v391
        %v441 = vunpack.c.l.b16 %v433
        %v442 = vunpack.c.h.b16 %v433
        %v443 = vunpack.c.l.b16 %v434
        %v444 = vunpack.c.h.b16 %v434
        %v445 = vunpack.c.l.b16 %v435
        %v446 = vunpack.c.h.b16 %v435
        %v447 = vunpack.c.l.b16 %v436
        %v448 = vunpack.c.h.b16 %v436
        %v449 = vpack.c.b16 %v441, %v441
        %v450 = vpack.c.b16 %v442, %v442
        %v451 = vpack.c.b16 %v443, %v443
        %v452 = vpack.c.b16 %v444, %v444
        %v453 = vpack.c.b16 %v445, %v445
        %v454 = vpack.c.b16 %v446, %v446
        %v455 = vpack.c.b16 %v447, %v447
        %v456 = vpack.c.b16 %v448, %v448
        %465 = vst [vmem:[%s223] sm:$0xf] %v449
        %466 = vst [vmem:[%s223 + $0x4] sm:$0xf] %v450
        %467 = vst [vmem:[%s223 + $0x8] sm:$0xf] %v451
        %468 = vst [vmem:[%s223 + $0xc] sm:$0xf] %v452
        %469 = vst [vmem:[%s223 + $0x10] sm:$0xf] %v453
        %470 = vst [vmem:[%s223 + $0x14] sm:$0xf] %v454
        %471 = vst [vmem:[%s223 + $0x18] sm:$0xf] %v455
        %472 = vst [vmem:[%s223 + $0x1c] sm:$0xf] %v456
        %s473 = sand.u32 %s94, 1
        %s474 = scalar_lea.sflag [#allocation4], %s473
        %s475 = sand.u32 %s94, 1
        %s476 = smul.addr %s475, 32
        %s477 = scalar_lea.vmem [#allocation7], %s476
        %s478 = sand.u32 %s122, 1
        %s479 = scalar_lea.sflag [#allocation9], %s478
        %s480 = sand.u32 %s122, 1
        %s481 = smul.addr %s480, 2
        %s482 = scalar_lea.vmem [#allocation8], %s481
        // Predicated region
        $region37: #{basic_block_ws_forward.8} parent=27 // pred_check
          %p483 = pneg %p104
        $region38: #{basic_block_ws_forward.8} parent=27 // pred_check_branch
          %485 = sbr.rel (%p483) target = $region40
        $region39: #{basic_block_ws_forward.8} parent=27 // pred_region
          %s486 = smul.u32 8, %s30
          %s488 = ssub.s32 512, 512
          %489 = vsyncadd %s474, %s488
          %s490 = smul.addr %s29, 8
          %s491 = sadd.s32 %s486, %s490
          %s492 = smul.addr %s491, 64
          %s493 = scalar_lea.hbm %s2, %s492
          %s494 = sshll.u32 %s477, 4
          %s495 = int_to_ptr.vmem [resolvable:$true] %s494
          %500 = dma.vmem_to_hbm [thread:$0]  %s495, 512, %s493, %s474, 64, 64, 4
        $region40: #{basic_block_ws_forward.8} parent=27 // pred_fallthru
          _
        // Predicated region
        $region41: #{basic_block_ws_forward.8} parent=27 // pred_check
          %p501 = pneg %p132
        $region42: #{basic_block_ws_forward.8} parent=27 // pred_check_branch
          %503 = sbr.rel (%p501) target = $region44
        $region43: #{basic_block_ws_forward.8} parent=27 // pred_region
          %s505 = ssub.s32 32, 32
          %506 = vsyncadd %s479, %s505
          %s507 = sadd.s32 %s30, %s29
          %s508 = smul.addr %s507, 32
          %s509 = scalar_lea.hbm %s3, %s508
          %s511 = sshll.u32 %s482, 4
          %s512 = int_to_ptr.vmem [resolvable:$true] %s511
          %514 = dma.vmem_to_hbm [thread:$0]  %s512, 32, %s509, %s479
        $region44: #{basic_block_ws_forward.8} parent=27 // pred_fallthru
          _
      $region28: #{basic_block_ws_forward.8} parent=5 // pred_fallthru
        _
      %p515 = scmp.le.s32.totalorder 2, %s20
      // Predicated region
      $region45: #{basic_block_ws_forward.8} parent=5 // pred_check
        %p516 = pneg %p515
      $region46: #{basic_block_ws_forward.8} parent=5 // pred_check_branch
        %518 = sbr.rel (%p516) target = $region48
      $region47: #{basic_block_ws_forward.8} parent=5 // pred_region
        %s519 = ssub.s32 %s20, 2
        // Predicated region
        $region49: #{basic_block_ws_forward.8} parent=47 // pred_check
          %p520 = pneg %p110
        $region50: #{basic_block_ws_forward.8} parent=47 // pred_check_branch
          %522 = sbr.rel (%p520) target = $region52
        $region51: #{basic_block_ws_forward.8} parent=47 // pred_region
          %s523 = sand.u32 %s95, 1
          %s524 = scalar_lea.sflag [#allocation4], %s523
          %s525 = sand.u32 %s95, 1
          %s526 = smul.addr %s525, 32
          %s527 = scalar_lea.vmem [#allocation7], %s526
          %528 = dma.done %s524, 512
        $region52: #{basic_block_ws_forward.8} parent=47 // pred_fallthru
          _
        // Predicated region
        $region53: #{basic_block_ws_forward.8} parent=47 // pred_check
          %p529 = pneg %p138
        $region54: #{basic_block_ws_forward.8} parent=47 // pred_check_branch
          %531 = sbr.rel (%p529) target = $region56
        $region55: #{basic_block_ws_forward.8} parent=47 // pred_region
          %s532 = sand.u32 %s123, 1
          %s533 = scalar_lea.sflag [#allocation9], %s532
          %s534 = sand.u32 %s123, 1
          %s535 = smul.addr %s534, 2
          %s536 = scalar_lea.vmem [#allocation8], %s535
          %537 = dma.done %s533, 32
        $region56: #{basic_block_ws_forward.8} parent=47 // pred_fallthru
          _
      $region48: #{basic_block_ws_forward.8} parent=5 // pred_fallthru
        _
    $region6: #{basic_block_ws_forward.8} parent=1 // loop_footer
      %s24 = sadd.s32 1, %s20
    $region7: #{basic_block_ws_forward.8} parent=1 // loop_footer_branch
      %19 = sbr.rel target = $region3
    $region8: #{basic_block_ws_forward.8} parent=1 // loop_exit
      _
    %538 = vsyncpa [#allocation3], 1
    %s539 = scalar_lea.sflag [#allocation3], 1
    %540 = vsyncpa %s539, 1
    %541 = vsyncpa [#allocation6], 1
    %542 = vsyncpa [#allocation4], 1
    %s543 = scalar_lea.sflag [#allocation4], 1
    %544 = vsyncpa %s543, 1
    %545 = vsyncpa [#allocation9], 1
    %s546 = scalar_lea.sflag [#allocation9], 1
    %547 = vsyncpa %s546, 1

// kernel: basic_block_ws_forward.9
$region0: #{basic_block_ws_forward.9}
  #allocation0 [shape = 'u32[]', space=smem, size = 0x4, offset = 0x4, fixed_abs, tag = 'smem constant byte address 0x4 - core index']
  #allocation1 [shape = 'u32[144,128]{1,0:T(1,128)}', space=vmem, size = 0x12000, scoped, tag = 'internal scratch']
  %s0 = inlined_call_operand.hbm [shape: bf16[2,64,128], index: 0, kind: input, shape index: {}]
  %s1 = inlined_call_operand.hbm [shape: bf16[2,64,128], index: 1, kind: input, shape index: {}]
  %s2 = inlined_call_operand.hbm [shape: f32[2,1,128], index: 2, kind: input, shape index: {}]
  %s3 = inlined_call_operand.hbm [shape: f32[2,1,128], index: 3, kind: input, shape index: {}]
  %s4 = inlined_call_operand.hbm [shape: f32[2,1,128], index: 4, kind: input, shape index: {}]
  %s5 = inlined_call_operand.hbm [shape: f32[2,1,128], index: 5, kind: input, shape index: {}]
  %s6 = inlined_call_operand.hbm [shape: f32[2,64,128], index: 6, kind: output, shape index: {}]
  %s7 = sld [smem:[#allocation0]]
  $region81: #{basic_block_ws_forward.9} parent=0
    _
  %s9 = ssub.s32 1, %s7
  %s10 = scalar_select 0, %s9, %s7
  $region1: #{basic_block_ws_forward.9} parent=0
    #allocation2 [shape = 'u8[32768]{0}', space=vmem, size = 0x8000, scoped, tag = 'input window, operand 0']
    #allocation3 [shape = 's32[2]{0}', space=sflag, size = 0x8, scoped, tag = 'scoped memory for basic_block_ws_forward.9']
    #allocation4 [shape = 's32[2]{0}', space=sflag, size = 0x8, scoped, tag = 'scoped memory for basic_block_ws_forward.9']
    #allocation5 [shape = 'u8[32768]{0}', space=vmem, size = 0x8000, scoped, tag = 'input window, operand 1']
    #allocation6 [shape = 's32[2]{0}', space=sflag, size = 0x8, scoped, tag = 'scoped memory for basic_block_ws_forward.9']
    #allocation7 [shape = 'u8[1024]{0}', space=vmem, size = 0x400, scoped, tag = 'input window, operand 2']
    #allocation8 [shape = 'u8[1024]{0}', space=vmem, size = 0x400, scoped, tag = 'input window, operand 3']
    #allocation9 [shape = 's32[2]{0}', space=sflag, size = 0x8, scoped, tag = 'scoped memory for basic_block_ws_forward.9']
    #allocation10 [shape = 'u8[1024]{0}', space=vmem, size = 0x400, scoped, tag = 'input window, operand 4']
    #allocation11 [shape = 'u8[1024]{0}', space=vmem, size = 0x400, scoped, tag = 'input window, operand 5']
    #allocation12 [shape = 's32[2]{0}', space=sflag, size = 0x8, scoped, tag = 'scoped memory for basic_block_ws_forward.9']
    #allocation13 [shape = 'u8[65536]{0}', space=vmem, size = 0x10000, scoped, tag = 'output window, operand 0']
    %11 = vsyncpa [#allocation3], 0
    %s12 = scalar_lea.sflag [#allocation3], 1
    %13 = vsyncpa %s12, 0
    %14 = vsyncpa [#allocation6], 0
    %s15 = scalar_lea.sflag [#allocation6], 1
    %16 = vsyncpa %s15, 0
    %17 = vsyncpa [#allocation9], 0
    %s18 = scalar_lea.sflag [#allocation9], 1
    %19 = vsyncpa %s18, 0
    %20 = vsyncpa [#allocation12], 0
    %s21 = scalar_lea.sflag [#allocation12], 1
    %22 = vsyncpa %s21, 0
    %23 = vsyncpa [#allocation4], 0
    %s24 = scalar_lea.sflag [#allocation4], 1
    %25 = vsyncpa %s24, 0
    loop: start=0, step=1, limit=4
    $region2: #{basic_block_ws_forward.9} parent=1 // loop_pre_header
      _
    $region3: #{basic_block_ws_forward.9} parent=1 // loop_header
      %s27 = sphi 0, %s31
      %p28 = scmp.ge.s32.totalorder %s27, 4
      %s34 = sphi 0, %s46
      %s35 = sphi 0, %s42
      %s36 = sphi 0, %s34
      %s37 = sphi 0, %s35
      %s38 = sphi 0, %s36
      %s39 = sphi 0, %s37
      %s51 = sphi 0, %s53
      %s54 = sphi 0, %s51
      %s55 = sphi 0, %s54
      %s71 = sphi 0, %s55
      %s79 = sphi 0, %s81
      %s82 = sphi 0, %s79
      %s83 = sphi 0, %s82
      %s99 = sphi 0, %s83
      %s105 = sphi 0, %s107
      %s108 = sphi 0, %s105
      %s109 = sphi 0, %s108
      %s125 = sphi 0, %s109
      %s131 = sphi 0, %s133
      %s134 = sphi 0, %s131
      %s135 = sphi 0, %s134
      %s151 = sphi 0, %s135
      %s157 = sphi 0, %s159
      %s160 = sphi 0, %s157
      %s161 = sphi 0, %s160
      %s177 = sphi 0, %s161
      %s183 = sphi 0, %s185
      %s186 = sphi 0, %s183
      %s187 = sphi 0, %s186
      %s203 = sphi 0, %s187
      %s211 = sphi 0, %s213
      %s214 = sphi 0, %s211
      %s215 = sphi 0, %s214
      %s231 = sphi 0, %s215
    $region4: #{basic_block_ws_forward.9} parent=1 // loop_header_branch
      %30 = sbr.rel (%p28) target = $region8
    $region5: #{basic_block_ws_forward.9} parent=1 // loop_body
      %s32 = ssub.s32 %s27, 1
      %s33 = ssub.s32 %s27, 2
      %s40 = sadd.s32 1, %s35
      %p41 = scmp.ge.s32.totalorder %s40, 1
      %s42 = scalar_select %p41, 0, %s40
      %s43 = sadd.s32 1, %s34
      %s44 = scalar_select %p41, %s43, %s34
      %p45 = scmp.ge.s32.totalorder %s44, 2
      %s46 = scalar_select %p45, 0, %s44
      %s47 = ssub.s32 %s34, %s46
      %s48 = ssub.s32 %s35, %s42
      %s49 = sor.u32 %s47, %s48
      %p50 = scmp.eq.s32.totalorder %s49, 0
      %s52 = sadd.s32 %s51, 1
      %s53 = scalar_select %p50, %s51, %s52
      %p56 = pneg %p50
      %p57 = scmp.eq.s32.totalorder %s27, 1
      %p58 = por %p56, %p57
      %p59 = scmp.ne.s32.totalorder %s51, %s54
      %p60 = scmp.eq.s32.totalorder %s27, 0
      %p61 = por %p59, %p60
      %p62 = scmp.ne.s32.totalorder %s51, %s54
      %p63 = scmp.eq.s32.totalorder %s32, 1
      %p64 = por %p62, %p63
      %p65 = scmp.ne.s32.totalorder %s54, %s55
      %p66 = scmp.eq.s32.totalorder %s32, 0
      %p67 = por %p65, %p66
      %p68 = scmp.ne.s32.totalorder %s54, %s55
      %p69 = scmp.eq.s32.totalorder %s33, 1
      %p70 = por %p68, %p69
      %p72 = scmp.ne.s32.totalorder %s55, %s71
      %p73 = scmp.eq.s32.totalorder %s33, 0
      %p74 = por %p72, %p73
      %s75 = ssub.s32 %s34, %s46
      %s76 = ssub.s32 %s35, %s42
      %s77 = sor.u32 %s75, %s76
      %p78 = scmp.eq.s32.totalorder %s77, 0
      %s80 = sadd.s32 %s79, 1
      %s81 = scalar_select %p78, %s79, %s80
      %p84 = pneg %p78
      %p85 = scmp.eq.s32.totalorder %s27, 1
      %p86 = por %p84, %p85
      %p87 = scmp.ne.s32.totalorder %s79, %s82
      %p88 = scmp.eq.s32.totalorder %s27, 0
      %p89 = por %p87, %p88
      %p90 = scmp.ne.s32.totalorder %s79, %s82
      %p91 = scmp.eq.s32.totalorder %s32, 1
      %p92 = por %p90, %p91
      %p93 = scmp.ne.s32.totalorder %s82, %s83
      %p94 = scmp.eq.s32.totalorder %s32, 0
      %p95 = por %p93, %p94
      %p96 = scmp.ne.s32.totalorder %s82, %s83
      %p97 = scmp.eq.s32.totalorder %s33, 1
      %p98 = por %p96, %p97
      %p100 = scmp.ne.s32.totalorder %s83, %s99
      %p101 = scmp.eq.s32.totalorder %s33, 0
      %p102 = por %p100, %p101
      %s103 = ssub.s32 %s34, %s46
      %p104 = scmp.eq.s32.totalorder %s103, 0
      %s106 = sadd.s32 %s105, 1
      %s107 = scalar_select %p104, %s105, %s106
      %p110 = pneg %p104
      %p111 = scmp.eq.s32.totalorder %s27, 1
      %p112 = por %p110, %p111
      %p113 = scmp.ne.s32.totalorder %s105, %s108
      %p114 = scmp.eq.s32.totalorder %s27, 0
      %p115 = por %p113, %p114
      %p116 = scmp.ne.s32.totalorder %s105, %s108
      %p117 = scmp.eq.s32.totalorder %s32, 1
      %p118 = por %p116, %p117
      %p119 = scmp.ne.s32.totalorder %s108, %s109
      %p120 = scmp.eq.s32.totalorder %s32, 0
      %p121 = por %p119, %p120
      %p122 = scmp.ne.s32.totalorder %s108, %s109
      %p123 = scmp.eq.s32.totalorder %s33, 1
      %p124 = por %p122, %p123
      %p126 = scmp.ne.s32.totalorder %s109, %s125
      %p127 = scmp.eq.s32.totalorder %s33, 0
      %p128 = por %p126, %p127
      %s129 = ssub.s32 %s34, %s46
      %p130 = scmp.eq.s32.totalorder %s129, 0
      %s132 = sadd.s32 %s131, 1
      %s133 = scalar_select %p130, %s131, %s132
      %p136 = pneg %p130
      %p137 = scmp.eq.s32.totalorder %s27, 1
      %p138 = por %p136, %p137
      %p139 = scmp.ne.s32.totalorder %s131, %s134
      %p140 = scmp.eq.s32.totalorder %s27, 0
      %p141 = por %p139, %p140
      %p142 = scmp.ne.s32.totalorder %s131, %s134
      %p143 = scmp.eq.s32.totalorder %s32, 1
      %p144 = por %p142, %p143
      %p145 = scmp.ne.s32.totalorder %s134, %s135
      %p146 = scmp.eq.s32.totalorder %s32, 0
      %p147 = por %p145, %p146
      %p148 = scmp.ne.s32.totalorder %s134, %s135
      %p149 = scmp.eq.s32.totalorder %s33, 1
      %p150 = por %p148, %p149
      %p152 = scmp.ne.s32.totalorder %s135, %s151
      %p153 = scmp.eq.s32.totalorder %s33, 0
      %p154 = por %p152, %p153
      %s155 = ssub.s32 %s34, %s46
      %p156 = scmp.eq.s32.totalorder %s155, 0
      %s158 = sadd.s32 %s157, 1
      %s159 = scalar_select %p156, %s157, %s158
      %p162 = pneg %p156
      %p163 = scmp.eq.s32.totalorder %s27, 1
      %p164 = por %p162, %p163
      %p165 = scmp.ne.s32.totalorder %s157, %s160
      %p166 = scmp.eq.s32.totalorder %s27, 0
      %p167 = por %p165, %p166
      %p168 = scmp.ne.s32.totalorder %s157, %s160
      %p169 = scmp.eq.s32.totalorder %s32, 1
      %p170 = por %p168, %p169
      %p171 = scmp.ne.s32.totalorder %s160, %s161
      %p172 = scmp.eq.s32.totalorder %s32, 0
      %p173 = por %p171, %p172
      %p174 = scmp.ne.s32.totalorder %s160, %s161
      %p175 = scmp.eq.s32.totalorder %s33, 1
      %p176 = por %p174, %p175
      %p178 = scmp.ne.s32.totalorder %s161, %s177
      %p179 = scmp.eq.s32.totalorder %s33, 0
      %p180 = por %p178, %p179
      %s181 = ssub.s32 %s34, %s46
      %p182 = scmp.eq.s32.totalorder %s181, 0
      %s184 = sadd.s32 %s183, 1
      %s185 = scalar_select %p182, %s183, %s184
      %p188 = pneg %p182
      %p189 = scmp.eq.s32.totalorder %s27, 1
      %p190 = por %p188, %p189
      %p191 = scmp.ne.s32.totalorder %s183, %s186
      %p192 = scmp.eq.s32.totalorder %s27, 0
      %p193 = por %p191, %p192
      %p194 = scmp.ne.s32.totalorder %s183, %s186
      %p195 = scmp.eq.s32.totalorder %s32, 1
      %p196 = por %p194, %p195
      %p197 = scmp.ne.s32.totalorder %s186, %s187
      %p198 = scmp.eq.s32.totalorder %s32, 0
      %p199 = por %p197, %p198
      %p200 = scmp.ne.s32.totalorder %s186, %s187
      %p201 = scmp.eq.s32.totalorder %s33, 1
      %p202 = por %p200, %p201
      %p204 = scmp.ne.s32.totalorder %s187, %s203
      %p205 = scmp.eq.s32.totalorder %s33, 0
      %p206 = por %p204, %p205
      %s207 = ssub.s32 %s34, %s46
      %s208 = ssub.s32 %s35, %s42
      %s209 = sor.u32 %s207, %s208
      %p210 = scmp.eq.s32.totalorder %s209, 0
      %s212 = sadd.s32 %s211, 1
      %s213 = scalar_select %p210, %s211, %s212
      %p216 = pneg %p210
      %p217 = scmp.eq.s32.totalorder %s27, 1
      %p218 = por %p216, %p217
      %p219 = scmp.ne.s32.totalorder %s211, %s214
      %p220 = scmp.eq.s32.totalorder %s27, 0
      %p221 = por %p219, %p220
      %p222 = scmp.ne.s32.totalorder %s211, %s214
      %p223 = scmp.eq.s32.totalorder %s32, 1
      %p224 = por %p222, %p223
      %p225 = scmp.ne.s32.totalorder %s214, %s215
      %p226 = scmp.eq.s32.totalorder %s32, 0
      %p227 = por %p225, %p226
      %p228 = scmp.ne.s32.totalorder %s214, %s215
      %p229 = scmp.eq.s32.totalorder %s33, 1
      %p230 = por %p228, %p229
      %p232 = scmp.ne.s32.totalorder %s215, %s231
      %p233 = scmp.eq.s32.totalorder %s33, 0
      %p234 = por %p232, %p233
      %p235 = scmp.le.s32.totalorder 1, %s27
      %p236 = scmp.lt.s32.totalorder %s27, 3
      %p237 = pnand %p235, %p236
      %p238 = pneg %p237
      // Predicated region
      $region9: #{basic_block_ws_forward.9} parent=5 // pred_check
        _
      $region10: #{basic_block_ws_forward.9} parent=5 // pred_check_branch
        %240 = sbr.rel (%p237) target = $region12
      $region11: #{basic_block_ws_forward.9} parent=5 // pred_region
        %s241 = ssub.s32 %s27, 1
      $region12: #{basic_block_ws_forward.9} parent=5 // pred_fallthru
        _
      %p242 = scmp.lt.s32.totalorder %s27, 2
      // Predicated region
      $region13: #{basic_block_ws_forward.9} parent=5 // pred_check
        %p243 = pneg %p242
      $region14: #{basic_block_ws_forward.9} parent=5 // pred_check_branch
        %245 = sbr.rel (%p243) target = $region16
      $region15: #{basic_block_ws_forward.9} parent=5 // pred_region
        // Predicated region
        $region17: #{basic_block_ws_forward.9} parent=15 // pred_check
          %p246 = pneg %p61
        $region18: #{basic_block_ws_forward.9} parent=15 // pred_check_branch
          %248 = sbr.rel (%p246) target = $region20
        $region19: #{basic_block_ws_forward.9} parent=15 // pred_region
          %s249 = sand.u32 %s51, 1
          %s250 = scalar_lea.sflag [#allocation3], %s249
          %s251 = sand.u32 %s51, 1
          %s252 = smul.addr %s251, 32
          %s253 = scalar_lea.vmem [#allocation2], %s252
          %s254 = smul.u32 8, %s35
          %s256 = ssub.s32 512, 512
          %257 = vsyncadd %s250, %s256
          %s258 = smul.addr %s34, 8
          %s259 = sadd.s32 %s254, %s258
          %s260 = smul.addr %s259, 64
          %s261 = scalar_lea.hbm %s0, %s260
          %s262 = sshll.u32 %s253, 4
          %s263 = int_to_ptr.vmem [resolvable:$true] %s262
          %268 = dma.hbm_to_vmem [thread:$0]  %s261, 512, %s263, %s250, 64, 64, 4
        $region20: #{basic_block_ws_forward.9} parent=15 // pred_fallthru
          _
        // Predicated region
        $region21: #{basic_block_ws_forward.9} parent=15 // pred_check
          %p269 = pneg %p89
        $region22: #{basic_block_ws_forward.9} parent=15 // pred_check_branch
          %271 = sbr.rel (%p269) target = $region24
        $region23: #{basic_block_ws_forward.9} parent=15 // pred_region
          %s272 = sand.u32 %s27, 1
          %s273 = scalar_lea.sflag [#allocation6], %s272
          %s274 = sand.u32 %s79, 1
          %s275 = smul.addr %s274, 32
          %s276 = scalar_lea.vmem [#allocation5], %s275
          %s277 = smul.u32 8, %s35
          %s279 = ssub.s32 512, 512
          %280 = vsyncadd %s273, %s279
          %s281 = smul.addr %s34, 8
          %s282 = sadd.s32 %s277, %s281
          %s283 = smul.addr %s282, 64
          %s284 = scalar_lea.hbm %s1, %s283
          %s285 = sshll.u32 %s276, 4
          %s286 = int_to_ptr.vmem [resolvable:$true] %s285
          %291 = dma.hbm_to_vmem [thread:$0]  %s284, 512, %s286, %s273, 64, 64, 4
        $region24: #{basic_block_ws_forward.9} parent=15 // pred_fallthru
          _
        // Predicated region
        $region25: #{basic_block_ws_forward.9} parent=15 // pred_check
          %p292 = pneg %p115
        $region26: #{basic_block_ws_forward.9} parent=15 // pred_check_branch
          %294 = sbr.rel (%p292) target = $region28
        $region27: #{basic_block_ws_forward.9} parent=15 // pred_region
          %s295 = sand.u32 %s27, 1
          %s296 = scalar_lea.sflag [#allocation6], %s295
          %s297 = sand.u32 %s105, 1
          %s298 = scalar_lea.vmem [#allocation7], %s297
          %s300 = ssub.s32 16, 16
          %301 = vsyncadd %s296, %s300
          %s302 = smul.addr %s34, 16
          %s303 = scalar_lea.hbm %s2, %s302
          %s305 = sshll.u32 %s298, 4
          %s306 = int_to_ptr.vmem [resolvable:$true] %s305
          %308 = dma.hbm_to_vmem [thread:$0]  %s303, 16, %s306, %s296
        $region28: #{basic_block_ws_forward.9} parent=15 // pred_fallthru
          _
        // Predicated region
        $region29: #{basic_block_ws_forward.9} parent=15 // pred_check
          %p309 = pneg %p141
        $region30: #{basic_block_ws_forward.9} parent=15 // pred_check_branch
          %311 = sbr.rel (%p309) target = $region32
        $region31: #{basic_block_ws_forward.9} parent=15 // pred_region
          %s312 = sand.u32 %s27, 1
          %s313 = scalar_lea.sflag [#allocation9], %s312
          %s314 = sand.u32 %s131, 1
          %s315 = scalar_lea.vmem [#allocation8], %s314
          %s317 = ssub.s32 16, 16
          %318 = vsyncadd %s313, %s317
          %s319 = smul.addr %s34, 16
          %s320 = scalar_lea.hbm %s3, %s319
          %s322 = sshll.u32 %s315, 4
          %s323 = int_to_ptr.vmem [resolvable:$true] %s322
          %325 = dma.hbm_to_vmem [thread:$0]  %s320, 16, %s323, %s313
        $region32: #{basic_block_ws_forward.9} parent=15 // pred_fallthru
          _
        // Predicated region
        $region33: #{basic_block_ws_forward.9} parent=15 // pred_check
          %p326 = pneg %p167
        $region34: #{basic_block_ws_forward.9} parent=15 // pred_check_branch
          %328 = sbr.rel (%p326) target = $region36
        $region35: #{basic_block_ws_forward.9} parent=15 // pred_region
          %s329 = sand.u32 %s27, 1
          %s330 = scalar_lea.sflag [#allocation9], %s329
          %s331 = sand.u32 %s157, 1
          %s332 = scalar_lea.vmem [#allocation10], %s331
          %s334 = ssub.s32 16, 16
          %335 = vsyncadd %s330, %s334
          %s336 = smul.addr %s34, 16
          %s337 = scalar_lea.hbm %s4, %s336
          %s339 = sshll.u32 %s332, 4
          %s340 = int_to_ptr.vmem [resolvable:$true] %s339
          %342 = dma.hbm_to_vmem [thread:$0]  %s337, 16, %s340, %s330
        $region36: #{basic_block_ws_forward.9} parent=15 // pred_fallthru
          _
        // Predicated region
        $region37: #{basic_block_ws_forward.9} parent=15 // pred_check
          %p343 = pneg %p193
        $region38: #{basic_block_ws_forward.9} parent=15 // pred_check_branch
          %345 = sbr.rel (%p343) target = $region40
        $region39: #{basic_block_ws_forward.9} parent=15 // pred_region
          %s346 = sand.u32 %s183, 1
          %s347 = scalar_lea.sflag [#allocation12], %s346
          %s348 = sand.u32 %s183, 1
          %s349 = scalar_lea.vmem [#allocation11], %s348
          %s351 = ssub.s32 16, 16
          %352 = vsyncadd %s347, %s351
          %s353 = smul.addr %s34, 16
          %s354 = scalar_lea.hbm %s5, %s353
          %s356 = sshll.u32 %s349, 4
          %s357 = int_to_ptr.vmem [resolvable:$true] %s356
          %359 = dma.hbm_to_vmem [thread:$0]  %s354, 16, %s357, %s347
        $region40: #{basic_block_ws_forward.9} parent=15 // pred_fallthru
          _
      $region16: #{basic_block_ws_forward.9} parent=5 // pred_fallthru
        _
      %p360 = scmp.le.s32.totalorder 1, %s27
      %p361 = scmp.lt.s32.totalorder %s27, 3
      %p362 = pnand %p360, %p361
      %p363 = pneg %p362
      // Predicated region
      $region41: #{basic_block_ws_forward.9} parent=5 // pred_check
        _
      $region42: #{basic_block_ws_forward.9} parent=5 // pred_check_branch
        %365 = sbr.rel (%p362) target = $region44
      $region43: #{basic_block_ws_forward.9} parent=5 // pred_region
        %s366 = ssub.s32 %s27, 1
        %s367 = sand.u32 %s54, 1
        %s368 = scalar_lea.sflag [#allocation3], %s367
        %s369 = sand.u32 %s54, 1
        %s370 = smul.addr %s369, 32
        %s371 = scalar_lea.vmem [#allocation2], %s370
        // Predicated region
        $region45: #{basic_block_ws_forward.9} parent=43 // pred_check
          %p372 = pneg %p67
        $region46: #{basic_block_ws_forward.9} parent=43 // pred_check_branch
          %374 = sbr.rel (%p372) target = $region48
        $region47: #{basic_block_ws_forward.9} parent=43 // pred_region
          %375 = dma.done %s368, 512
        $region48: #{basic_block_ws_forward.9} parent=43 // pred_fallthru
          _
        %s376 = sand.u32 %s32, 1
        %s377 = scalar_lea.sflag [#allocation6], %s376
        %s378 = sand.u32 %s82, 1
        %s379 = smul.addr %s378, 32
        %s380 = scalar_lea.vmem [#allocation5], %s379
        // Predicated region
        $region49: #{basic_block_ws_forward.9} parent=43 // pred_check
          %p381 = pneg %p95
        $region50: #{basic_block_ws_forward.9} parent=43 // pred_check_branch
          %383 = sbr.rel (%p381) target = $region52
        $region51: #{basic_block_ws_forward.9} parent=43 // pred_region
          %384 = dma.done %s377, 512
        $region52: #{basic_block_ws_forward.9} parent=43 // pred_fallthru
          _
        %s385 = sand.u32 %s32, 1
        %s386 = scalar_lea.sflag [#allocation6], %s385
        %s387 = sand.u32 %s108, 1
        %s388 = scalar_lea.vmem [#allocation7], %s387
        // Predicated region
        $region53: #{basic_block_ws_forward.9} parent=43 // pred_check
          %p389 = pneg %p121
        $region54: #{basic_block_ws_forward.9} parent=43 // pred_check_branch
          %391 = sbr.rel (%p389) target = $region56
        $region55: #{basic_block_ws_forward.9} parent=43 // pred_region
          %392 = dma.done %s386, 16
        $region56: #{basic_block_ws_forward.9} parent=43 // pred_fallthru
          _
        %s393 = sand.u32 %s32, 1
        %s394 = scalar_lea.sflag [#allocation9], %s393
        %s395 = sand.u32 %s134, 1
        %s396 = scalar_lea.vmem [#allocation8], %s395
        // Predicated region
        $region57: #{basic_block_ws_forward.9} parent=43 // pred_check
          %p397 = pneg %p147
        $region58: #{basic_block_ws_forward.9} parent=43 // pred_check_branch
          %399 = sbr.rel (%p397) target = $region60
        $region59: #{basic_block_ws_forward.9} parent=43 // pred_region
          %400 = dma.done %s394, 16
        $region60: #{basic_block_ws_forward.9} parent=43 // pred_fallthru
          _
        %s401 = sand.u32 %s32, 1
        %s402 = scalar_lea.sflag [#allocation9], %s401
        %s403 = sand.u32 %s160, 1
        %s404 = scalar_lea.vmem [#allocation10], %s403
        // Predicated region
        $region61: #{basic_block_ws_forward.9} parent=43 // pred_check
          %p405 = pneg %p173
        $region62: #{basic_block_ws_forward.9} parent=43 // pred_check_branch
          %407 = sbr.rel (%p405) target = $region64
        $region63: #{basic_block_ws_forward.9} parent=43 // pred_region
          %408 = dma.done %s402, 16
        $region64: #{basic_block_ws_forward.9} parent=43 // pred_fallthru
          _
        %s409 = sand.u32 %s186, 1
        %s410 = scalar_lea.sflag [#allocation12], %s409
        %s411 = sand.u32 %s186, 1
        %s412 = scalar_lea.vmem [#allocation11], %s411
        // Predicated region
        $region65: #{basic_block_ws_forward.9} parent=43 // pred_check
          %p413 = pneg %p199
        $region66: #{basic_block_ws_forward.9} parent=43 // pred_check_branch
          %415 = sbr.rel (%p413) target = $region68
        $region67: #{basic_block_ws_forward.9} parent=43 // pred_region
          %416 = dma.done %s410, 16
        $region68: #{basic_block_ws_forward.9} parent=43 // pred_fallthru
          _
        %s417 = sand.u32 %s54, 1
        %s418 = scalar_lea.sflag [#allocation3], %s417
        %s419 = sand.u32 %s54, 1
        %s420 = smul.addr %s419, 32
        %s421 = scalar_lea.vmem [#allocation2], %s420
        %p422 = pneg %p67
        %p423 = pneg %p64
        %s424 = sand.u32 %s32, 1
        %s425 = scalar_lea.sflag [#allocation6], %s424
        %s426 = sand.u32 %s82, 1
        %s427 = smul.addr %s426, 32
        %s428 = scalar_lea.vmem [#allocation5], %s427
        %p429 = pneg %p95
        %p430 = pneg %p92
        %s431 = sand.u32 %s32, 1
        %s432 = scalar_lea.sflag [#allocation6], %s431
        %s433 = sand.u32 %s108, 1
        %s434 = scalar_lea.vmem [#allocation7], %s433
        %p435 = pneg %p121
        %p436 = pneg %p118
        %s437 = sand.u32 %s32, 1
        %s438 = scalar_lea.sflag [#allocation9], %s437
        %s439 = sand.u32 %s134, 1
        %s440 = scalar_lea.vmem [#allocation8], %s439
        %p441 = pneg %p147
        %p442 = pneg %p144
        %s443 = sand.u32 %s32, 1
        %s444 = scalar_lea.sflag [#allocation9], %s443
        %s445 = sand.u32 %s160, 1
        %s446 = scalar_lea.vmem [#allocation10], %s445
        %p447 = pneg %p173
        %p448 = pneg %p170
        %s449 = sand.u32 %s186, 1
        %s450 = scalar_lea.sflag [#allocation12], %s449
        %s451 = sand.u32 %s186, 1
        %s452 = scalar_lea.vmem [#allocation11], %s451
        %p453 = pneg %p199
        %p454 = pneg %p196
        %p455 = pneg %p227
        %p456 = pneg %p224
        %s457 = sand.u32 %s214, 1
        %s458 = scalar_lea.sflag [#allocation4], %s457
        %s459 = sand.u32 %s214, 1
        %s460 = smul.addr %s459, 64
        %s461 = scalar_lea.vmem [#allocation13], %s460
        %s462 = smul.u32 8, %s37
        %s463 = smul.u32 8, %s37
        %s464 = smul.u32 8, %s37
        %v465 = vld [vmem:[%s371] sm:$0xf]
        %v466 = vld [vmem:[%s371 + $0x4] sm:$0xf]
        %v467 = vld [vmem:[%s371 + $0x8] sm:$0xf]
        %v468 = vld [vmem:[%s371 + $0xc] sm:$0xf]
        %v469 = vld [vmem:[%s371 + $0x10] sm:$0xf]
        %v470 = vld [vmem:[%s371 + $0x14] sm:$0xf]
        %v471 = vld [vmem:[%s371 + $0x18] sm:$0xf]
        %v472 = vld [vmem:[%s371 + $0x1c] sm:$0xf]
        %v473 = vunpack.c.l.bf16 %v465
        %v474 = vunpack.c.l.bf16 %v466
        %v475 = vunpack.c.l.bf16 %v467
        %v476 = vunpack.c.l.bf16 %v468
        %v477 = vunpack.c.l.bf16 %v469
        %v478 = vunpack.c.l.bf16 %v470
        %v479 = vunpack.c.l.bf16 %v471
        %v480 = vunpack.c.l.bf16 %v472
        %v481 = vld [vmem:[%s388] sm:$0x1]
        %v483 = vlaneseq
        %v484 = vshrl.u32 %v483, 7
        %v485 = vsub.s32 0, %v484
        %v486 = vrot.slane %v481, %v485
        %v488 = vmul.f32 %v473, %v486
        %v489 = vmul.f32 %v474, %v486
        %v490 = vmul.f32 %v475, %v486
        %v491 = vmul.f32 %v476, %v486
        %v492 = vmul.f32 %v477, %v486
        %v493 = vmul.f32 %v478, %v486
        %v494 = vmul.f32 %v479, %v486
        %v495 = vmul.f32 %v480, %v486
        %v496 = vld [vmem:[%s396] sm:$0x1]
        %v498 = vlaneseq
        %v499 = vshrl.u32 %v498, 7
        %v500 = vsub.s32 0, %v499
        %v501 = vrot.slane %v496, %v500
        %v503 = vadd.f32 %v488, %v501
        %v504 = vadd.f32 %v489, %v501
        %v505 = vadd.f32 %v490, %v501
        %v506 = vadd.f32 %v491, %v501
        %v507 = vadd.f32 %v492, %v501
        %v508 = vadd.f32 %v493, %v501
        %v509 = vadd.f32 %v494, %v501
        %v510 = vadd.f32 %v495, %v501
        %v511 = vld [vmem:[%s380] sm:$0xf]
        %v512 = vld [vmem:[%s380 + $0x4] sm:$0xf]
        %v513 = vld [vmem:[%s380 + $0x8] sm:$0xf]
        %v514 = vld [vmem:[%s380 + $0xc] sm:$0xf]
        %v515 = vld [vmem:[%s380 + $0x10] sm:$0xf]
        %v516 = vld [vmem:[%s380 + $0x14] sm:$0xf]
        %v517 = vld [vmem:[%s380 + $0x18] sm:$0xf]
        %v518 = vld [vmem:[%s380 + $0x1c] sm:$0xf]
        %v519 = vunpack.c.l.bf16 %v511
        %v520 = vunpack.c.l.bf16 %v512
        %v521 = vunpack.c.l.bf16 %v513
        %v522 = vunpack.c.l.bf16 %v514
        %v523 = vunpack.c.l.bf16 %v515
        %v524 = vunpack.c.l.bf16 %v516
        %v525 = vunpack.c.l.bf16 %v517
        %v526 = vunpack.c.l.bf16 %v518
        %v527 = vld [vmem:[%s404] sm:$0x1]
        %v529 = vlaneseq
        %v530 = vshrl.u32 %v529, 7
        %v531 = vsub.s32 0, %v530
        %v532 = vrot.slane %v527, %v531
        %v534 = vmul.f32 %v519, %v532
        %v535 = vmul.f32 %v520, %v532
        %v536 = vmul.f32 %v521, %v532
        %v537 = vmul.f32 %v522, %v532
        %v538 = vmul.f32 %v523, %v532
        %v539 = vmul.f32 %v524, %v532
        %v540 = vmul.f32 %v525, %v532
        %v541 = vmul.f32 %v526, %v532
        %v542 = vld [vmem:[%s412] sm:$0x1]
        %v544 = vlaneseq
        %v545 = vshrl.u32 %v544, 7
        %v546 = vsub.s32 0, %v545
        %v547 = vrot.slane %v542, %v546
        %v549 = vadd.f32 %v534, %v547
        %v550 = vadd.f32 %v535, %v547
        %v551 = vadd.f32 %v536, %v547
        %v552 = vadd.f32 %v537, %v547
        %v553 = vadd.f32 %v538, %v547
        %v554 = vadd.f32 %v539, %v547
        %v555 = vadd.f32 %v540, %v547
        %v556 = vadd.f32 %v541, %v547
        %v557 = vadd.f32 %v503, %v549
        %v558 = vadd.f32 %v504, %v550
        %v559 = vadd.f32 %v505, %v551
        %v560 = vadd.f32 %v506, %v552
        %v561 = vadd.f32 %v507, %v553
        %v562 = vadd.f32 %v508, %v554
        %v563 = vadd.f32 %v509, %v555
        %v564 = vadd.f32 %v510, %v556
        %v565 = vmax.f32 %v557, 0.0
        %v566 = vmax.f32 %v558, 0.0
        %v567 = vmax.f32 %v559, 0.0
        %v568 = vmax.f32 %v560, 0.0
        %v569 = vmax.f32 %v561, 0.0
        %v570 = vmax.f32 %v562, 0.0
        %v571 = vmax.f32 %v563, 0.0
        %v572 = vmax.f32 %v564, 0.0
        %573 = vst [vmem:[%s461] sm:$0xff] %v565
        %574 = vst [vmem:[%s461 + $0x8] sm:$0xff] %v566
        %575 = vst [vmem:[%s461 + $0x10] sm:$0xff] %v567
        %576 = vst [vmem:[%s461 + $0x18] sm:$0xff] %v568
        %577 = vst [vmem:[%s461 + $0x20] sm:$0xff] %v569
        %578 = vst [vmem:[%s461 + $0x28] sm:$0xff] %v570
        %579 = vst [vmem:[%s461 + $0x30] sm:$0xff] %v571
        %580 = vst [vmem:[%s461 + $0x38] sm:$0xff] %v572
        %s581 = sand.u32 %s214, 1
        %s582 = scalar_lea.sflag [#allocation4], %s581
        %s583 = sand.u32 %s214, 1
        %s584 = smul.addr %s583, 64
        %s585 = scalar_lea.vmem [#allocation13], %s584
        // Predicated region
        $region69: #{basic_block_ws_forward.9} parent=43 // pred_check
          %p586 = pneg %p224
        $region70: #{basic_block_ws_forward.9} parent=43 // pred_check_branch
          %588 = sbr.rel (%p586) target = $region72
        $region71: #{basic_block_ws_forward.9} parent=43 // pred_region
          %s589 = smul.u32 8, %s37
          %s591 = ssub.s32 1024, 1024
          %592 = vsyncadd %s582, %s591
          %s593 = smul.addr %s36, 8
          %s594 = sadd.s32 %s589, %s593
          %s595 = smul.addr %s594, 128
          %s596 = scalar_lea.hbm %s6, %s595
          %s597 = sshll.u32 %s585, 4
          %s598 = int_to_ptr.vmem [resolvable:$true] %s597
          %603 = dma.vmem_to_hbm [thread:$0]  %s598, 1024, %s596, %s582, 128, 128, 8
        $region72: #{basic_block_ws_forward.9} parent=43 // pred_fallthru
          _
      $region44: #{basic_block_ws_forward.9} parent=5 // pred_fallthru
        _
      %p604 = scmp.le.s32.totalorder 2, %s27
      // Predicated region
      $region73: #{basic_block_ws_forward.9} parent=5 // pred_check
        %p605 = pneg %p604
      $region74: #{basic_block_ws_forward.9} parent=5 // pred_check_branch
        %607 = sbr.rel (%p605) target = $region76
      $region75: #{basic_block_ws_forward.9} parent=5 // pred_region
        %s608 = ssub.s32 %s27, 2
        // Predicated region
        $region77: #{basic_block_ws_forward.9} parent=75 // pred_check
          %p609 = pneg %p230
        $region78: #{basic_block_ws_forward.9} parent=75 // pred_check_branch
          %611 = sbr.rel (%p609) target = $region80
        $region79: #{basic_block_ws_forward.9} parent=75 // pred_region
          %s612 = sand.u32 %s215, 1
          %s613 = scalar_lea.sflag [#allocation4], %s612
          %s614 = sand.u32 %s215, 1
          %s615 = smul.addr %s614, 64
          %s616 = scalar_lea.vmem [#allocation13], %s615
          %617 = dma.done %s613, 1024
        $region80: #{basic_block_ws_forward.9} parent=75 // pred_fallthru
          _
      $region76: #{basic_block_ws_forward.9} parent=5 // pred_fallthru
        _
    $region6: #{basic_block_ws_forward.9} parent=1 // loop_footer
      %s31 = sadd.s32 1, %s27
    $region7: #{basic_block_ws_forward.9} parent=1 // loop_footer_branch
      %26 = sbr.rel target = $region3
    $region8: #{basic_block_ws_forward.9} parent=1 // loop_exit
      _
    %618 = vsyncpa [#allocation3], 1
    %s619 = scalar_lea.sflag [#allocation3], 1
    %620 = vsyncpa %s619, 1
    %621 = vsyncpa [#allocation6], 1
    %s622 = scalar_lea.sflag [#allocation6], 1
    %623 = vsyncpa %s622, 1
    %624 = vsyncpa [#allocation9], 1
    %s625 = scalar_lea.sflag [#allocation9], 1
    %626 = vsyncpa %s625, 1
    %627 = vsyncpa [#allocation12], 1
    %s628 = scalar_lea.sflag [#allocation12], 1
    %629 = vsyncpa %s628, 1
    %630 = vsyncpa [#allocation4], 1
    %s631 = scalar_lea.sflag [#allocation4], 1
    %632 = vsyncpa %s631, 1

// kernel: basic_block_ws_forward.7
$region0: #{basic_block_ws_forward.7}
  #allocation0 [shape = 'u32[]', space=smem, size = 0x4, offset = 0x4, fixed_abs, tag = 'smem constant byte address 0x4 - core index']
  #allocation1 [shape = 'u32[144,128]{1,0:T(1,128)}', space=vmem, size = 0x12000, scoped, tag = 'internal scratch']
  %s0 = inlined_call_operand.hbm [shape: bf16[2,10,10,128], index: 0, kind: input, shape index: {}]
  %s1 = inlined_call_operand.hbm [shape: bf16[5,256,128], index: 1, kind: input, shape index: {}]
  %s2 = inlined_call_operand.hbm [shape: bf16[2,64,128], index: 2, kind: output, shape index: {0}]
  %s3 = inlined_call_operand.hbm [shape: f32[2,1,2,128], index: 3, kind: output, shape index: {1}]
  %4 = xla_tuple %s2, %s3
  %s5 = sld [smem:[#allocation0]]
  $region57: #{basic_block_ws_forward.7} parent=0
    _
  %s7 = ssub.s32 1, %s5
  %s8 = scalar_select 0, %s7, %s5
  $region1: #{basic_block_ws_forward.7} parent=0
    #allocation2 [shape = 'u8[81920]{0}', space=vmem, size = 0x14000, scoped, tag = 'input window, operand 0']
    #allocation3 [shape = 's32[2]{0}', space=sflag, size = 0x8, scoped, tag = 'scoped memory for basic_block_ws_forward.7']
    #allocation4 [shape = 's32[2]{0}', space=sflag, size = 0x8, scoped, tag = 'scoped memory for basic_block_ws_forward.7']
    #allocation5 [shape = 'u8[327680]{0}', space=vmem, size = 0x50000, scoped, tag = 'input window, operand 1, single buffered']
    #allocation6 [shape = 's32[1]{0}', space=sflag, size = 0x4, scoped, tag = 'scoped memory for basic_block_ws_forward.7']
    #allocation7 [shape = 'u8[32768]{0}', space=vmem, size = 0x8000, scoped, tag = 'output window, operand 0']
    #allocation8 [shape = 'u8[2048]{0}', space=vmem, size = 0x800, scoped, tag = 'output window, operand 1']
    #allocation9 [shape = 's32[2]{0}', space=sflag, size = 0x8, scoped, tag = 'scoped memory for basic_block_ws_forward.7']
    %9 = vsyncpa [#allocation3], 0
    %s10 = scalar_lea.sflag [#allocation3], 1
    %11 = vsyncpa %s10, 0
    %12 = vsyncpa [#allocation6], 0
    %13 = vsyncpa [#allocation4], 0
    %s14 = scalar_lea.sflag [#allocation4], 1
    %15 = vsyncpa %s14, 0
    %16 = vsyncpa [#allocation9], 0
    %s17 = scalar_lea.sflag [#allocation9], 1
    %18 = vsyncpa %s17, 0
    loop: start=0, step=1, limit=4
    $region2: #{basic_block_ws_forward.7} parent=1 // loop_pre_header
      _
    $region3: #{basic_block_ws_forward.7} parent=1 // loop_header
      %s20 = sphi 0, %s24
      %p21 = scmp.ge.s32.totalorder %s20, 4
      %s27 = sphi 0, %s39
      %s28 = sphi 0, %s35
      %s29 = sphi 0, %s27
      %s30 = sphi 0, %s28
      %s31 = sphi 0, %s29
      %s32 = sphi 0, %s30
      %s42 = sphi 0, %s44
      %s45 = sphi 0, %s42
      %s46 = sphi 0, %s45
      %s62 = sphi 0, %s46
      %s66 = sphi 0, %s66
      %s68 = sphi 0, %s66
      %s69 = sphi 0, %s68
      %s83 = sphi 0, %s69
      %s91 = sphi 0, %s93
      %s94 = sphi 0, %s91
      %s95 = sphi 0, %s94
      %s111 = sphi 0, %s95
      %s119 = sphi 0, %s121
      %s122 = sphi 0, %s119
      %s123 = sphi 0, %s122
      %s139 = sphi 0, %s123
    $region4: #{basic_block_ws_forward.7} parent=1 // loop_header_branch
      %23 = sbr.rel (%p21) target = $region8
    $region5: #{basic_block_ws_forward.7} parent=1 // loop_body
      %s25 = ssub.s32 %s20, 1
      %s26 = ssub.s32 %s20, 2
      %s33 = sadd.s32 1, %s28
      %p34 = scmp.ge.s32.totalorder %s33, 1
      %s35 = scalar_select %p34, 0, %s33
      %s36 = sadd.s32 1, %s27
      %s37 = scalar_select %p34, %s36, %s27
      %p38 = scmp.ge.s32.totalorder %s37, 2
      %s39 = scalar_select %p38, 0, %s37
      %s40 = ssub.s32 %s27, %s39
      %p41 = scmp.eq.s32.totalorder %s40, 0
      %s43 = sadd.s32 %s42, 1
      %s44 = scalar_select %p41, %s42, %s43
      %p47 = pneg %p41
      %p48 = scmp.eq.s32.totalorder %s20, 1
      %p49 = por %p47, %p48
      %p50 = scmp.ne.s32.totalorder %s42, %s45
      %p51 = scmp.eq.s32.totalorder %s20, 0
      %p52 = por %p50, %p51
      %p53 = scmp.ne.s32.totalorder %s42, %s45
      %p54 = scmp.eq.s32.totalorder %s25, 1
      %p55 = por %p53, %p54
      %p56 = scmp.ne.s32.totalorder %s45, %s46
      %p57 = scmp.eq.s32.totalorder %s25, 0
      %p58 = por %p56, %p57
      %p59 = scmp.ne.s32.totalorder %s45, %s46
      %p60 = scmp.eq.s32.totalorder %s26, 1
      %p61 = por %p59, %p60
      %p63 = scmp.ne.s32.totalorder %s46, %s62
      %p64 = scmp.eq.s32.totalorder %s26, 0
      %p65 = por %p63, %p64
      %s67 = sadd.s32 %s66, 1
      %p70 = scmp.eq.s32.totalorder %s20, 1
      %p71 = scmp.ne.s32.totalorder %s66, %s68
      %p72 = scmp.eq.s32.totalorder %s20, 0
      %p73 = por %p71, %p72
      %p74 = scmp.ne.s32.totalorder %s66, %s68
      %p75 = scmp.eq.s32.totalorder %s25, 1
      %p76 = por %p74, %p75
      %p77 = scmp.ne.s32.totalorder %s68, %s69
      %p78 = scmp.eq.s32.totalorder %s25, 0
      %p79 = por %p77, %p78
      %p80 = scmp.ne.s32.totalorder %s68, %s69
      %p81 = scmp.eq.s32.totalorder %s26, 1
      %p82 = por %p80, %p81
      %p84 = scmp.ne.s32.totalorder %s69, %s83
      %p85 = scmp.eq.s32.totalorder %s26, 0
      %p86 = por %p84, %p85
      %s87 = ssub.s32 %s27, %s39
      %s88 = ssub.s32 %s28, %s35
      %s89 = sor.u32 %s87, %s88
      %p90 = scmp.eq.s32.totalorder %s89, 0
      %s92 = sadd.s32 %s91, 1
      %s93 = scalar_select %p90, %s91, %s92
      %p96 = pneg %p90
      %p97 = scmp.eq.s32.totalorder %s20, 1
      %p98 = por %p96, %p97
      %p99 = scmp.ne.s32.totalorder %s91, %s94
      %p100 = scmp.eq.s32.totalorder %s20, 0
      %p101 = por %p99, %p100
      %p102 = scmp.ne.s32.totalorder %s91, %s94
      %p103 = scmp.eq.s32.totalorder %s25, 1
      %p104 = por %p102, %p103
      %p105 = scmp.ne.s32.totalorder %s94, %s95
      %p106 = scmp.eq.s32.totalorder %s25, 0
      %p107 = por %p105, %p106
      %p108 = scmp.ne.s32.totalorder %s94, %s95
      %p109 = scmp.eq.s32.totalorder %s26, 1
      %p110 = por %p108, %p109
      %p112 = scmp.ne.s32.totalorder %s95, %s111
      %p113 = scmp.eq.s32.totalorder %s26, 0
      %p114 = por %p112, %p113
      %s115 = ssub.s32 %s27, %s39
      %s116 = ssub.s32 %s28, %s35
      %s117 = sor.u32 %s115, %s116
      %p118 = scmp.eq.s32.totalorder %s117, 0
      %s120 = sadd.s32 %s119, 1
      %s121 = scalar_select %p118, %s119, %s120
      %p124 = pneg %p118
      %p125 = scmp.eq.s32.totalorder %s20, 1
      %p126 = por %p124, %p125
      %p127 = scmp.ne.s32.totalorder %s119, %s122
      %p128 = scmp.eq.s32.totalorder %s20, 0
      %p129 = por %p127, %p128
      %p130 = scmp.ne.s32.totalorder %s119, %s122
      %p131 = scmp.eq.s32.totalorder %s25, 1
      %p132 = por %p130, %p131
      %p133 = scmp.ne.s32.totalorder %s122, %s123
      %p134 = scmp.eq.s32.totalorder %s25, 0
      %p135 = por %p133, %p134
      %p136 = scmp.ne.s32.totalorder %s122, %s123
      %p137 = scmp.eq.s32.totalorder %s26, 1
      %p138 = por %p136, %p137
      %p140 = scmp.ne.s32.totalorder %s123, %s139
      %p141 = scmp.eq.s32.totalorder %s26, 0
      %p142 = por %p140, %p141
      %p143 = scmp.le.s32.totalorder 1, %s20
      %p144 = scmp.lt.s32.totalorder %s20, 3
      %p145 = pnand %p143, %p144
      %p146 = pneg %p145
      // Predicated region
      $region9: #{basic_block_ws_forward.7} parent=5 // pred_check
        _
      $region10: #{basic_block_ws_forward.7} parent=5 // pred_check_branch
        %148 = sbr.rel (%p145) target = $region12
      $region11: #{basic_block_ws_forward.7} parent=5 // pred_region
        %s149 = ssub.s32 %s20, 1
        // Predicated region
        $region13: #{basic_block_ws_forward.7} parent=11 // pred_check
          %p150 = pneg %p79
        $region14: #{basic_block_ws_forward.7} parent=11 // pred_check_branch
          %152 = sbr.rel (%p150) target = $region16
        $region15: #{basic_block_ws_forward.7} parent=11 // pred_region
          %s154 = ssub.s32 10240, 10240
          %155 = vsyncadd [#allocation6], %s154
          %s156 = sshll.u32 [#allocation5], 4
          %s157 = int_to_ptr.vmem [resolvable:$true] %s156
          %162 = dma.hbm_to_vmem [thread:$0]  %s1, 10240, %s157, [#allocation6], 64, 64, 4
        $region16: #{basic_block_ws_forward.7} parent=11 // pred_fallthru
          _
      $region12: #{basic_block_ws_forward.7} parent=5 // pred_fallthru
        _
      %p163 = scmp.lt.s32.totalorder %s20, 2
      // Predicated region
      $region17: #{basic_block_ws_forward.7} parent=5 // pred_check
        %p164 = pneg %p163
      $region18: #{basic_block_ws_forward.7} parent=5 // pred_check_branch
        %166 = sbr.rel (%p164) target = $region20
      $region19: #{basic_block_ws_forward.7} parent=5 // pred_region
        // Predicated region
        $region21: #{basic_block_ws_forward.7} parent=19 // pred_check
          %p167 = pneg %p52
        $region22: #{basic_block_ws_forward.7} parent=19 // pred_check_branch
          %169 = sbr.rel (%p167) target = $region24
        $region23: #{basic_block_ws_forward.7} parent=19 // pred_region
          %s170 = sand.u32 %s42, 1
          %s171 = scalar_lea.sflag [#allocation3], %s170
          %s172 = sand.u32 %s42, 1
          %s173 = smul.addr %s172, 80
          %s174 = scalar_lea.vmem [#allocation2], %s173
          %s176 = ssub.s32 1280, 1280
          %177 = vsyncadd %s171, %s176
          %s178 = smul.addr %s27, 20
          %s179 = smul.addr %s178, 64
          %s180 = scalar_lea.hbm %s0, %s179
          %s181 = sshll.u32 %s174, 4
          %s182 = int_to_ptr.vmem [resolvable:$true] %s181
          %187 = dma.hbm_to_vmem [thread:$0]  %s180, 1280, %s182, %s171, 64, 64, 4
        $region24: #{basic_block_ws_forward.7} parent=19 // pred_fallthru
          _
      $region20: #{basic_block_ws_forward.7} parent=5 // pred_fallthru
        _
      %p188 = scmp.le.s32.totalorder 1, %s20
      %p189 = scmp.lt.s32.totalorder %s20, 3
      %p190 = pnand %p188, %p189
      %p191 = pneg %p190
      // Predicated region
      $region25: #{basic_block_ws_forward.7} parent=5 // pred_check
        _
      $region26: #{basic_block_ws_forward.7} parent=5 // pred_check_branch
        %193 = sbr.rel (%p190) target = $region28
      $region27: #{basic_block_ws_forward.7} parent=5 // pred_region
        %s194 = ssub.s32 %s20, 1
        %s195 = sand.u32 %s45, 1
        %s196 = scalar_lea.sflag [#allocation3], %s195
        %s197 = sand.u32 %s45, 1
        %s198 = smul.addr %s197, 80
        %s199 = scalar_lea.vmem [#allocation2], %s198
        // Predicated region
        $region29: #{basic_block_ws_forward.7} parent=27 // pred_check
          %p200 = pneg %p58
        $region30: #{basic_block_ws_forward.7} parent=27 // pred_check_branch
          %202 = sbr.rel (%p200) target = $region32
        $region31: #{basic_block_ws_forward.7} parent=27 // pred_region
          %203 = dma.done %s196, 1280
        $region32: #{basic_block_ws_forward.7} parent=27 // pred_fallthru
          _
        // Predicated region
        $region33: #{basic_block_ws_forward.7} parent=27 // pred_check
          %p204 = pneg %p79
        $region34: #{basic_block_ws_forward.7} parent=27 // pred_check_branch
          %206 = sbr.rel (%p204) target = $region36
        $region35: #{basic_block_ws_forward.7} parent=27 // pred_region
          %207 = dma.done [#allocation6], 10240
        $region36: #{basic_block_ws_forward.7} parent=27 // pred_fallthru
          _
        %s208 = sand.u32 %s45, 1
        %s209 = scalar_lea.sflag [#allocation3], %s208
        %s210 = sand.u32 %s45, 1
        %s211 = smul.addr %s210, 80
        %s212 = scalar_lea.vmem [#allocation2], %s211
        %p213 = pneg %p58
        %p214 = pneg %p55
        %p215 = pneg %p79
        %p216 = pneg %p76
        %p217 = pneg %p107
        %p218 = pneg %p104
        %s219 = sand.u32 %s94, 1
        %s220 = scalar_lea.sflag [#allocation4], %s219
        %s221 = sand.u32 %s94, 1
        %s222 = smul.addr %s221, 32
        %s223 = scalar_lea.vmem [#allocation7], %s222
        %p224 = pneg %p135
        %p225 = pneg %p132
        %s226 = sand.u32 %s122, 1
        %s227 = scalar_lea.sflag [#allocation9], %s226
        %s228 = sand.u32 %s122, 1
        %s229 = smul.addr %s228, 2
        %s230 = scalar_lea.vmem [#allocation8], %s229
        %s231 = smul.u32 8, %s30
        %s233 = smul.u32 %s30, 8
        %s234 = smul.u32 %s233, 2
        %s235 = smul.addr %s234, 4
        %s236 = scalar_lea.vmem %s199, %s235 [#allocation2]
        %v237 = vld [vmem:[%s236] sm:$0xf]
        %v238 = vld [vmem:[%s236 + $0x8] sm:$0xf]
        %v239 = vld [vmem:[%s236 + $0x10] sm:$0xf]
        %v240 = vld [vmem:[%s236 + $0x18] sm:$0xf]
        %v241 = vld [vmem:[%s236 + $0x20] sm:$0xf]
        %v242 = vld [vmem:[%s236 + $0x28] sm:$0xf]
        %v243 = vld [vmem:[%s236 + $0x30] sm:$0xf]
        %v244 = vld [vmem:[%s236 + $0x38] sm:$0xf]
        %v245 = vld [vmem:[%s236 + $0x4] sm:$0x1]
        %v246 = vld [vmem:[%s236 + $0xc] sm:$0x1]
        %v247 = vld [vmem:[%s236 + $0x14] sm:$0x1]
        %v248 = vld [vmem:[%s236 + $0x1c] sm:$0x1]
        %v249 = vld [vmem:[%s236 + $0x24] sm:$0x1]
        %v250 = vld [vmem:[%s236 + $0x2c] sm:$0x1]
        %v251 = vld [vmem:[%s236 + $0x34] sm:$0x1]
        %v252 = vld [vmem:[%s236 + $0x3c] sm:$0x1]
        %vm253 = vsmask.f32 3328
        %vm254 = vsmask.f32 7440
        %vm255 = vmor %vm253, %vm254
        %v257 = vshrl.u32 %v237, 16
        %v259 = vrot.slane %v257, 4
        %v260 = vshll.u32 %v237, 16
        %v262 = vrot.slane %v260, 5
        %v263 = vor.u32 %v259, %v262
        %v264 = vrot.slane %v263, 4
        %v266 = vshll.u32 %v245, 16
        %v268 = vrot.slane %v266, 5
        %v269 = vsel %vm255, %v264, %v268
        %v271 = vshrl.u32 %v238, 16
        %v273 = vrot.slane %v271, 4
        %v274 = vshll.u32 %v238, 16
        %v276 = vrot.slane %v274, 5
        %v277 = vor.u32 %v273, %v276
        %v278 = vrot.slane %v277, 4
        %v280 = vshll.u32 %v246, 16
        %v282 = vrot.slane %v280, 5
        %v283 = vsel %vm255, %v278, %v282
        %v285 = vshrl.u32 %v239, 16
        %v287 = vrot.slane %v285, 4
        %v288 = vshll.u32 %v239, 16
        %v290 = vrot.slane %v288, 5
        %v291 = vor.u32 %v287, %v290
        %v292 = vrot.slane %v291, 4
        %v294 = vshll.u32 %v247, 16
        %v296 = vrot.slane %v294, 5
        %v297 = vsel %vm255, %v292, %v296
        %v299 = vshrl.u32 %v240, 16
        %v301 = vrot.slane %v299, 4
        %v302 = vshll.u32 %v240, 16
        %v304 = vrot.slane %v302, 5
        %v305 = vor.u32 %v301, %v304
        %v306 = vrot.slane %v305, 4
        %v308 = vshll.u32 %v248, 16
        %v310 = vrot.slane %v308, 5
        %v311 = vsel %vm255, %v306, %v310
        %v313 = vshrl.u32 %v241, 16
        %v315 = vrot.slane %v313, 4
        %v316 = vshll.u32 %v241, 16
        %v318 = vrot.slane %v316, 5
        %v319 = vor.u32 %v315, %v318
        %v320 = vrot.slane %v319, 4
        %v322 = vshll.u32 %v249, 16
        %v324 = vrot.slane %v322, 5
        %v325 = vsel %vm255, %v320, %v324
        %v327 = vshrl.u32 %v242, 16
        %v329 = vrot.slane %v327, 4
        %v330 = vshll.u32 %v242, 16
        %v332 = vrot.slane %v330, 5
        %v333 = vor.u32 %v329, %v332
        %v334 = vrot.slane %v333, 4
        %v336 = vshll.u32 %v250, 16
        %v338 = vrot.slane %v336, 5
        %v339 = vsel %vm255, %v334, %v338
        %v341 = vshrl.u32 %v243, 16
        %v343 = vrot.slane %v341, 4
        %v344 = vshll.u32 %v243, 16
        %v346 = vrot.slane %v344, 5
        %v347 = vor.u32 %v343, %v346
        %v348 = vrot.slane %v347, 4
        %v350 = vshll.u32 %v251, 16
        %v352 = vrot.slane %v350, 5
        %v353 = vsel %vm255, %v348, %v352
        %v355 = vshrl.u32 %v244, 16
        %v357 = vrot.slane %v355, 4
        %v358 = vshll.u32 %v244, 16
        %v360 = vrot.slane %v358, 5
        %v361 = vor.u32 %v357, %v360
        %v362 = vrot.slane %v361, 4
        %v364 = vshll.u32 %v252, 16
        %v366 = vrot.slane %v364, 5
        %v367 = vsel %vm255, %v362, %v366
        %v376 = vunpack.c.l.b16 %v237
        %v377 = vunpack.c.l.b16 %v238
        %v378 = vunpack.c.l.b16 %v239
        %v379 = vunpack.c.l.b16 %v240
        %v380 = vunpack.c.l.b16 %v241
        %v381 = vunpack.c.l.b16 %v242
        %v382 = vunpack.c.l.b16 %v243
        %v383 = vunpack.c.l.b16 %v244
        %v384 = vpack.c.b16 %v377, %v376
        %v385 = vpack.c.b16 %v379, %v378
        %v386 = vpack.c.b16 %v381, %v380
        %v387 = vpack.c.b16 %v383, %v382
        %v392 = vunpack.c.l.b16 %v269
        %v393 = vunpack.c.l.b16 %v283
        %v394 = vunpack.c.l.b16 %v297
        %v395 = vunpack.c.l.b16 %v311
        %v396 = vunpack.c.l.b16 %v325
        %v397 = vunpack.c.l.b16 %v339
        %v398 = vunpack.c.l.b16 %v353
        %v399 = vunpack.c.l.b16 %v367
        %v400 = vpack.c.b16 %v393, %v392
        %v401 = vpack.c.b16 %v395, %v394
        %v402 = vpack.c.b16 %v397, %v396
        %v403 = vpack.c.b16 %v399, %v398
        %v408 = vld [vmem:[#allocation5] sm:$0xf]
        %v409 = vld [vmem:[#allocation5 + $0x4] sm:$0xf]
        %v410 = vld [vmem:[#allocation5 + $0x8] sm:$0xf]
        %v411 = vld [vmem:[#allocation5 + $0xc] sm:$0xf]
        %v412 = vld [vmem:[#allocation5 + $0x10] sm:$0xf]
        %v413 = vld [vmem:[#allocation5 + $0x14] sm:$0xf]
        %v414 = vld [vmem:[#allocation5 + $0x18] sm:$0xf]
        %v415 = vld [vmem:[#allocation5 + $0x1c] sm:$0xf]
        %v416 = vld [vmem:[#allocation5 + $0x20] sm:$0xf]
        %v417 = vld [vmem:[#allocation5 + $0x24] sm:$0xf]
        %v418 = vld [vmem:[#allocation5 + $0x28] sm:$0xf]
        %v419 = vld [vmem:[#allocation5 + $0x2c] sm:$0xf]
        %v420 = vld [vmem:[#allocation5 + $0x30] sm:$0xf]
        %v421 = vld [vmem:[#allocation5 + $0x34] sm:$0xf]
        %v422 = vld [vmem:[#allocation5 + $0x38] sm:$0xf]
        %v423 = vld [vmem:[#allocation5 + $0x3c] sm:$0xf]
        %v424 = vld [vmem:[#allocation5 + $0x40] sm:$0xf]
        %v425 = vld [vmem:[#allocation5 + $0x44] sm:$0xf]
        %v426 = vld [vmem:[#allocation5 + $0x48] sm:$0xf]
        %v427 = vld [vmem:[#allocation5 + $0x4c] sm:$0xf]
        %v428 = vld [vmem:[#allocation5 + $0x50] sm:$0xf]
        %v429 = vld [vmem:[#allocation5 + $0x54] sm:$0xf]
        %v430 = vld [vmem:[#allocation5 + $0x58] sm:$0xf]
        %v431 = vld [vmem:[#allocation5 + $0x5c] sm:$0xf]
        %v432 = vld [vmem:[#allocation5 + $0x60] sm:$0xf]
        %v433 = vld [vmem:[#allocation5 + $0x64] sm:$0xf]
        %v434 = vld [vmem:[#allocation5 + $0x68] sm:$0xf]
        %v435 = vld [vmem:[#allocation5 + $0x6c] sm:$0xf]
        %v436 = vld [vmem:[#allocation5 + $0x70] sm:$0xf]
        %v437 = vld [vmem:[#allocation5 + $0x74] sm:$0xf]
        %v438 = vld [vmem:[#allocation5 + $0x78] sm:$0xf]
        %v439 = vld [vmem:[#allocation5 + $0x7c] sm:$0xf]
        %v440 = vld [vmem:[%s236] sm:$0xe]
        %v441 = vld [vmem:[%s236 + $0x8] sm:$0xe]
        %v442 = vld [vmem:[%s236 + $0x10] sm:$0xe]
        %v443 = vld [vmem:[%s236 + $0x18] sm:$0xe]
        %v444 = vld [vmem:[%s236 + $0x20] sm:$0xe]
        %v445 = vld [vmem:[%s236 + $0x28] sm:$0xe]
        %v446 = vld [vmem:[%s236 + $0x30] sm:$0xe]
        %v447 = vld [vmem:[%s236 + $0x38] sm:$0xe]
        %vm464 = vcmask 1042432
        %vm465 = vcmask 1046532
        %vm466 = vmor %vm464, %vm465
        %v467 = vrot.slane %v440, 5
        %v468 = vrot.slane %v467, 4
        %v469 = vrot.slane %v245, 5
        %v470 = vsel %vm466, %v468, %v469
        %v471 = vrot.slane %v441, 5
        %v472 = vrot.slane %v471, 4
        %v473 = vrot.slane %v246, 5
        %v474 = vsel %vm466, %v472, %v473
        %v475 = vrot.slane %v442, 5
        %v476 = vrot.slane %v475, 4
        %v477 = vrot.slane %v247, 5
        %v478 = vsel %vm466, %v476, %v477
        %v479 = vrot.slane %v443, 5
        %v480 = vrot.slane %v479, 4
        %v481 = vrot.slane %v248, 5
        %v482 = vsel %vm466, %v480, %v481
        %v483 = vrot.slane %v444, 5
        %v484 = vrot.slane %v483, 4
        %v485 = vrot.slane %v249, 5
        %v486 = vsel %vm466, %v484, %v485
        %v487 = vrot.slane %v445, 5
        %v488 = vrot.slane %v487, 4
        %v489 = vrot.slane %v250, 5
        %v490 = vsel %vm466, %v488, %v489
        %v491 = vrot.slane %v446, 5
        %v492 = vrot.slane %v491, 4
        %v493 = vrot.slane %v251, 5
        %v494 = vsel %vm466, %v492, %v493
        %v495 = vrot.slane %v447, 5
        %v496 = vrot.slane %v495, 4
        %v497 = vrot.slane %v252, 5
        %v498 = vsel %vm466, %v496, %v497
        %s499 = sadd.s32 %s233, 1
        %s500 = smul.u32 %s499, 2
        %s501 = smul.addr %s500, 4
        %s502 = scalar_lea.vmem %s199, %s501 [#allocation2]
        %v503 = vld [vmem:[%s502] sm:$0xf]
        %v504 = vld [vmem:[%s502 + $0x8] sm:$0xf]
        %v505 = vld [vmem:[%s502 + $0x10] sm:$0xf]
        %v506 = vld [vmem:[%s502 + $0x18] sm:$0xf]
        %v507 = vld [vmem:[%s502 + $0x20] sm:$0xf]
        %v508 = vld [vmem:[%s502 + $0x28] sm:$0xf]
        %v509 = vld [vmem:[%s502 + $0x30] sm:$0xf]
        %v510 = vld [vmem:[%s502 + $0x38] sm:$0xf]
        %v511 = vunpack.c.l.b16 %v470
        %v512 = vunpack.c.l.b16 %v474
        %v513 = vunpack.c.l.b16 %v478
        %v514 = vunpack.c.l.b16 %v482
        %v515 = vunpack.c.l.b16 %v486
        %v516 = vunpack.c.l.b16 %v490
        %v517 = vunpack.c.l.b16 %v494
        %v518 = vunpack.c.l.b16 %v498
        %v519 = vpack.c.b16 %v512, %v511
        %v520 = vpack.c.b16 %v514, %v513
        %v521 = vpack.c.b16 %v516, %v515
        %v522 = vpack.c.b16 %v518, %v517
        %v535 = vunpack.c.l.b16 %v503
        %v536 = vunpack.c.l.b16 %v504
        %v537 = vunpack.c.l.b16 %v505
        %v538 = vunpack.c.l.b16 %v506
        %v539 = vunpack.c.l.b16 %v507
        %v540 = vunpack.c.l.b16 %v508
        %v541 = vunpack.c.l.b16 %v509
        %v542 = vunpack.c.l.b16 %v510
        %v543 = vpack.c.b16 %v536, %v535
        %v544 = vpack.c.b16 %v538, %v537
        %v545 = vpack.c.b16 %v540, %v539
        %v546 = vpack.c.b16 %v542, %v541
        %s551 = scalar_lea.vmem [#allocation5], 128
        %v552 = vld [vmem:[%s551] sm:$0xf]
        %v553 = vld [vmem:[%s551 + $0x4] sm:$0xf]
        %v554 = vld [vmem:[%s551 + $0x8] sm:$0xf]
        %v555 = vld [vmem:[%s551 + $0xc] sm:$0xf]
        %v556 = vld [vmem:[%s551 + $0x10] sm:$0xf]
        %v557 = vld [vmem:[%s551 + $0x14] sm:$0xf]
        %v558 = vld [vmem:[%s551 + $0x18] sm:$0xf]
        %v559 = vld [vmem:[%s551 + $0x1c] sm:$0xf]
        %v560 = vld [vmem:[%s551 + $0x20] sm:$0xf]
        %v561 = vld [vmem:[%s551 + $0x24] sm:$0xf]
        %v562 = vld [vmem:[%s551 + $0x28] sm:$0xf]
        %v563 = vld [vmem:[%s551 + $0x2c] sm:$0xf]
        %v564 = vld [vmem:[%s551 + $0x30] sm:$0xf]
        %v565 = vld [vmem:[%s551 + $0x34] sm:$0xf]
        %v566 = vld [vmem:[%s551 + $0x38] sm:$0xf]
        %v567 = vld [vmem:[%s551 + $0x3c] sm:$0xf]
        %v568 = vld [vmem:[%s551 + $0x40] sm:$0xf]
        %v569 = vld [vmem:[%s551 + $0x44] sm:$0xf]
        %v570 = vld [vmem:[%s551 + $0x48] sm:$0xf]
        %v571 = vld [vmem:[%s551 + $0x4c] sm:$0xf]
        %v572 = vld [vmem:[%s551 + $0x50] sm:$0xf]
        %v573 = vld [vmem:[%s551 + $0x54] sm:$0xf]
        %v574 = vld [vmem:[%s551 + $0x58] sm:$0xf]
        %v575 = vld [vmem:[%s551 + $0x5c] sm:$0xf]
        %v576 = vld [vmem:[%s551 + $0x60] sm:$0xf]
        %v577 = vld [vmem:[%s551 + $0x64] sm:$0xf]
        %v578 = vld [vmem:[%s551 + $0x68] sm:$0xf]
        %v579 = vld [vmem:[%s551 + $0x6c] sm:$0xf]
        %v580 = vld [vmem:[%s551 + $0x70] sm:$0xf]
        %v581 = vld [vmem:[%s551 + $0x74] sm:$0xf]
        %v582 = vld [vmem:[%s551 + $0x78] sm:$0xf]
        %v583 = vld [vmem:[%s551 + $0x7c] sm:$0xf]
        %v616 = vunpack.c.l.b16 %v552
        %v617 = vunpack.c.l.b16 %v553
        %v618 = vunpack.c.l.b16 %v554
        %v619 = vunpack.c.l.b16 %v555
        %v620 = vunpack.c.l.b16 %v556
        %v621 = vunpack.c.l.b16 %v557
        %v622 = vunpack.c.l.b16 %v558
        %v623 = vunpack.c.l.b16 %v559
        %v624 = vunpack.c.l.b16 %v560
        %v625 = vunpack.c.l.b16 %v561
        %v626 = vunpack.c.l.b16 %v562
        %v627 = vunpack.c.l.b16 %v563
        %v628 = vunpack.c.l.b16 %v564
        %v629 = vunpack.c.l.b16 %v565
        %v630 = vunpack.c.l.b16 %v566
        %v631 = vunpack.c.l.b16 %v567
        %v632 = vunpack.c.l.b16 %v568
        %v633 = vunpack.c.l.b16 %v569
        %v634 = vunpack.c.l.b16 %v570
        %v635 = vunpack.c.l.b16 %v571
        %v636 = vunpack.c.l.b16 %v572
        %v637 = vunpack.c.l.b16 %v573
        %v638 = vunpack.c.l.b16 %v574
        %v639 = vunpack.c.l.b16 %v575
        %v640 = vunpack.c.l.b16 %v576
        %v641 = vunpack.c.l.b16 %v577
        %v642 = vunpack.c.l.b16 %v578
        %v643 = vunpack.c.l.b16 %v579
        %v644 = vunpack.c.l.b16 %v580
        %v645 = vunpack.c.l.b16 %v581
        %v646 = vunpack.c.l.b16 %v582
        %v647 = vunpack.c.l.b16 %v583
        %v648 = vpack.c.b16 %v617, %v616
        %v649 = vpack.c.b16 %v619, %v618
        %v650 = vpack.c.b16 %v621, %v620
        %v651 = vpack.c.b16 %v623, %v622
        %v652 = vpack.c.b16 %v625, %v624
        %v653 = vpack.c.b16 %v627, %v626
        %v654 = vpack.c.b16 %v629, %v628
        %v655 = vpack.c.b16 %v631, %v630
        %v656 = vpack.c.b16 %v633, %v632
        %v657 = vpack.c.b16 %v635, %v634
        %v658 = vpack.c.b16 %v637, %v636
        %v659 = vpack.c.b16 %v639, %v638
        %v660 = vpack.c.b16 %v641, %v640
        %v661 = vpack.c.b16 %v643, %v642
        %v662 = vpack.c.b16 %v645, %v644
        %v663 = vpack.c.b16 %v647, %v646
        %680 = vmatprep.subr.bf16.mxu0 0
        %681 = vmatpush1.bf16.msra.mxu0 %v648
        %682 = vmatprep.subr.bf16.mxu0 0
        %683 = vmatpush1.bf16.msra.mxu0 %v649
        %684 = vmatprep.subr.bf16.mxu0 0
        %685 = vmatpush1.bf16.msra.mxu0 %v650
        %686 = vmatprep.subr.bf16.mxu0 0
        %687 = vmatpush1.bf16.msra.mxu0 %v651
        %688 = vmatprep.subr.bf16.mxu0 0
        %689 = vmatpush1.bf16.msra.mxu0 %v652
        %690 = vmatprep.subr.bf16.mxu0 0
        %691 = vmatpush1.bf16.msra.mxu0 %v653
        %692 = vmatprep.subr.bf16.mxu0 0
        %693 = vmatpush1.bf16.msra.mxu0 %v654
        %694 = vmatprep.subr.bf16.mxu0 0
        %695 = vmatpush1.bf16.msra.mxu0 %v655
        %696 = vmatprep.subr.bf16.mxu0 0
        %697 = vmatpush1.bf16.msra.mxu0 %v656
        %698 = vmatprep.subr.bf16.mxu0 0
        %699 = vmatpush1.bf16.msra.mxu0 %v657
        %700 = vmatprep.subr.bf16.mxu0 0
        %701 = vmatpush1.bf16.msra.mxu0 %v658
        %702 = vmatprep.subr.bf16.mxu0 0
        %703 = vmatpush1.bf16.msra.mxu0 %v659
        %704 = vmatprep.subr.bf16.mxu0 0
        %705 = vmatpush1.bf16.msra.mxu0 %v660
        %706 = vmatprep.subr.bf16.mxu0 0
        %707 = vmatpush1.bf16.msra.mxu0 %v661
        %708 = vmatprep.subr.bf16.mxu0 0
        %709 = vmatpush1.bf16.msra.mxu0 %v662
        %710 = vmatprep.subr.bf16.mxu0 0
        %711 = vmatpush1.bf16.msra.mxu0 %v663
        %712 = vmatprep.mubr.bf16.mxu0 %v543
        %713 = vmatmul.mubr.bf16.gmra.mrb[0].mxu0 %v519
        %v714 = vpop.f32.mrb[0].mxu0
        %v715 = vadd.f32 0.0, %v714
        %v716 = vpop.f32.mrb[0].mxu0
        %v717 = vpop.f32.mrb[0].mxu0
        %v718 = vadd.f32 0.0, %v717
        %v719 = vpop.f32.mrb[0].mxu0
        %720 = vmatprep.mubr.bf16.mxu0 %v544
        %721 = vmatmul.mubr.bf16.gmra.mrb[0].mxu0 %v520
        %v722 = vpop.f32.mrb[0].mxu0
        %v723 = vadd.f32 0.0, %v722
        %v724 = vpop.f32.mrb[0].mxu0
        %v725 = vpop.f32.mrb[0].mxu0
        %v726 = vadd.f32 0.0, %v725
        %v727 = vpop.f32.mrb[0].mxu0
        %728 = vmatprep.mubr.bf16.mxu0 %v545
        %729 = vmatmul.mubr.bf16.gmra.mrb[0].mxu0 %v521
        %v730 = vpop.f32.mrb[0].mxu0
        %v731 = vadd.f32 0.0, %v730
        %v732 = vpop.f32.mrb[0].mxu0
        %v733 = vpop.f32.mrb[0].mxu0
        %v734 = vadd.f32 0.0, %v733
        %v735 = vpop.f32.mrb[0].mxu0
        %736 = vmatprep.mubr.bf16.mxu0 %v546
        %737 = vmatmul.mubr.bf16.gmra.mrb[0].mxu0 %v522
        %v738 = vpop.f32.mrb[0].mxu0
        %v739 = vadd.f32 0.0, %v738
        %v740 = vpop.f32.mrb[0].mxu0
        %v741 = vpop.f32.mrb[0].mxu0
        %v742 = vadd.f32 0.0, %v741
        %v743 = vpop.f32.mrb[0].mxu0
        %744 = vdwg.mxu0
        %v777 = vunpack.c.l.b16 %v408
        %v778 = vunpack.c.l.b16 %v409
        %v779 = vunpack.c.l.b16 %v410
        %v780 = vunpack.c.l.b16 %v411
        %v781 = vunpack.c.l.b16 %v412
        %v782 = vunpack.c.l.b16 %v413
        %v783 = vunpack.c.l.b16 %v414
        %v784 = vunpack.c.l.b16 %v415
        %v785 = vunpack.c.l.b16 %v416
        %v786 = vunpack.c.l.b16 %v417
        %v787 = vunpack.c.l.b16 %v418
        %v788 = vunpack.c.l.b16 %v419
        %v789 = vunpack.c.l.b16 %v420
        %v790 = vunpack.c.l.b16 %v421
        %v791 = vunpack.c.l.b16 %v422
        %v792 = vunpack.c.l.b16 %v423
        %v793 = vunpack.c.l.b16 %v424
        %v794 = vunpack.c.l.b16 %v425
        %v795 = vunpack.c.l.b16 %v426
        %v796 = vunpack.c.l.b16 %v427
        %v797 = vunpack.c.l.b16 %v428
        %v798 = vunpack.c.l.b16 %v429
        %v799 = vunpack.c.l.b16 %v430
        %v800 = vunpack.c.l.b16 %v431
        %v801 = vunpack.c.l.b16 %v432
        %v802 = vunpack.c.l.b16 %v433
        %v803 = vunpack.c.l.b16 %v434
        %v804 = vunpack.c.l.b16 %v435
        %v805 = vunpack.c.l.b16 %v436
        %v806 = vunpack.c.l.b16 %v437
        %v807 = vunpack.c.l.b16 %v438
        %v808 = vunpack.c.l.b16 %v439
        %v809 = vpack.c.b16 %v778, %v777
        %v810 = vpack.c.b16 %v780, %v779
        %v811 = vpack.c.b16 %v782, %v781
        %v812 = vpack.c.b16 %v784, %v783
        %v813 = vpack.c.b16 %v786, %v785
        %v814 = vpack.c.b16 %v788, %v787
        %v815 = vpack.c.b16 %v790, %v789
        %v816 = vpack.c.b16 %v792, %v791
        %v817 = vpack.c.b16 %v794, %v793
        %v818 = vpack.c.b16 %v796, %v795
        %v819 = vpack.c.b16 %v798, %v797
        %v820 = vpack.c.b16 %v800, %v799
        %v821 = vpack.c.b16 %v802, %v801
        %v822 = vpack.c.b16 %v804, %v803
        %v823 = vpack.c.b16 %v806, %v805
        %v824 = vpack.c.b16 %v808, %v807
        %841 = vmatprep.subr.bf16.mxu0 0
        %842 = vmatpush1.bf16.msra.mxu0 %v809
        %843 = vmatprep.subr.bf16.mxu0 0
        %844 = vmatpush1.bf16.msra.mxu0 %v810
        %845 = vmatprep.subr.bf16.mxu0 0
        %846 = vmatpush1.bf16.msra.mxu0 %v811
        %847 = vmatprep.subr.bf16.mxu0 0
        %848 = vmatpush1.bf16.msra.mxu0 %v812
        %849 = vmatprep.subr.bf16.mxu0 0
        %850 = vmatpush1.bf16.msra.mxu0 %v813
        %851 = vmatprep.subr.bf16.mxu0 0
        %852 = vmatpush1.bf16.msra.mxu0 %v814
        %853 = vmatprep.subr.bf16.mxu0 0
        %854 = vmatpush1.bf16.msra.mxu0 %v815
        %855 = vmatprep.subr.bf16.mxu0 0
        %856 = vmatpush1.bf16.msra.mxu0 %v816
        %857 = vmatprep.subr.bf16.mxu0 0
        %858 = vmatpush1.bf16.msra.mxu0 %v817
        %859 = vmatprep.subr.bf16.mxu0 0
        %860 = vmatpush1.bf16.msra.mxu0 %v818
        %861 = vmatprep.subr.bf16.mxu0 0
        %862 = vmatpush1.bf16.msra.mxu0 %v819
        %863 = vmatprep.subr.bf16.mxu0 0
        %864 = vmatpush1.bf16.msra.mxu0 %v820
        %865 = vmatprep.subr.bf16.mxu0 0
        %866 = vmatpush1.bf16.msra.mxu0 %v821
        %867 = vmatprep.subr.bf16.mxu0 0
        %868 = vmatpush1.bf16.msra.mxu0 %v822
        %869 = vmatprep.subr.bf16.mxu0 0
        %870 = vmatpush1.bf16.msra.mxu0 %v823
        %871 = vmatprep.subr.bf16.mxu0 0
        %872 = vmatpush1.bf16.msra.mxu0 %v824
        %873 = vmatprep.mubr.bf16.mxu0 %v400
        %874 = vmatmul.mubr.bf16.gmra.mrb[0].mxu0 %v384
        %v875 = vpop.f32.mrb[0].mxu0
        %v876 = vadd.f32 %v715, %v875
        %v877 = vpop.f32.mrb[0].mxu0
        %v878 = vpop.f32.mrb[0].mxu0
        %v879 = vadd.f32 %v718, %v878
        %v880 = vpop.f32.mrb[0].mxu0
        %881 = vmatprep.mubr.bf16.mxu0 %v401
        %882 = vmatmul.mubr.bf16.gmra.mrb[0].mxu0 %v385
        %v883 = vpop.f32.mrb[0].mxu0
        %v884 = vadd.f32 %v723, %v883
        %v885 = vpop.f32.mrb[0].mxu0
        %v886 = vpop.f32.mrb[0].mxu0
        %v887 = vadd.f32 %v726, %v886
        %v888 = vpop.f32.mrb[0].mxu0
        %889 = vmatprep.mubr.bf16.mxu0 %v402
        %890 = vmatmul.mubr.bf16.gmra.mrb[0].mxu0 %v386
        %v891 = vpop.f32.mrb[0].mxu0
        %v892 = vadd.f32 %v731, %v891
        %v893 = vpop.f32.mrb[0].mxu0
        %v894 = vpop.f32.mrb[0].mxu0
        %v895 = vadd.f32 %v734, %v894
        %v896 = vpop.f32.mrb[0].mxu0
        %897 = vmatprep.mubr.bf16.mxu0 %v403
        %898 = vmatmul.mubr.bf16.gmra.mrb[0].mxu0 %v387
        %v899 = vpop.f32.mrb[0].mxu0
        %v900 = vadd.f32 %v739, %v899
        %v901 = vpop.f32.mrb[0].mxu0
        %v902 = vpop.f32.mrb[0].mxu0
        %v903 = vadd.f32 %v742, %v902
        %v904 = vpop.f32.mrb[0].mxu0
        %905 = vdwg.mxu0
        %v906 = vld [vmem:[%s502] sm:$0xf]
        %v907 = vld [vmem:[%s502 + $0x4] sm:$0x1]
        %v908 = vld [vmem:[%s502 + $0x8] sm:$0xf]
        %v909 = vld [vmem:[%s502 + $0xc] sm:$0x1]
        %v910 = vld [vmem:[%s502 + $0x10] sm:$0xf]
        %v911 = vld [vmem:[%s502 + $0x14] sm:$0x1]
        %v912 = vld [vmem:[%s502 + $0x18] sm:$0xf]
        %v913 = vld [vmem:[%s502 + $0x1c] sm:$0x1]
        %v914 = vld [vmem:[%s502 + $0x20] sm:$0xf]
        %v915 = vld [vmem:[%s502 + $0x24] sm:$0x1]
        %v916 = vld [vmem:[%s502 + $0x28] sm:$0xf]
        %v917 = vld [vmem:[%s502 + $0x2c] sm:$0x1]
        %v918 = vld [vmem:[%s502 + $0x30] sm:$0xf]
        %v919 = vld [vmem:[%s502 + $0x34] sm:$0x1]
        %v920 = vld [vmem:[%s502 + $0x38] sm:$0xf]
        %v921 = vld [vmem:[%s502 + $0x3c] sm:$0x1]
        %v923 = vshrl.u32 %v906, 16
        %v925 = vrot.slane %v923, 4
        %v926 = vshll.u32 %v906, 16
        %v928 = vrot.slane %v926, 5
        %v929 = vor.u32 %v925, %v928
        %v930 = vrot.slane %v929, 4
        %v932 = vshll.u32 %v907, 16
        %v934 = vrot.slane %v932, 5
        %v935 = vsel %vm255, %v930, %v934
        %v937 = vshrl.u32 %v908, 16
        %v939 = vrot.slane %v937, 4
        %v940 = vshll.u32 %v908, 16
        %v942 = vrot.slane %v940, 5
        %v943 = vor.u32 %v939, %v942
        %v944 = vrot.slane %v943, 4
        %v946 = vshll.u32 %v909, 16
        %v948 = vrot.slane %v946, 5
        %v949 = vsel %vm255, %v944, %v948
        %v951 = vshrl.u32 %v910, 16
        %v953 = vrot.slane %v951, 4
        %v954 = vshll.u32 %v910, 16
        %v956 = vrot.slane %v954, 5
        %v957 = vor.u32 %v953, %v956
        %v958 = vrot.slane %v957, 4
        %v960 = vshll.u32 %v911, 16
        %v962 = vrot.slane %v960, 5
        %v963 = vsel %vm255, %v958, %v962
        %v965 = vshrl.u32 %v912, 16
        %v967 = vrot.slane %v965, 4
        %v968 = vshll.u32 %v912, 16
        %v970 = vrot.slane %v968, 5
        %v971 = vor.u32 %v967, %v970
        %v972 = vrot.slane %v971, 4
        %v974 = vshll.u32 %v913, 16
        %v976 = vrot.slane %v974, 5
        %v977 = vsel %vm255, %v972, %v976
        %v979 = vshrl.u32 %v914, 16
        %v981 = vrot.slane %v979, 4
        %v982 = vshll.u32 %v914, 16
        %v984 = vrot.slane %v982, 5
        %v985 = vor.u32 %v981, %v984
        %v986 = vrot.slane %v985, 4
        %v988 = vshll.u32 %v915, 16
        %v990 = vrot.slane %v988, 5
        %v991 = vsel %vm255, %v986, %v990
        %v993 = vshrl.u32 %v916, 16
        %v995 = vrot.slane %v993, 4
        %v996 = vshll.u32 %v916, 16
        %v998 = vrot.slane %v996, 5
        %v999 = vor.u32 %v995, %v998
        %v1000 = vrot.slane %v999, 4
        %v1002 = vshll.u32 %v917, 16
        %v1004 = vrot.slane %v1002, 5
        %v1005 = vsel %vm255, %v1000, %v1004
        %v1007 = vshrl.u32 %v918, 16
        %v1009 = vrot.slane %v1007, 4
        %v1010 = vshll.u32 %v918, 16
        %v1012 = vrot.slane %v1010, 5
        %v1013 = vor.u32 %v1009, %v1012
        %v1014 = vrot.slane %v1013, 4
        %v1016 = vshll.u32 %v919, 16
        %v1018 = vrot.slane %v1016, 5
        %v1019 = vsel %vm255, %v1014, %v1018
        %v1021 = vshrl.u32 %v920, 16
        %v1023 = vrot.slane %v1021, 4
        %v1024 = vshll.u32 %v920, 16
        %v1026 = vrot.slane %v1024, 5
        %v1027 = vor.u32 %v1023, %v1026
        %v1028 = vrot.slane %v1027, 4
        %v1030 = vshll.u32 %v921, 16
        %v1032 = vrot.slane %v1030, 5
        %v1033 = vsel %vm255, %v1028, %v1032
        %v1034 = vld [vmem:[%s502] sm:$0xe]
        %v1035 = vld [vmem:[%s502 + $0x8] sm:$0xe]
        %v1036 = vld [vmem:[%s502 + $0x10] sm:$0xe]
        %v1037 = vld [vmem:[%s502 + $0x18] sm:$0xe]
        %v1038 = vld [vmem:[%s502 + $0x20] sm:$0xe]
        %v1039 = vld [vmem:[%s502 + $0x28] sm:$0xe]
        %v1040 = vld [vmem:[%s502 + $0x30] sm:$0xe]
        %v1041 = vld [vmem:[%s502 + $0x38] sm:$0xe]
        %v1058 = vrot.slane %v1034, 5
        %v1059 = vrot.slane %v1058, 4
        %v1060 = vrot.slane %v907, 5
        %v1061 = vsel %vm466, %v1059, %v1060
        %v1062 = vrot.slane %v1035, 5
        %v1063 = vrot.slane %v1062, 4
        %v1064 = vrot.slane %v909, 5
        %v1065 = vsel %vm466, %v1063, %v1064
        %v1066 = vrot.slane %v1036, 5
        %v1067 = vrot.slane %v1066, 4
        %v1068 = vrot.slane %v911, 5
        %v1069 = vsel %vm466, %v1067, %v1068
        %v1070 = vrot.slane %v1037, 5
        %v1071 = vrot.slane %v1070, 4
        %v1072 = vrot.slane %v913, 5
        %v1073 = vsel %vm466, %v1071, %v1072
        %v1074 = vrot.slane %v1038, 5
        %v1075 = vrot.slane %v1074, 4
        %v1076 = vrot.slane %v915, 5
        %v1077 = vsel %vm466, %v1075, %v1076
        %v1078 = vrot.slane %v1039, 5
        %v1079 = vrot.slane %v1078, 4
        %v1080 = vrot.slane %v917, 5
        %v1081 = vsel %vm466, %v1079, %v1080
        %v1082 = vrot.slane %v1040, 5
        %v1083 = vrot.slane %v1082, 4
        %v1084 = vrot.slane %v919, 5
        %v1085 = vsel %vm466, %v1083, %v1084
        %v1086 = vrot.slane %v1041, 5
        %v1087 = vrot.slane %v1086, 4
        %v1088 = vrot.slane %v921, 5
        %v1089 = vsel %vm466, %v1087, %v1088
        %v1090 = vunpack.c.l.b16 %v935
        %v1091 = vunpack.c.l.b16 %v949
        %v1092 = vunpack.c.l.b16 %v963
        %v1093 = vunpack.c.l.b16 %v977
        %v1094 = vunpack.c.l.b16 %v991
        %v1095 = vunpack.c.l.b16 %v1005
        %v1096 = vunpack.c.l.b16 %v1019
        %v1097 = vunpack.c.l.b16 %v1033
        %v1098 = vpack.c.b16 %v1091, %v1090
        %v1099 = vpack.c.b16 %v1093, %v1092
        %v1100 = vpack.c.b16 %v1095, %v1094
        %v1101 = vpack.c.b16 %v1097, %v1096
        %v1106 = vunpack.c.l.b16 %v1061
        %v1107 = vunpack.c.l.b16 %v1065
        %v1108 = vunpack.c.l.b16 %v1069
        %v1109 = vunpack.c.l.b16 %v1073
        %v1110 = vunpack.c.l.b16 %v1077
        %v1111 = vunpack.c.l.b16 %v1081
        %v1112 = vunpack.c.l.b16 %v1085
        %v1113 = vunpack.c.l.b16 %v1089
        %v1114 = vpack.c.b16 %v1107, %v1106
        %v1115 = vpack.c.b16 %v1109, %v1108
        %v1116 = vpack.c.b16 %v1111, %v1110
        %v1117 = vpack.c.b16 %v1113, %v1112
        %s1122 = scalar_lea.vmem [#allocation5], 256
        %v1123 = vld [vmem:[%s1122] sm:$0xf]
        %v1124 = vld [vmem:[%s1122 + $0x4] sm:$0xf]
        %v1125 = vld [vmem:[%s1122 + $0x8] sm:$0xf]
        %v1126 = vld [vmem:[%s1122 + $0xc] sm:$0xf]
        %v1127 = vld [vmem:[%s1122 + $0x10] sm:$0xf]
        %v1128 = vld [vmem:[%s1122 + $0x14] sm:$0xf]
        %v1129 = vld [vmem:[%s1122 + $0x18] sm:$0xf]
        %v1130 = vld [vmem:[%s1122 + $0x1c] sm:$0xf]
        %v1131 = vld [vmem:[%s1122 + $0x20] sm:$0xf]
        %v1132 = vld [vmem:[%s1122 + $0x24] sm:$0xf]
        %v1133 = vld [vmem:[%s1122 + $0x28] sm:$0xf]
        %v1134 = vld [vmem:[%s1122 + $0x2c] sm:$0xf]
        %v1135 = vld [vmem:[%s1122 + $0x30] sm:$0xf]
        %v1136 = vld [vmem:[%s1122 + $0x34] sm:$0xf]
        %v1137 = vld [vmem:[%s1122 + $0x38] sm:$0xf]
        %v1138 = vld [vmem:[%s1122 + $0x3c] sm:$0xf]
        %v1139 = vld [vmem:[%s1122 + $0x40] sm:$0xf]
        %v1140 = vld [vmem:[%s1122 + $0x44] sm:$0xf]
        %v1141 = vld [vmem:[%s1122 + $0x48] sm:$0xf]
        %v1142 = vld [vmem:[%s1122 + $0x4c] sm:$0xf]
        %v1143 = vld [vmem:[%s1122 + $0x50] sm:$0xf]
        %v1144 = vld [vmem:[%s1122 + $0x54] sm:$0xf]
        %v1145 = vld [vmem:[%s1122 + $0x58] sm:$0xf]
        %v1146 = vld [vmem:[%s1122 + $0x5c] sm:$0xf]
        %v1147 = vld [vmem:[%s1122 + $0x60] sm:$0xf]
        %v1148 = vld [vmem:[%s1122 + $0x64] sm:$0xf]
        %v1149 = vld [vmem:[%s1122 + $0x68] sm:$0xf]
        %v1150 = vld [vmem:[%s1122 + $0x6c] sm:$0xf]
        %v1151 = vld [vmem:[%s1122 + $0x70] sm:$0xf]
        %v1152 = vld [vmem:[%s1122 + $0x74] sm:$0xf]
        %v1153 = vld [vmem:[%s1122 + $0x78] sm:$0xf]
        %v1154 = vld [vmem:[%s1122 + $0x7c] sm:$0xf]
        %v1187 = vunpack.c.l.b16 %v1123
        %v1188 = vunpack.c.l.b16 %v1124
        %v1189 = vunpack.c.l.b16 %v1125
        %v1190 = vunpack.c.l.b16 %v1126
        %v1191 = vunpack.c.l.b16 %v1127
        %v1192 = vunpack.c.l.b16 %v1128
        %v1193 = vunpack.c.l.b16 %v1129
        %v1194 = vunpack.c.l.b16 %v1130
        %v1195 = vunpack.c.l.b16 %v1131
        %v1196 = vunpack.c.l.b16 %v1132
        %v1197 = vunpack.c.l.b16 %v1133
        %v1198 = vunpack.c.l.b16 %v1134
        %v1199 = vunpack.c.l.b16 %v1135
        %v1200 = vunpack.c.l.b16 %v1136
        %v1201 = vunpack.c.l.b16 %v1137
        %v1202 = vunpack.c.l.b16 %v1138
        %v1203 = vunpack.c.l.b16 %v1139
        %v1204 = vunpack.c.l.b16 %v1140
        %v1205 = vunpack.c.l.b16 %v1141
        %v1206 = vunpack.c.l.b16 %v1142
        %v1207 = vunpack.c.l.b16 %v1143
        %v1208 = vunpack.c.l.b16 %v1144
        %v1209 = vunpack.c.l.b16 %v1145
        %v1210 = vunpack.c.l.b16 %v1146
        %v1211 = vunpack.c.l.b16 %v1147
        %v1212 = vunpack.c.l.b16 %v1148
        %v1213 = vunpack.c.l.b16 %v1149
        %v1214 = vunpack.c.l.b16 %v1150
        %v1215 = vunpack.c.l.b16 %v1151
        %v1216 = vunpack.c.l.b16 %v1152
        %v1217 = vunpack.c.l.b16 %v1153
        %v1218 = vunpack.c.l.b16 %v1154
        %v1219 = vpack.c.b16 %v1188, %v1187
        %v1220 = vpack.c.b16 %v1190, %v1189
        %v1221 = vpack.c.b16 %v1192, %v1191
        %v1222 = vpack.c.b16 %v1194, %v1193
        %v1223 = vpack.c.b16 %v1196, %v1195
        %v1224 = vpack.c.b16 %v1198, %v1197
        %v1225 = vpack.c.b16 %v1200, %v1199
        %v1226 = vpack.c.b16 %v1202, %v1201
        %v1227 = vpack.c.b16 %v1204, %v1203
        %v1228 = vpack.c.b16 %v1206, %v1205
        %v1229 = vpack.c.b16 %v1208, %v1207
        %v1230 = vpack.c.b16 %v1210, %v1209
        %v1231 = vpack.c.b16 %v1212, %v1211
        %v1232 = vpack.c.b16 %v1214, %v1213
        %v1233 = vpack.c.b16 %v1216, %v1215
        %v1234 = vpack.c.b16 %v1218, %v1217
        %1251 = vmatprep.subr.bf16.mxu0 0
        %1252 = vmatpush1.bf16.msra.mxu0 %v1219
        %1253 = vmatprep.subr.bf16.mxu0 0
        %1254 = vmatpush1.bf16.msra.mxu0 %v1220
        %1255 = vmatprep.subr.bf16.mxu0 0
        %1256 = vmatpush1.bf16.msra.mxu0 %v1221
        %1257 = vmatprep.subr.bf16.mxu0 0
        %1258 = vmatpush1.bf16.msra.mxu0 %v1222
        %1259 = vmatprep.subr.bf16.mxu0 0
        %1260 = vmatpush1.bf16.msra.mxu0 %v1223
        %1261 = vmatprep.subr.bf16.mxu0 0
        %1262 = vmatpush1.bf16.msra.mxu0 %v1224
        %1263 = vmatprep.subr.bf16.mxu0 0
        %1264 = vmatpush1.bf16.msra.mxu0 %v1225
        %1265 = vmatprep.subr.bf16.mxu0 0
        %1266 = vmatpush1.bf16.msra.mxu0 %v1226
        %1267 = vmatprep.subr.bf16.mxu0 0
        %1268 = vmatpush1.bf16.msra.mxu0 %v1227
        %1269 = vmatprep.subr.bf16.mxu0 0
        %1270 = vmatpush1.bf16.msra.mxu0 %v1228
        %1271 = vmatprep.subr.bf16.mxu0 0
        %1272 = vmatpush1.bf16.msra.mxu0 %v1229
        %1273 = vmatprep.subr.bf16.mxu0 0
        %1274 = vmatpush1.bf16.msra.mxu0 %v1230
        %1275 = vmatprep.subr.bf16.mxu0 0
        %1276 = vmatpush1.bf16.msra.mxu0 %v1231
        %1277 = vmatprep.subr.bf16.mxu0 0
        %1278 = vmatpush1.bf16.msra.mxu0 %v1232
        %1279 = vmatprep.subr.bf16.mxu0 0
        %1280 = vmatpush1.bf16.msra.mxu0 %v1233
        %1281 = vmatprep.subr.bf16.mxu0 0
        %1282 = vmatpush1.bf16.msra.mxu0 %v1234
        %1283 = vmatprep.mubr.bf16.mxu0 %v1114
        %1284 = vmatmul.mubr.bf16.gmra.mrb[0].mxu0 %v1098
        %v1285 = vpop.f32.mrb[0].mxu0
        %v1286 = vadd.f32 0.0, %v1285
        %v1287 = vpop.f32.mrb[0].mxu0
        %v1288 = vpop.f32.mrb[0].mxu0
        %v1289 = vadd.f32 0.0, %v1288
        %v1290 = vpop.f32.mrb[0].mxu0
        %1291 = vmatprep.mubr.bf16.mxu0 %v1115
        %1292 = vmatmul.mubr.bf16.gmra.mrb[0].mxu0 %v1099
        %v1293 = vpop.f32.mrb[0].mxu0
        %v1294 = vadd.f32 0.0, %v1293
        %v1295 = vpop.f32.mrb[0].mxu0
        %v1296 = vpop.f32.mrb[0].mxu0
        %v1297 = vadd.f32 0.0, %v1296
        %v1298 = vpop.f32.mrb[0].mxu0
        %1299 = vmatprep.mubr.bf16.mxu0 %v1116
        %1300 = vmatmul.mubr.bf16.gmra.mrb[0].mxu0 %v1100
        %v1301 = vpop.f32.mrb[0].mxu0
        %v1302 = vadd.f32 0.0, %v1301
        %v1303 = vpop.f32.mrb[0].mxu0
        %v1304 = vpop.f32.mrb[0].mxu0
        %v1305 = vadd.f32 0.0, %v1304
        %v1306 = vpop.f32.mrb[0].mxu0
        %1307 = vmatprep.mubr.bf16.mxu0 %v1117
        %1308 = vmatmul.mubr.bf16.gmra.mrb[0].mxu0 %v1101
        %v1309 = vpop.f32.mrb[0].mxu0
        %v1310 = vadd.f32 0.0, %v1309
        %v1311 = vpop.f32.mrb[0].mxu0
        %v1312 = vpop.f32.mrb[0].mxu0
        %v1313 = vadd.f32 0.0, %v1312
        %v1314 = vpop.f32.mrb[0].mxu0
        %1315 = vdwg.mxu0
        %v1316 = vadd.f32 %v876, %v1286
        %v1317 = vadd.f32 %v879, %v1289
        %v1318 = vadd.f32 %v884, %v1294
        %v1319 = vadd.f32 %v887, %v1297
        %v1320 = vadd.f32 %v892, %v1302
        %v1321 = vadd.f32 %v895, %v1305
        %v1322 = vadd.f32 %v900, %v1310
        %v1323 = vadd.f32 %v903, %v1313
        %s1324 = sadd.s32 %s233, 2
        %s1325 = smul.u32 %s1324, 2
        %s1326 = smul.addr %s1325, 4
        %s1327 = scalar_lea.vmem %s199, %s1326 [#allocation2]
        %v1328 = vld [vmem:[%s1327] sm:$0xf]
        %v1329 = vld [vmem:[%s1327 + $0x8] sm:$0xf]
        %v1330 = vld [vmem:[%s1327 + $0x10] sm:$0xf]
        %v1331 = vld [vmem:[%s1327 + $0x18] sm:$0xf]
        %v1332 = vld [vmem:[%s1327 + $0x20] sm:$0xf]
        %v1333 = vld [vmem:[%s1327 + $0x28] sm:$0xf]
        %v1334 = vld [vmem:[%s1327 + $0x30] sm:$0xf]
        %v1335 = vld [vmem:[%s1327 + $0x38] sm:$0xf]
        %v1336 = vld [vmem:[%s1327 + $0x4] sm:$0x1]
        %v1337 = vld [vmem:[%s1327 + $0xc] sm:$0x1]
        %v1338 = vld [vmem:[%s1327 + $0x14] sm:$0x1]
        %v1339 = vld [vmem:[%s1327 + $0x1c] sm:$0x1]
        %v1340 = vld [vmem:[%s1327 + $0x24] sm:$0x1]
        %v1341 = vld [vmem:[%s1327 + $0x2c] sm:$0x1]
        %v1342 = vld [vmem:[%s1327 + $0x34] sm:$0x1]
        %v1343 = vld [vmem:[%s1327 + $0x3c] sm:$0x1]
        %v1345 = vshrl.u32 %v1328, 16
        %v1347 = vrot.slane %v1345, 4
        %v1348 = vshll.u32 %v1328, 16
        %v1350 = vrot.slane %v1348, 5
        %v1351 = vor.u32 %v1347, %v1350
        %v1352 = vrot.slane %v1351, 4
        %v1354 = vshll.u32 %v1336, 16
        %v1356 = vrot.slane %v1354, 5
        %v1357 = vsel %vm255, %v1352, %v1356
        %v1359 = vshrl.u32 %v1329, 16
        %v1361 = vrot.slane %v1359, 4
        %v1362 = vshll.u32 %v1329, 16
        %v1364 = vrot.slane %v1362, 5
        %v1365 = vor.u32 %v1361, %v1364
        %v1366 = vrot.slane %v1365, 4
        %v1368 = vshll.u32 %v1337, 16
        %v1370 = vrot.slane %v1368, 5
        %v1371 = vsel %vm255, %v1366, %v1370
        %v1373 = vshrl.u32 %v1330, 16
        %v1375 = vrot.slane %v1373, 4
        %v1376 = vshll.u32 %v1330, 16
        %v1378 = vrot.slane %v1376, 5
        %v1379 = vor.u32 %v1375, %v1378
        %v1380 = vrot.slane %v1379, 4
        %v1382 = vshll.u32 %v1338, 16
        %v1384 = vrot.slane %v1382, 5
        %v1385 = vsel %vm255, %v1380, %v1384
        %v1387 = vshrl.u32 %v1331, 16
        %v1389 = vrot.slane %v1387, 4
        %v1390 = vshll.u32 %v1331, 16
        %v1392 = vrot.slane %v1390, 5
        %v1393 = vor.u32 %v1389, %v1392
        %v1394 = vrot.slane %v1393, 4
        %v1396 = vshll.u32 %v1339, 16
        %v1398 = vrot.slane %v1396, 5
        %v1399 = vsel %vm255, %v1394, %v1398
        %v1401 = vshrl.u32 %v1332, 16
        %v1403 = vrot.slane %v1401, 4
        %v1404 = vshll.u32 %v1332, 16
        %v1406 = vrot.slane %v1404, 5
        %v1407 = vor.u32 %v1403, %v1406
        %v1408 = vrot.slane %v1407, 4
        %v1410 = vshll.u32 %v1340, 16
        %v1412 = vrot.slane %v1410, 5
        %v1413 = vsel %vm255, %v1408, %v1412
        %v1415 = vshrl.u32 %v1333, 16
        %v1417 = vrot.slane %v1415, 4
        %v1418 = vshll.u32 %v1333, 16
        %v1420 = vrot.slane %v1418, 5
        %v1421 = vor.u32 %v1417, %v1420
        %v1422 = vrot.slane %v1421, 4
        %v1424 = vshll.u32 %v1341, 16
        %v1426 = vrot.slane %v1424, 5
        %v1427 = vsel %vm255, %v1422, %v1426
        %v1429 = vshrl.u32 %v1334, 16
        %v1431 = vrot.slane %v1429, 4
        %v1432 = vshll.u32 %v1334, 16
        %v1434 = vrot.slane %v1432, 5
        %v1435 = vor.u32 %v1431, %v1434
        %v1436 = vrot.slane %v1435, 4
        %v1438 = vshll.u32 %v1342, 16
        %v1440 = vrot.slane %v1438, 5
        %v1441 = vsel %vm255, %v1436, %v1440
        %v1443 = vshrl.u32 %v1335, 16
        %v1445 = vrot.slane %v1443, 4
        %v1446 = vshll.u32 %v1335, 16
        %v1448 = vrot.slane %v1446, 5
        %v1449 = vor.u32 %v1445, %v1448
        %v1450 = vrot.slane %v1449, 4
        %v1452 = vshll.u32 %v1343, 16
        %v1454 = vrot.slane %v1452, 5
        %v1455 = vsel %vm255, %v1450, %v1454
        %v1464 = vunpack.c.l.b16 %v1328
        %v1465 = vunpack.c.l.b16 %v1329
        %v1466 = vunpack.c.l.b16 %v1330
        %v1467 = vunpack.c.l.b16 %v1331
        %v1468 = vunpack.c.l.b16 %v1332
        %v1469 = vunpack.c.l.b16 %v1333
        %v1470 = vunpack.c.l.b16 %v1334
        %v1471 = vunpack.c.l.b16 %v1335
        %v1472 = vpack.c.b16 %v1465, %v1464
        %v1473 = vpack.c.b16 %v1467, %v1466
        %v1474 = vpack.c.b16 %v1469, %v1468
        %v1475 = vpack.c.b16 %v1471, %v1470
        %v1480 = vunpack.c.l.b16 %v1357
        %v1481 = vunpack.c.l.b16 %v1371
        %v1482 = vunpack.c.l.b16 %v1385
        %v1483 = vunpack.c.l.b16 %v1399
        %v1484 = vunpack.c.l.b16 %v1413
        %v1485 = vunpack.c.l.b16 %v1427
        %v1486 = vunpack.c.l.b16 %v1441
        %v1487 = vunpack.c.l.b16 %v1455
        %v1488 = vpack.c.b16 %v1481, %v1480
        %v1489 = vpack.c.b16 %v1483, %v1482
        %v1490 = vpack.c.b16 %v1485, %v1484
        %v1491 = vpack.c.b16 %v1487, %v1486
        %s1496 = scalar_lea.vmem [#allocation5], 384
        %v1497 = vld [vmem:[%s1496] sm:$0xf]
        %v1498 = vld [vmem:[%s1496 + $0x4] sm:$0xf]
        %v1499 = vld [vmem:[%s1496 + $0x8] sm:$0xf]
        %v1500 = vld [vmem:[%s1496 + $0xc] sm:$0xf]
        %v1501 = vld [vmem:[%s1496 + $0x10] sm:$0xf]
        %v1502 = vld [vmem:[%s1496 + $0x14] sm:$0xf]
        %v1503 = vld [vmem:[%s1496 + $0x18] sm:$0xf]
        %v1504 = vld [vmem:[%s1496 + $0x1c] sm:$0xf]
        %v1505 = vld [vmem:[%s1496 + $0x20] sm:$0xf]
        %v1506 = vld [vmem:[%s1496 + $0x24] sm:$0xf]
        %v1507 = vld [vmem:[%s1496 + $0x28] sm:$0xf]
        %v1508 = vld [vmem:[%s1496 + $0x2c] sm:$0xf]
        %v1509 = vld [vmem:[%s1496 + $0x30] sm:$0xf]
        %v1510 = vld [vmem:[%s1496 + $0x34] sm:$0xf]
        %v1511 = vld [vmem:[%s1496 + $0x38] sm:$0xf]
        %v1512 = vld [vmem:[%s1496 + $0x3c] sm:$0xf]
        %v1513 = vld [vmem:[%s1496 + $0x40] sm:$0xf]
        %v1514 = vld [vmem:[%s1496 + $0x44] sm:$0xf]
        %v1515 = vld [vmem:[%s1496 + $0x48] sm:$0xf]
        %v1516 = vld [vmem:[%s1496 + $0x4c] sm:$0xf]
        %v1517 = vld [vmem:[%s1496 + $0x50] sm:$0xf]
        %v1518 = vld [vmem:[%s1496 + $0x54] sm:$0xf]
        %v1519 = vld [vmem:[%s1496 + $0x58] sm:$0xf]
        %v1520 = vld [vmem:[%s1496 + $0x5c] sm:$0xf]
        %v1521 = vld [vmem:[%s1496 + $0x60] sm:$0xf]
        %v1522 = vld [vmem:[%s1496 + $0x64] sm:$0xf]
        %v1523 = vld [vmem:[%s1496 + $0x68] sm:$0xf]
        %v1524 = vld [vmem:[%s1496 + $0x6c] sm:$0xf]
        %v1525 = vld [vmem:[%s1496 + $0x70] sm:$0xf]
        %v1526 = vld [vmem:[%s1496 + $0x74] sm:$0xf]
        %v1527 = vld [vmem:[%s1496 + $0x78] sm:$0xf]
        %v1528 = vld [vmem:[%s1496 + $0x7c] sm:$0xf]
        %v1561 = vunpack.c.l.b16 %v1497
        %v1562 = vunpack.c.l.b16 %v1498
        %v1563 = vunpack.c.l.b16 %v1499
        %v1564 = vunpack.c.l.b16 %v1500
        %v1565 = vunpack.c.l.b16 %v1501
        %v1566 = vunpack.c.l.b16 %v1502
        %v1567 = vunpack.c.l.b16 %v1503
        %v1568 = vunpack.c.l.b16 %v1504
        %v1569 = vunpack.c.l.b16 %v1505
        %v1570 = vunpack.c.l.b16 %v1506
        %v1571 = vunpack.c.l.b16 %v1507
        %v1572 = vunpack.c.l.b16 %v1508
        %v1573 = vunpack.c.l.b16 %v1509
        %v1574 = vunpack.c.l.b16 %v1510
        %v1575 = vunpack.c.l.b16 %v1511
        %v1576 = vunpack.c.l.b16 %v1512
        %v1577 = vunpack.c.l.b16 %v1513
        %v1578 = vunpack.c.l.b16 %v1514
        %v1579 = vunpack.c.l.b16 %v1515
        %v1580 = vunpack.c.l.b16 %v1516
        %v1581 = vunpack.c.l.b16 %v1517
        %v1582 = vunpack.c.l.b16 %v1518
        %v1583 = vunpack.c.l.b16 %v1519
        %v1584 = vunpack.c.l.b16 %v1520
        %v1585 = vunpack.c.l.b16 %v1521
        %v1586 = vunpack.c.l.b16 %v1522
        %v1587 = vunpack.c.l.b16 %v1523
        %v1588 = vunpack.c.l.b16 %v1524
        %v1589 = vunpack.c.l.b16 %v1525
        %v1590 = vunpack.c.l.b16 %v1526
        %v1591 = vunpack.c.l.b16 %v1527
        %v1592 = vunpack.c.l.b16 %v1528
        %v1593 = vpack.c.b16 %v1562, %v1561
        %v1594 = vpack.c.b16 %v1564, %v1563
        %v1595 = vpack.c.b16 %v1566, %v1565
        %v1596 = vpack.c.b16 %v1568, %v1567
        %v1597 = vpack.c.b16 %v1570, %v1569
        %v1598 = vpack.c.b16 %v1572, %v1571
        %v1599 = vpack.c.b16 %v1574, %v1573
        %v1600 = vpack.c.b16 %v1576, %v1575
        %v1601 = vpack.c.b16 %v1578, %v1577
        %v1602 = vpack.c.b16 %v1580, %v1579
        %v1603 = vpack.c.b16 %v1582, %v1581
        %v1604 = vpack.c.b16 %v1584, %v1583
        %v1605 = vpack.c.b16 %v1586, %v1585
        %v1606 = vpack.c.b16 %v1588, %v1587
        %v1607 = vpack.c.b16 %v1590, %v1589
        %v1608 = vpack.c.b16 %v1592, %v1591
        %1625 = vmatprep.subr.bf16.mxu0 0
        %1626 = vmatpush1.bf16.msra.mxu0 %v1593
        %1627 = vmatprep.subr.bf16.mxu0 0
        %1628 = vmatpush1.bf16.msra.mxu0 %v1594
        %1629 = vmatprep.subr.bf16.mxu0 0
        %1630 = vmatpush1.bf16.msra.mxu0 %v1595
        %1631 = vmatprep.subr.bf16.mxu0 0
        %1632 = vmatpush1.bf16.msra.mxu0 %v1596
        %1633 = vmatprep.subr.bf16.mxu0 0
        %1634 = vmatpush1.bf16.msra.mxu0 %v1597
        %1635 = vmatprep.subr.bf16.mxu0 0
        %1636 = vmatpush1.bf16.msra.mxu0 %v1598
        %1637 = vmatprep.subr.bf16.mxu0 0
        %1638 = vmatpush1.bf16.msra.mxu0 %v1599
        %1639 = vmatprep.subr.bf16.mxu0 0
        %1640 = vmatpush1.bf16.msra.mxu0 %v1600
        %1641 = vmatprep.subr.bf16.mxu0 0
        %1642 = vmatpush1.bf16.msra.mxu0 %v1601
        %1643 = vmatprep.subr.bf16.mxu0 0
        %1644 = vmatpush1.bf16.msra.mxu0 %v1602
        %1645 = vmatprep.subr.bf16.mxu0 0
        %1646 = vmatpush1.bf16.msra.mxu0 %v1603
        %1647 = vmatprep.subr.bf16.mxu0 0
        %1648 = vmatpush1.bf16.msra.mxu0 %v1604
        %1649 = vmatprep.subr.bf16.mxu0 0
        %1650 = vmatpush1.bf16.msra.mxu0 %v1605
        %1651 = vmatprep.subr.bf16.mxu0 0
        %1652 = vmatpush1.bf16.msra.mxu0 %v1606
        %1653 = vmatprep.subr.bf16.mxu0 0
        %1654 = vmatpush1.bf16.msra.mxu0 %v1607
        %1655 = vmatprep.subr.bf16.mxu0 0
        %1656 = vmatpush1.bf16.msra.mxu0 %v1608
        %1657 = vmatprep.mubr.bf16.mxu0 %v1488
        %1658 = vmatmul.mubr.bf16.gmra.mrb[0].mxu0 %v1472
        %v1659 = vpop.f32.mrb[0].mxu0
        %v1660 = vadd.f32 0.0, %v1659
        %v1661 = vpop.f32.mrb[0].mxu0
        %v1662 = vpop.f32.mrb[0].mxu0
        %v1663 = vadd.f32 0.0, %v1662
        %v1664 = vpop.f32.mrb[0].mxu0
        %1665 = vmatprep.mubr.bf16.mxu0 %v1489
        %1666 = vmatmul.mubr.bf16.gmra.mrb[0].mxu0 %v1473
        %v1667 = vpop.f32.mrb[0].mxu0
        %v1668 = vadd.f32 0.0, %v1667
        %v1669 = vpop.f32.mrb[0].mxu0
        %v1670 = vpop.f32.mrb[0].mxu0
        %v1671 = vadd.f32 0.0, %v1670
        %v1672 = vpop.f32.mrb[0].mxu0
        %1673 = vmatprep.mubr.bf16.mxu0 %v1490
        %1674 = vmatmul.mubr.bf16.gmra.mrb[0].mxu0 %v1474
        %v1675 = vpop.f32.mrb[0].mxu0
        %v1676 = vadd.f32 0.0, %v1675
        %v1677 = vpop.f32.mrb[0].mxu0
        %v1678 = vpop.f32.mrb[0].mxu0
        %v1679 = vadd.f32 0.0, %v1678
        %v1680 = vpop.f32.mrb[0].mxu0
        %1681 = vmatprep.mubr.bf16.mxu0 %v1491
        %1682 = vmatmul.mubr.bf16.gmra.mrb[0].mxu0 %v1475
        %v1683 = vpop.f32.mrb[0].mxu0
        %v1684 = vadd.f32 0.0, %v1683
        %v1685 = vpop.f32.mrb[0].mxu0
        %v1686 = vpop.f32.mrb[0].mxu0
        %v1687 = vadd.f32 0.0, %v1686
        %v1688 = vpop.f32.mrb[0].mxu0
        %1689 = vdwg.mxu0
        %v1690 = vadd.f32 %v1316, %v1660
        %v1691 = vadd.f32 %v1317, %v1663
        %v1692 = vadd.f32 %v1318, %v1668
        %v1693 = vadd.f32 %v1319, %v1671
        %v1694 = vadd.f32 %v1320, %v1676
        %v1695 = vadd.f32 %v1321, %v1679
        %v1696 = vadd.f32 %v1322, %v1684
        %v1697 = vadd.f32 %v1323, %v1687
        %v1698 = vld [vmem:[%s1327] sm:$0xe]
        %v1699 = vld [vmem:[%s1327 + $0x8] sm:$0xe]
        %v1700 = vld [vmem:[%s1327 + $0x10] sm:$0xe]
        %v1701 = vld [vmem:[%s1327 + $0x18] sm:$0xe]
        %v1702 = vld [vmem:[%s1327 + $0x20] sm:$0xe]
        %v1703 = vld [vmem:[%s1327 + $0x28] sm:$0xe]
        %v1704 = vld [vmem:[%s1327 + $0x30] sm:$0xe]
        %v1705 = vld [vmem:[%s1327 + $0x38] sm:$0xe]
        %v1722 = vrot.slane %v1698, 5
        %v1723 = vrot.slane %v1722, 4
        %v1724 = vrot.slane %v1336, 5
        %v1725 = vsel %vm466, %v1723, %v1724
        %v1726 = vrot.slane %v1699, 5
        %v1727 = vrot.slane %v1726, 4
        %v1728 = vrot.slane %v1337, 5
        %v1729 = vsel %vm466, %v1727, %v1728
        %v1730 = vrot.slane %v1700, 5
        %v1731 = vrot.slane %v1730, 4
        %v1732 = vrot.slane %v1338, 5
        %v1733 = vsel %vm466, %v1731, %v1732
        %v1734 = vrot.slane %v1701, 5
        %v1735 = vrot.slane %v1734, 4
        %v1736 = vrot.slane %v1339, 5
        %v1737 = vsel %vm466, %v1735, %v1736
        %v1738 = vrot.slane %v1702, 5
        %v1739 = vrot.slane %v1738, 4
        %v1740 = vrot.slane %v1340, 5
        %v1741 = vsel %vm466, %v1739, %v1740
        %v1742 = vrot.slane %v1703, 5
        %v1743 = vrot.slane %v1742, 4
        %v1744 = vrot.slane %v1341, 5
        %v1745 = vsel %vm466, %v1743, %v1744
        %v1746 = vrot.slane %v1704, 5
        %v1747 = vrot.slane %v1746, 4
        %v1748 = vrot.slane %v1342, 5
        %v1749 = vsel %vm466, %v1747, %v1748
        %v1750 = vrot.slane %v1705, 5
        %v1751 = vrot.slane %v1750, 4
        %v1752 = vrot.slane %v1343, 5
        %v1753 = vsel %vm466, %v1751, %v1752
        %v1754 = vunpack.c.l.b16 %v1725
        %v1755 = vunpack.c.l.b16 %v1729
        %v1756 = vunpack.c.l.b16 %v1733
        %v1757 = vunpack.c.l.b16 %v1737
        %v1758 = vunpack.c.l.b16 %v1741
        %v1759 = vunpack.c.l.b16 %v1745
        %v1760 = vunpack.c.l.b16 %v1749
        %v1761 = vunpack.c.l.b16 %v1753
        %v1762 = vpack.c.b16 %v1755, %v1754
        %v1763 = vpack.c.b16 %v1757, %v1756
        %v1764 = vpack.c.b16 %v1759, %v1758
        %v1765 = vpack.c.b16 %v1761, %v1760
        %s1770 = scalar_lea.vmem [#allocation5], 512
        %v1771 = vld [vmem:[%s1770] sm:$0xf]
        %v1772 = vld [vmem:[%s1770 + $0x4] sm:$0xf]
        %v1773 = vld [vmem:[%s1770 + $0x8] sm:$0xf]
        %v1774 = vld [vmem:[%s1770 + $0xc] sm:$0xf]
        %v1775 = vld [vmem:[%s1770 + $0x10] sm:$0xf]
        %v1776 = vld [vmem:[%s1770 + $0x14] sm:$0xf]
        %v1777 = vld [vmem:[%s1770 + $0x18] sm:$0xf]
        %v1778 = vld [vmem:[%s1770 + $0x1c] sm:$0xf]
        %v1779 = vld [vmem:[%s1770 + $0x20] sm:$0xf]
        %v1780 = vld [vmem:[%s1770 + $0x24] sm:$0xf]
        %v1781 = vld [vmem:[%s1770 + $0x28] sm:$0xf]
        %v1782 = vld [vmem:[%s1770 + $0x2c] sm:$0xf]
        %v1783 = vld [vmem:[%s1770 + $0x30] sm:$0xf]
        %v1784 = vld [vmem:[%s1770 + $0x34] sm:$0xf]
        %v1785 = vld [vmem:[%s1770 + $0x38] sm:$0xf]
        %v1786 = vld [vmem:[%s1770 + $0x3c] sm:$0xf]
        %v1787 = vld [vmem:[%s1770 + $0x40] sm:$0xf]
        %v1788 = vld [vmem:[%s1770 + $0x44] sm:$0xf]
        %v1789 = vld [vmem:[%s1770 + $0x48] sm:$0xf]
        %v1790 = vld [vmem:[%s1770 + $0x4c] sm:$0xf]
        %v1791 = vld [vmem:[%s1770 + $0x50] sm:$0xf]
        %v1792 = vld [vmem:[%s1770 + $0x54] sm:$0xf]
        %v1793 = vld [vmem:[%s1770 + $0x58] sm:$0xf]
        %v1794 = vld [vmem:[%s1770 + $0x5c] sm:$0xf]
        %v1795 = vld [vmem:[%s1770 + $0x60] sm:$0xf]
        %v1796 = vld [vmem:[%s1770 + $0x64] sm:$0xf]
        %v1797 = vld [vmem:[%s1770 + $0x68] sm:$0xf]
        %v1798 = vld [vmem:[%s1770 + $0x6c] sm:$0xf]
        %v1799 = vld [vmem:[%s1770 + $0x70] sm:$0xf]
        %v1800 = vld [vmem:[%s1770 + $0x74] sm:$0xf]
        %v1801 = vld [vmem:[%s1770 + $0x78] sm:$0xf]
        %v1802 = vld [vmem:[%s1770 + $0x7c] sm:$0xf]
        %v1835 = vunpack.c.l.b16 %v1771
        %v1836 = vunpack.c.l.b16 %v1772
        %v1837 = vunpack.c.l.b16 %v1773
        %v1838 = vunpack.c.l.b16 %v1774
        %v1839 = vunpack.c.l.b16 %v1775
        %v1840 = vunpack.c.l.b16 %v1776
        %v1841 = vunpack.c.l.b16 %v1777
        %v1842 = vunpack.c.l.b16 %v1778
        %v1843 = vunpack.c.l.b16 %v1779
        %v1844 = vunpack.c.l.b16 %v1780
        %v1845 = vunpack.c.l.b16 %v1781
        %v1846 = vunpack.c.l.b16 %v1782
        %v1847 = vunpack.c.l.b16 %v1783
        %v1848 = vunpack.c.l.b16 %v1784
        %v1849 = vunpack.c.l.b16 %v1785
        %v1850 = vunpack.c.l.b16 %v1786
        %v1851 = vunpack.c.l.b16 %v1787
        %v1852 = vunpack.c.l.b16 %v1788
        %v1853 = vunpack.c.l.b16 %v1789
        %v1854 = vunpack.c.l.b16 %v1790
        %v1855 = vunpack.c.l.b16 %v1791
        %v1856 = vunpack.c.l.b16 %v1792
        %v1857 = vunpack.c.l.b16 %v1793
        %v1858 = vunpack.c.l.b16 %v1794
        %v1859 = vunpack.c.l.b16 %v1795
        %v1860 = vunpack.c.l.b16 %v1796
        %v1861 = vunpack.c.l.b16 %v1797
        %v1862 = vunpack.c.l.b16 %v1798
        %v1863 = vunpack.c.l.b16 %v1799
        %v1864 = vunpack.c.l.b16 %v1800
        %v1865 = vunpack.c.l.b16 %v1801
        %v1866 = vunpack.c.l.b16 %v1802
        %v1867 = vpack.c.b16 %v1836, %v1835
        %v1868 = vpack.c.b16 %v1838, %v1837
        %v1869 = vpack.c.b16 %v1840, %v1839
        %v1870 = vpack.c.b16 %v1842, %v1841
        %v1871 = vpack.c.b16 %v1844, %v1843
        %v1872 = vpack.c.b16 %v1846, %v1845
        %v1873 = vpack.c.b16 %v1848, %v1847
        %v1874 = vpack.c.b16 %v1850, %v1849
        %v1875 = vpack.c.b16 %v1852, %v1851
        %v1876 = vpack.c.b16 %v1854, %v1853
        %v1877 = vpack.c.b16 %v1856, %v1855
        %v1878 = vpack.c.b16 %v1858, %v1857
        %v1879 = vpack.c.b16 %v1860, %v1859
        %v1880 = vpack.c.b16 %v1862, %v1861
        %v1881 = vpack.c.b16 %v1864, %v1863
        %v1882 = vpack.c.b16 %v1866, %v1865
        %1899 = vmatprep.subr.bf16.mxu0 0
        %1900 = vmatpush1.bf16.msra.mxu0 %v1867
        %1901 = vmatprep.subr.bf16.mxu0 0
        %1902 = vmatpush1.bf16.msra.mxu0 %v1868
        %1903 = vmatprep.subr.bf16.mxu0 0
        %1904 = vmatpush1.bf16.msra.mxu0 %v1869
        %1905 = vmatprep.subr.bf16.mxu0 0
        %1906 = vmatpush1.bf16.msra.mxu0 %v1870
        %1907 = vmatprep.subr.bf16.mxu0 0
        %1908 = vmatpush1.bf16.msra.mxu0 %v1871
        %1909 = vmatprep.subr.bf16.mxu0 0
        %1910 = vmatpush1.bf16.msra.mxu0 %v1872
        %1911 = vmatprep.subr.bf16.mxu0 0
        %1912 = vmatpush1.bf16.msra.mxu0 %v1873
        %1913 = vmatprep.subr.bf16.mxu0 0
        %1914 = vmatpush1.bf16.msra.mxu0 %v1874
        %1915 = vmatprep.subr.bf16.mxu0 0
        %1916 = vmatpush1.bf16.msra.mxu0 %v1875
        %1917 = vmatprep.subr.bf16.mxu0 0
        %1918 = vmatpush1.bf16.msra.mxu0 %v1876
        %1919 = vmatprep.subr.bf16.mxu0 0
        %1920 = vmatpush1.bf16.msra.mxu0 %v1877
        %1921 = vmatprep.subr.bf16.mxu0 0
        %1922 = vmatpush1.bf16.msra.mxu0 %v1878
        %1923 = vmatprep.subr.bf16.mxu0 0
        %1924 = vmatpush1.bf16.msra.mxu0 %v1879
        %1925 = vmatprep.subr.bf16.mxu0 0
        %1926 = vmatpush1.bf16.msra.mxu0 %v1880
        %1927 = vmatprep.subr.bf16.mxu0 0
        %1928 = vmatpush1.bf16.msra.mxu0 %v1881
        %1929 = vmatprep.subr.bf16.mxu0 0
        %1930 = vmatpush1.bf16.msra.mxu0 %v1882
        %1931 = vmatprep.mubr.bf16.mxu0 %v1762
        %1932 = vmatmul.mubr.bf16.gmra.mrb[0].mxu0 %v1762
        %v1933 = vpop.f32.mrb[0].mxu0
        %v1934 = vadd.f32 0.0, %v1933
        %v1935 = vpop.f32.mrb[0].mxu0
        %v1936 = vpop.f32.mrb[0].mxu0
        %v1937 = vadd.f32 0.0, %v1936
        %v1938 = vpop.f32.mrb[0].mxu0
        %1939 = vmatprep.mubr.bf16.mxu0 %v1763
        %1940 = vmatmul.mubr.bf16.gmra.mrb[0].mxu0 %v1763
        %v1941 = vpop.f32.mrb[0].mxu0
        %v1942 = vadd.f32 0.0, %v1941
        %v1943 = vpop.f32.mrb[0].mxu0
        %v1944 = vpop.f32.mrb[0].mxu0
        %v1945 = vadd.f32 0.0, %v1944
        %v1946 = vpop.f32.mrb[0].mxu0
        %1947 = vmatprep.mubr.bf16.mxu0 %v1764
        %1948 = vmatmul.mubr.bf16.gmra.mrb[0].mxu0 %v1764
        %v1949 = vpop.f32.mrb[0].mxu0
        %v1950 = vadd.f32 0.0, %v1949
        %v1951 = vpop.f32.mrb[0].mxu0
        %v1952 = vpop.f32.mrb[0].mxu0
        %v1953 = vadd.f32 0.0, %v1952
        %v1954 = vpop.f32.mrb[0].mxu0
        %1955 = vmatprep.mubr.bf16.mxu0 %v1765
        %1956 = vmatmul.mubr.bf16.gmra.mrb[0].mxu0 %v1765
        %v1957 = vpop.f32.mrb[0].mxu0
        %v1958 = vadd.f32 0.0, %v1957
        %v1959 = vpop.f32.mrb[0].mxu0
        %v1960 = vpop.f32.mrb[0].mxu0
        %v1961 = vadd.f32 0.0, %v1960
        %v1962 = vpop.f32.mrb[0].mxu0
        %1963 = vdwg.mxu0
        %v1964 = vadd.f32 %v1690, %v1934
        %v1965 = vadd.f32 %v1691, %v1937
        %v1966 = vadd.f32 %v1692, %v1942
        %v1967 = vadd.f32 %v1693, %v1945
        %v1968 = vadd.f32 %v1694, %v1950
        %v1969 = vadd.f32 %v1695, %v1953
        %v1970 = vadd.f32 %v1696, %v1958
        %v1971 = vadd.f32 %v1697, %v1961
        %v1972 = vadd.f32 %v1964, %v1965
        %v1973 = vadd.f32 %v1972, %v1966
        %v1974 = vadd.f32 %v1973, %v1967
        %v1975 = vadd.f32 %v1974, %v1968
        %v1976 = vadd.f32 %v1975, %v1969
        %v1977 = vadd.f32 %v1976, %v1970
        %v1978 = vadd.f32 %v1977, %v1971
        %v1979 = vrot.slane %v1978, 4
        %v1980 = vadd.f32 %v1978, %v1979
        %v1981 = vrot.slane %v1980, 2
        %v1982 = vadd.f32 %v1980, %v1981
        %v1983 = vrot.slane %v1982, 1
        %v1984 = vadd.f32 %v1982, %v1983
        %1985 = vst [vmem:[%s230] sm:$0x1] %v1984
        %v1986 = vmul.f32 %v1964, %v1964
        %v1987 = vmul.f32 %v1965, %v1965
        %v1988 = vmul.f32 %v1966, %v1966
        %v1989 = vmul.f32 %v1967, %v1967
        %v1990 = vmul.f32 %v1968, %v1968
        %v1991 = vmul.f32 %v1969, %v1969
        %v1992 = vmul.f32 %v1970, %v1970
        %v1993 = vmul.f32 %v1971, %v1971
        %v1994 = vadd.f32 %v1986, %v1987
        %v1995 = vadd.f32 %v1994, %v1988
        %v1996 = vadd.f32 %v1995, %v1989
        %v1997 = vadd.f32 %v1996, %v1990
        %v1998 = vadd.f32 %v1997, %v1991
        %v1999 = vadd.f32 %v1998, %v1992
        %v2000 = vadd.f32 %v1999, %v1993
        %v2001 = vrot.slane %v2000, 4
        %v2002 = vadd.f32 %v2000, %v2001
        %v2003 = vrot.slane %v2002, 2
        %v2004 = vadd.f32 %v2002, %v2003
        %v2005 = vrot.slane %v2004, 1
        %v2006 = vadd.f32 %v2004, %v2005
        %2007 = vst [vmem:[%s230 + $0x1] sm:$0x1] %v2006
        %v2008 = vpack.c.bf16 %v1965, %v1964
        %v2009 = vpack.c.bf16 %v1967, %v1966
        %v2010 = vpack.c.bf16 %v1969, %v1968
        %v2011 = vpack.c.bf16 %v1971, %v1970
        %v2016 = vunpack.c.l.b16 %v2008
        %v2017 = vunpack.c.h.b16 %v2008
        %v2018 = vunpack.c.l.b16 %v2009
        %v2019 = vunpack.c.h.b16 %v2009
        %v2020 = vunpack.c.l.b16 %v2010
        %v2021 = vunpack.c.h.b16 %v2010
        %v2022 = vunpack.c.l.b16 %v2011
        %v2023 = vunpack.c.h.b16 %v2011
        %v2024 = vpack.c.b16 %v2016, %v2016
        %v2025 = vpack.c.b16 %v2017, %v2017
        %v2026 = vpack.c.b16 %v2018, %v2018
        %v2027 = vpack.c.b16 %v2019, %v2019
        %v2028 = vpack.c.b16 %v2020, %v2020
        %v2029 = vpack.c.b16 %v2021, %v2021
        %v2030 = vpack.c.b16 %v2022, %v2022
        %v2031 = vpack.c.b16 %v2023, %v2023
        %2040 = vst [vmem:[%s223] sm:$0xf] %v2024
        %2041 = vst [vmem:[%s223 + $0x4] sm:$0xf] %v2025
        %2042 = vst [vmem:[%s223 + $0x8] sm:$0xf] %v2026
        %2043 = vst [vmem:[%s223 + $0xc] sm:$0xf] %v2027
        %2044 = vst [vmem:[%s223 + $0x10] sm:$0xf] %v2028
        %2045 = vst [vmem:[%s223 + $0x14] sm:$0xf] %v2029
        %2046 = vst [vmem:[%s223 + $0x18] sm:$0xf] %v2030
        %2047 = vst [vmem:[%s223 + $0x1c] sm:$0xf] %v2031
        %s2048 = sand.u32 %s94, 1
        %s2049 = scalar_lea.sflag [#allocation4], %s2048
        %s2050 = sand.u32 %s94, 1
        %s2051 = smul.addr %s2050, 32
        %s2052 = scalar_lea.vmem [#allocation7], %s2051
        %s2053 = sand.u32 %s122, 1
        %s2054 = scalar_lea.sflag [#allocation9], %s2053
        %s2055 = sand.u32 %s122, 1
        %s2056 = smul.addr %s2055, 2
        %s2057 = scalar_lea.vmem [#allocation8], %s2056
        // Predicated region
        $region37: #{basic_block_ws_forward.7} parent=27 // pred_check
          %p2058 = pneg %p104
        $region38: #{basic_block_ws_forward.7} parent=27 // pred_check_branch
          %2060 = sbr.rel (%p2058) target = $region40
        $region39: #{basic_block_ws_forward.7} parent=27 // pred_region
          %s2061 = smul.u32 8, %s30
          %s2063 = ssub.s32 512, 512
          %2064 = vsyncadd %s2049, %s2063
          %s2065 = smul.addr %s29, 8
          %s2066 = sadd.s32 %s2061, %s2065
          %s2067 = smul.addr %s2066, 64
          %s2068 = scalar_lea.hbm %s2, %s2067
          %s2069 = sshll.u32 %s2052, 4
          %s2070 = int_to_ptr.vmem [resolvable:$true] %s2069
          %2075 = dma.vmem_to_hbm [thread:$0]  %s2070, 512, %s2068, %s2049, 64, 64, 4
        $region40: #{basic_block_ws_forward.7} parent=27 // pred_fallthru
          _
        // Predicated region
        $region41: #{basic_block_ws_forward.7} parent=27 // pred_check
          %p2076 = pneg %p132
        $region42: #{basic_block_ws_forward.7} parent=27 // pred_check_branch
          %2078 = sbr.rel (%p2076) target = $region44
        $region43: #{basic_block_ws_forward.7} parent=27 // pred_region
          %s2080 = ssub.s32 32, 32
          %2081 = vsyncadd %s2054, %s2080
          %s2082 = sadd.s32 %s30, %s29
          %s2083 = smul.addr %s2082, 32
          %s2084 = scalar_lea.hbm %s3, %s2083
          %s2086 = sshll.u32 %s2057, 4
          %s2087 = int_to_ptr.vmem [resolvable:$true] %s2086
          %2089 = dma.vmem_to_hbm [thread:$0]  %s2087, 32, %s2084, %s2054
        $region44: #{basic_block_ws_forward.7} parent=27 // pred_fallthru
          _
      $region28: #{basic_block_ws_forward.7} parent=5 // pred_fallthru
        _
      %p2090 = scmp.le.s32.totalorder 2, %s20
      // Predicated region
      $region45: #{basic_block_ws_forward.7} parent=5 // pred_check
        %p2091 = pneg %p2090
      $region46: #{basic_block_ws_forward.7} parent=5 // pred_check_branch
        %2093 = sbr.rel (%p2091) target = $region48
      $region47: #{basic_block_ws_forward.7} parent=5 // pred_region
        %s2094 = ssub.s32 %s20, 2
        // Predicated region
        $region49: #{basic_block_ws_forward.7} parent=47 // pred_check
          %p2095 = pneg %p110
        $region50: #{basic_block_ws_forward.7} parent=47 // pred_check_branch
          %2097 = sbr.rel (%p2095) target = $region52
        $region51: #{basic_block_ws_forward.7} parent=47 // pred_region
          %s2098 = sand.u32 %s95, 1
          %s2099 = scalar_lea.sflag [#allocation4], %s2098
          %s2100 = sand.u32 %s95, 1
          %s2101 = smul.addr %s2100, 32
          %s2102 = scalar_lea.vmem [#allocation7], %s2101
          %2103 = dma.done %s2099, 512
        $region52: #{basic_block_ws_forward.7} parent=47 // pred_fallthru
          _
        // Predicated region
        $region53: #{basic_block_ws_forward.7} parent=47 // pred_check
          %p2104 = pneg %p138
        $region54: #{basic_block_ws_forward.7} parent=47 // pred_check_branch
          %2106 = sbr.rel (%p2104) target = $region56
        $region55: #{basic_block_ws_forward.7} parent=47 // pred_region
          %s2107 = sand.u32 %s123, 1
          %s2108 = scalar_lea.sflag [#allocation9], %s2107
          %s2109 = sand.u32 %s123, 1
          %s2110 = smul.addr %s2109, 2
          %s2111 = scalar_lea.vmem [#allocation8], %s2110
          %2112 = dma.done %s2108, 32
        $region56: #{basic_block_ws_forward.7} parent=47 // pred_fallthru
          _
      $region48: #{basic_block_ws_forward.7} parent=5 // pred_fallthru
        _
    $region6: #{basic_block_ws_forward.7} parent=1 // loop_footer
      %s24 = sadd.s32 1, %s20
    $region7: #{basic_block_ws_forward.7} parent=1 // loop_footer_branch
      %19 = sbr.rel target = $region3
    $region8: #{basic_block_ws_forward.7} parent=1 // loop_exit
      _
    %2113 = vsyncpa [#allocation3], 1
    %s2114 = scalar_lea.sflag [#allocation3], 1
    %2115 = vsyncpa %s2114, 1
    %2116 = vsyncpa [#allocation6], 1
    %2117 = vsyncpa [#allocation4], 1
    %s2118 = scalar_lea.sflag [#allocation4], 1
    %2119 = vsyncpa %s2118, 1
    %2120 = vsyncpa [#allocation9], 1
    %s2121 = scalar_lea.sflag [#allocation9], 1
    %2122 = vsyncpa %s2121, 1

</llo_original>
